<compile_context>
chip_gen: v7x
topology: tpu7x:2x2x1
jax: 0.10.0
libtpu: 0.0.40
codegen_flags: <defaults>
</compile_context>

<pallas_src>
import math

import numpy as np

import jax
import jax.numpy as jnp
from jax.experimental import pallas as pl
from jax.experimental.pallas import tpu as pltpu

_BN_EPS = 1e-5
_LRELU_SLOPE = 0.01          # nn.LeakyReLU() default negative_slope
_N_STAGES = 5


# ---------------------------------------------------------------------------
# In-kernel helpers (all operate on VMEM-resident values in row-flat layout:
# a logical (B_tile, H, W, C) activation is carried as (B_tile*H, W*C)).
# ---------------------------------------------------------------------------
def _conv_flat(xb, w_ref, sb_ref, sh_ref, m):
    """Fused 3x3 conv (pad=1) + BN affine + LeakyReLU, row-flat layout.

    xb    : (M, K) bf16 activation, K = W*Cin, M = B_tile*H.
    w_ref : (3*K, W*Cout) bf16 -- dy/dx-folded weight slab.
    sb_ref: (2, 1, W*Cout) f32 -- [0]=BN scale, [1]=BN bias (incl. conv bias).
    sh_ref: (2, M, M) bf16 0/1 -- [0]=down-shift selector (picks row h-1),
            [1]=up-shift selector (picks row h+1); None when H == 1 (both
            neighbour rows are zero padding).
    """
    k = xb.shape[1]
    if sh_ref is None:
        # Only the dy=1 slab contributes (rows above/below are zero padding).
        y = jnp.dot(xb, w_ref[k:2 * k, :], preferred_element_type=jnp.float32)
    else:
        dn = sh_ref[0]                       # (M, M) 0/1 selectors
        up = sh_ref[1]
        # Exact: each output row is a verbatim copy of one bf16 input row.
        x_prev = jnp.dot(dn, xb, preferred_element_type=jnp.float32).astype(jnp.bfloat16)
        x_next = jnp.dot(up, xb, preferred_element_type=jnp.float32).astype(jnp.bfloat16)
        xin = jnp.concatenate([x_prev, xb, x_next], axis=1)        # (M, 3K)
        y = jnp.dot(xin, w_ref[...], preferred_element_type=jnp.float32)
    y = y * sb_ref[0] + sb_ref[1]
    return jnp.where(y >= 0.0, y, _LRELU_SLOPE * y)


def _pool_flat(xb, t_ref, s_ref, m_out):
    """2x2 max-pool (stride 2) in row-flat layout; exact in bf16.

    xb: (M, W*C) bf16 -> (M//2, (W//2)*C) bf16.
    t_ref: (W*C, W*C) bf16 0/1 -- [even-w cols | odd-w cols] selector.
    s_ref: (M, M)     bf16 0/1 -- [even rows ; odd rows] per-image selector.
    """
    y = jnp.dot(xb, t_ref[...], preferred_element_type=jnp.float32)   # exact copies
    half = y.shape[1] // 2
    mw = jnp.maximum(y[:, :half], y[:, half:]).astype(jnp.bfloat16)   # pool along W
    z = jnp.dot(s_ref[...], mw, preferred_element_type=jnp.float32)   # exact copies
    return jnp.maximum(z[:m_out], z[m_out:]).astype(jnp.bfloat16)     # pool along H


def _make_encoder_kernel(h_stages, b_tile):
    n_stages = len(h_stages)
    has_shift = [h > 1 for h in h_stages]

    def kernel(*refs):
        pos = 0
        x_ref = refs[pos]; pos += 1
        conv_refs = []
        for _ in range(n_stages):
            conv_refs.append(refs[pos:pos + 4]); pos += 4            # w1, sb1, w2, sb2
        shift_refs = {}
        for i in range(n_stages):
            if has_shift[i]:
                shift_refs[i] = refs[pos]; pos += 1
        pool_refs = []
        for _ in range(n_stages - 1):
            pool_refs.append(refs[pos:pos + 2]); pos += 2            # t, s
        out_refs = refs[pos:pos + n_stages]

        xb = x_ref[0]                                   # (B_tile*H0, W0*Cin) bf16
        for i in range(n_stages):
            m_i = b_tile * h_stages[i]
            if i > 0:                                   # DownBlock: MaxPool2d(2)
                t_ref, s_ref = pool_refs[i - 1]
                xb = _pool_flat(xb, t_ref, s_ref, m_i)
            sh = shift_refs.get(i)
            w1, sb1, w2, sb2 = conv_refs[i]
            y = _conv_flat(xb, w1, sb1, sh, m_i)
            # TODO(synk): nn.Dropout between the convs == identity (eval mode).
            y = _conv_flat(y.astype(jnp.bfloat16), w2, sb2, sh, m_i)
            out_refs[i][0] = y                          # lane-dense f32 store
            xb = y.astype(jnp.bfloat16)

    return kernel


# ---------------------------------------------------------------------------
# Wrapper-side constant construction (one-time, numpy / plain JAX).
# ---------------------------------------------------------------------------
def _const_index_map(ndim):
    zero = (0,) * ndim
    return lambda b: zero


def _shift_selectors(h, b_tile):
    """(2, M, M) bf16: [0] picks row h-1 (0 at image top), [1] picks row h+1."""
    m = b_tile * h
    dn = np.zeros((m, m), np.float32)
    up = np.zeros((m, m), np.float32)
    for b in range(b_tile):
        for r in range(h):
            row = b * h + r
            if r >= 1:
                dn[row, row - 1] = 1.0
            if r + 1 < h:
                up[row, row + 1] = 1.0
    return jnp.asarray(np.stack([dn, up], axis=0), jnp.bfloat16)


def _pool_selectors(h, c, b_tile):
    """Selectors for a 2x2 max-pool of a row-flat (B_tile*h, h*c) activation."""
    w = h
    k = w * c
    wo_n = w // 2
    t = np.zeros((k, k), np.float32)          # columns: [even-w block | odd-w block]
    for wo in range(wo_n):
        for ch in range(c):
            t[(2 * wo) * c + ch, wo * c + ch] = 1.0
            t[(2 * wo + 1) * c + ch, wo_n * c + wo * c + ch] = 1.0
    m = b_tile * h
    ho_n = h // 2
    m_out = m // 2
    s = np.zeros((m, m), np.float32)          # rows: [even rows ; odd rows] per image
    for b in range(b_tile):
        for ho in range(ho_n):
            s[b * ho_n + ho, b * h + 2 * ho] = 1.0
            s[m_out + b * ho_n + ho, b * h + 2 * ho + 1] = 1.0
    return jnp.asarray(t, jnp.bfloat16), jnp.asarray(s, jnp.bfloat16)


def _fold_conv_weight(w, width):
    """(3,3,Cin,Cout) -> (3*width*Cin, width*Cout) bf16 slab.

    Folds the dx taps and W-direction zero padding into a band contraction and
    stacks the 3 dy taps along K, so the kernel does ONE MXU matmul per conv
    against [x(h-1) | x(h) | x(h+1)] concatenated along lanes.
    """
    cin, cout = int(w.shape[2]), int(w.shape[3])
    band = np.zeros((3, width, width), np.float32)
    for dx in range(3):
        for wo in range(width):
            wi = wo + dx - 1
            if 0 <= wi < width:
                band[dx, wi, wo] = 1.0
    wd = jnp.einsum("dxio,xab->daibo", w.astype(jnp.float32), jnp.asarray(band))
    return wd.reshape(3 * width * cin, width * cout).astype(jnp.bfloat16)


def pack_encoder_operands(params, ft_chns, hw, b_tile):
    """Precompute every constant operand for the fused encoder kernel."""
    names = ["in_conv", "down1", "down2", "down3", "down4"]
    h_stages = [hw >> i for i in range(_N_STAGES)]
    conv_ops, shift_ops, pool_ops = [], [], []
    for i, nm in enumerate(names):
        hs, cout = h_stages[i], ft_chns[i]
        p = params[nm]
        for c in ("c1", "c2"):
            conv_ops.append(_fold_conv_weight(p[c]["w"], hs))
            sb = jnp.stack([jnp.tile(p[c]["s"], hs), jnp.tile(p[c]["b"], hs)], axis=0)
            conv_ops.append(sb.reshape(2, 1, hs * cout))
    for i in range(_N_STAGES):
        if h_stages[i] > 1:
            shift_ops.append(_shift_selectors(h_stages[i], b_tile))
    for i in range(_N_STAGES - 1):
        t, s = _pool_selectors(h_stages[i], ft_chns[i], b_tile)
        pool_ops += [t, s]
    return conv_ops + shift_ops + pool_ops


def encoder_forward(x_nchw, params, ft_chns):
    """x_nchw: (N, Cin, H, W) like PyTorch; returns [x0..x4] in NCHW (f32)."""
    n, cin, h, w = x_nchw.shape
    assert h == w and h % (1 << (_N_STAGES - 1)) == 0
    h_stages = [h >> i for i in range(_N_STAGES)]

    # Keep the grid length >= 2 when possible (both v7x TensorCores get work);
    # fold the remaining batch into the matmul M dimension.
    grid_n = 2 if (n >= 2 and n % 2 == 0) else 1
    b_tile = n // grid_n

    const_ops = pack_encoder_operands(params, ft_chns, h, b_tile)

    x = jnp.transpose(x_nchw, (0, 2, 3, 1)).astype(jnp.bfloat16)     # NHWC bf16
    x_flat = x.reshape(grid_n, b_tile * h, w * cin)                  # row-flat blocks

    in_specs = [pl.BlockSpec((1, b_tile * h, w * cin), lambda b: (b, 0, 0))]
    in_specs += [pl.BlockSpec(a.shape, _const_index_map(a.ndim)) for a in const_ops]

    out_shape = tuple(
        jax.ShapeDtypeStruct((grid_n, b_tile * h_stages[i], h_stages[i] * ft_chns[i]),
                             jnp.float32)
        for i in range(_N_STAGES))
    out_specs = tuple(
        pl.BlockSpec((1, b_tile * h_stages[i], h_stages[i] * ft_chns[i]),
                     lambda b: (b, 0, 0))
        for i in range(_N_STAGES))

    outs = pl.pallas_call(
        _make_encoder_kernel(h_stages, b_tile),
        out_shape=out_shape,
        grid=(grid_n,),
        in_specs=in_specs,
        out_specs=out_specs,
        compiler_params=pltpu.CompilerParams(
            dimension_semantics=("parallel",),
            vmem_limit_bytes=32 * 1024 * 1024),
    )(x_flat, *const_ops)

    result = []
    for i, o in enumerate(outs):
        hi, ci = h_stages[i], ft_chns[i]
        o = o.reshape(n, hi, hi, ci)                 # (grid_n*b_tile, H, W, C)
        result.append(jnp.transpose(o, (0, 3, 1, 2)))
    return result


# ---------------------------------------------------------------------------
# Module construction (deterministic synthetic parameters, BN folded for eval)
# ---------------------------------------------------------------------------
def _init_conv_bn(key, cin, cout):
    k1, k2, k3, k4, k5, k6 = jax.random.split(key, 6)
    w = jax.random.normal(k1, (3, 3, cin, cout), jnp.float32) * math.sqrt(2.0 / (9 * cin))
    conv_b = jax.random.normal(k2, (cout,), jnp.float32) * 0.05
    gamma = jax.random.uniform(k3, (cout,), jnp.float32, 0.8, 1.2)
    beta = jax.random.normal(k4, (cout,), jnp.float32) * 0.05
    run_mean = jax.random.normal(k5, (cout,), jnp.float32) * 0.05
    run_var = jax.random.uniform(k6, (cout,), jnp.float32, 0.8, 1.2)
    scale = gamma / jnp.sqrt(run_var + _BN_EPS)
    bias = beta + (conv_b - run_mean) * scale
    return {"w": w, "s": scale, "b": bias}


def _init_conv_block(key, cin, cout):
    k1, k2 = jax.random.split(key)
    return {"c1": _init_conv_bn(k1, cin, cout), "c2": _init_conv_bn(k2, cout, cout)}


def init_encoder(key, in_chns, ft_chns):
    keys = jax.random.split(key, _N_STAGES)
    chans = [in_chns] + list(ft_chns)
    names = ["in_conv", "down1", "down2", "down3", "down4"]
    return {nm: _init_conv_block(k, chans[i], chans[i + 1])
            for i, (nm, k) in enumerate(zip(names, keys))}


# ---------------------------------------------------------------------------
# Pure-JAX reference (bf16 conv operands to mirror the kernel's MXU dtype)
# ---------------------------------------------------------------------------
def _ref_conv(x, w, s, b):
    y = jax.lax.conv_general_dilated(
        x.astype(jnp.bfloat16), w.astype(jnp.bfloat16),
        window_strides=(1, 1), padding="SAME",
        dimension_numbers=("NHWC", "HWIO", "NHWC"),
        preferred_element_type=jnp.float32)
    y = y * s + b
    return jnp.where(y >= 0.0, y, _LRELU_SLOPE * y)


def _ref_pool(x):
    n, h, w, c = x.shape
    return x.reshape(n, h // 2, 2, w // 2, 2, c).max(axis=(2, 4))


def _ref_forward(x_nchw, params):
    x = jnp.transpose(x_nchw, (0, 2, 3, 1)).astype(jnp.float32)
    outs = []
    for i, nm in enumerate(["in_conv", "down1", "down2", "down3", "down4"]):
        if i > 0:
            x = _ref_pool(x)
        p = params[nm]
        x = _ref_conv(x, p["c1"]["w"], p["c1"]["s"], p["c1"]["b"])
        x = _ref_conv(x, p["c2"]["w"], p["c2"]["s"], p["c2"]["b"])
        outs.append(jnp.transpose(x, (0, 3, 1, 2)))
    return outs


# ---------------------------------------------------------------------------
if __name__ == "__main__":
    key = jax.random.PRNGKey(0)
    k_x, k_p = jax.random.split(key)

    # Module config: params = {'in_chns': 4, 'feature_chns': [8,16,32,64,128], ...}
    in_chns = 4
    ft_chns = [8, 16, 32, 64, 128]
    N, H, W = 2, 16, 16

    x = jax.random.normal(k_x, (N, in_chns, H, W), jnp.float32)   # PyTorch-style NCHW
    params = init_encoder(k_p, in_chns, ft_chns)

    outs = encoder_forward(x, params, ft_chns)
    outs = [jax.block_until_ready(o) for o in outs]

    # Shape / finiteness checks against the PyTorch module semantics.
    exp_shapes = [(N, ft_chns[i], H >> i, W >> i) for i in range(_N_STAGES)]
    for o, es in zip(outs, exp_shapes):
        assert o.shape == es, (o.shape, es)
        assert bool(jnp.all(jnp.isfinite(o)))

    # Numeric check vs a pure-JAX reference with matching bf16 conv operands.
    refs = _ref_forward(x, params)
    for i, (o, r) in enumerate(zip(outs, refs)):
        max_abs = float(jnp.max(jnp.abs(o - r)))
        scale = max(1.0, float(jnp.max(jnp.abs(r))))
        assert max_abs <= 5e-2 * scale, (i, max_abs, scale)

    print("KERNEL_OK")
</pallas_src>

<mosaic_0001>
module attributes {stable_mosaic.version = 11 : i64} {
  func.func @kernel(%arg0: i32, %arg1: memref<1x16x64xbf16, #tpu.memory_space<vmem>>, %arg2: memref<192x128xbf16, #tpu.memory_space<vmem>>, %arg3: memref<2x1x128xf32, #tpu.memory_space<vmem>>, %arg4: memref<384x128xbf16, #tpu.memory_space<vmem>>, %arg5: memref<2x1x128xf32, #tpu.memory_space<vmem>>, %arg6: memref<192x128xbf16, #tpu.memory_space<vmem>>, %arg7: memref<2x1x128xf32, #tpu.memory_space<vmem>>, %arg8: memref<384x128xbf16, #tpu.memory_space<vmem>>, %arg9: memref<2x1x128xf32, #tpu.memory_space<vmem>>, %arg10: memref<192x128xbf16, #tpu.memory_space<vmem>>, %arg11: memref<2x1x128xf32, #tpu.memory_space<vmem>>, %arg12: memref<384x128xbf16, #tpu.memory_space<vmem>>, %arg13: memref<2x1x128xf32, #tpu.memory_space<vmem>>, %arg14: memref<192x128xbf16, #tpu.memory_space<vmem>>, %arg15: memref<2x1x128xf32, #tpu.memory_space<vmem>>, %arg16: memref<384x128xbf16, #tpu.memory_space<vmem>>, %arg17: memref<2x1x128xf32, #tpu.memory_space<vmem>>, %arg18: memref<192x128xbf16, #tpu.memory_space<vmem>>, %arg19: memref<2x1x128xf32, #tpu.memory_space<vmem>>, %arg20: memref<384x128xbf16, #tpu.memory_space<vmem>>, %arg21: memref<2x1x128xf32, #tpu.memory_space<vmem>>, %arg22: memref<2x16x16xbf16, #tpu.memory_space<vmem>>, %arg23: memref<2x8x8xbf16, #tpu.memory_space<vmem>>, %arg24: memref<2x4x4xbf16, #tpu.memory_space<vmem>>, %arg25: memref<2x2x2xbf16, #tpu.memory_space<vmem>>, %arg26: memref<128x128xbf16, #tpu.memory_space<vmem>>, %arg27: memref<16x16xbf16, #tpu.memory_space<vmem>>, %arg28: memref<128x128xbf16, #tpu.memory_space<vmem>>, %arg29: memref<8x8xbf16, #tpu.memory_space<vmem>>, %arg30: memref<128x128xbf16, #tpu.memory_space<vmem>>, %arg31: memref<4x4xbf16, #tpu.memory_space<vmem>>, %arg32: memref<128x128xbf16, #tpu.memory_space<vmem>>, %arg33: memref<2x2xbf16, #tpu.memory_space<vmem>>, %arg34: memref<1x16x128xf32, #tpu.memory_space<vmem>>, %arg35: memref<1x8x128xf32, #tpu.memory_space<vmem>>, %arg36: memref<1x4x128xf32, #tpu.memory_space<vmem>>, %arg37: memref<1x2x128xf32, #tpu.memory_space<vmem>>, %arg38: memref<1x1x128xf32, #tpu.memory_space<vmem>>) attributes {dimension_semantics = [#tpu.dimension_semantics<parallel>], iteration_bounds = array<i64: 2>, scalar_prefetch = 0 : i64, scratch_operands = 0 : i64, tpu.core_type = #tpu.core_type<tc>, window_params = [{transform_indices = @transform_0, window_bounds = array<i64: 1, 16, 64>}, {pipeline_mode = #tpu.pipeline_mode<synchronous>, transform_indices = @transform_1, window_bounds = array<i64: 192, 128>}, {pipeline_mode = #tpu.pipeline_mode<synchronous>, transform_indices = @transform_2, window_bounds = array<i64: 2, 1, 128>}, {pipeline_mode = #tpu.pipeline_mode<synchronous>, transform_indices = @transform_3, window_bounds = array<i64: 384, 128>}, {pipeline_mode = #tpu.pipeline_mode<synchronous>, transform_indices = @transform_4, window_bounds = array<i64: 2, 1, 128>}, {pipeline_mode = #tpu.pipeline_mode<synchronous>, transform_indices = @transform_5, window_bounds = array<i64: 192, 128>}, {pipeline_mode = #tpu.pipeline_mode<synchronous>, transform_indices = @transform_6, window_bounds = array<i64: 2, 1, 128>}, {pipeline_mode = #tpu.pipeline_mode<synchronous>, transform_indices = @transform_7, window_bounds = array<i64: 384, 128>}, {pipeline_mode = #tpu.pipeline_mode<synchronous>, transform_indices = @transform_8, window_bounds = array<i64: 2, 1, 128>}, {pipeline_mode = #tpu.pipeline_mode<synchronous>, transform_indices = @transform_9, window_bounds = array<i64: 192, 128>}, {pipeline_mode = #tpu.pipeline_mode<synchronous>, transform_indices = @transform_10, window_bounds = array<i64: 2, 1, 128>}, {pipeline_mode = #tpu.pipeline_mode<synchronous>, transform_indices = @transform_11, window_bounds = array<i64: 384, 128>}, {pipeline_mode = #tpu.pipeline_mode<synchronous>, transform_indices = @transform_12, window_bounds = array<i64: 2, 1, 128>}, {pipeline_mode = #tpu.pipeline_mode<synchronous>, transform_indices = @transform_13, window_bounds = array<i64: 192, 128>}, {pipeline_mode = #tpu.pipeline_mode<synchronous>, transform_indices = @transform_14, window_bounds = array<i64: 2, 1, 128>}, {pipeline_mode = #tpu.pipeline_mode<synchronous>, transform_indices = @transform_15, window_bounds = array<i64: 384, 128>}, {pipeline_mode = #tpu.pipeline_mode<synchronous>, transform_indices = @transform_16, window_bounds = array<i64: 2, 1, 128>}, {pipeline_mode = #tpu.pipeline_mode<synchronous>, transform_indices = @transform_17, window_bounds = array<i64: 192, 128>}, {pipeline_mode = #tpu.pipeline_mode<synchronous>, transform_indices = @transform_18, window_bounds = array<i64: 2, 1, 128>}, {pipeline_mode = #tpu.pipeline_mode<synchronous>, transform_indices = @transform_19, window_bounds = array<i64: 384, 128>}, {pipeline_mode = #tpu.pipeline_mode<synchronous>, transform_indices = @transform_20, window_bounds = array<i64: 2, 1, 128>}, {pipeline_mode = #tpu.pipeline_mode<synchronous>, transform_indices = @transform_21, window_bounds = array<i64: 2, 16, 16>}, {pipeline_mode = #tpu.pipeline_mode<synchronous>, transform_indices = @transform_22, window_bounds = array<i64: 2, 8, 8>}, {pipeline_mode = #tpu.pipeline_mode<synchronous>, transform_indices = @transform_23, window_bounds = array<i64: 2, 4, 4>}, {pipeline_mode = #tpu.pipeline_mode<synchronous>, transform_indices = @transform_24, window_bounds = array<i64: 2, 2, 2>}, {pipeline_mode = #tpu.pipeline_mode<synchronous>, transform_indices = @transform_25, window_bounds = array<i64: 128, 128>}, {pipeline_mode = #tpu.pipeline_mode<synchronous>, transform_indices = @transform_26, window_bounds = array<i64: 16, 16>}, {pipeline_mode = #tpu.pipeline_mode<synchronous>, transform_indices = @transform_27, window_bounds = array<i64: 128, 128>}, {pipeline_mode = #tpu.pipeline_mode<synchronous>, transform_indices = @transform_28, window_bounds = array<i64: 8, 8>}, {pipeline_mode = #tpu.pipeline_mode<synchronous>, transform_indices = @transform_29, window_bounds = array<i64: 128, 128>}, {pipeline_mode = #tpu.pipeline_mode<synchronous>, transform_indices = @transform_30, window_bounds = array<i64: 4, 4>}, {pipeline_mode = #tpu.pipeline_mode<synchronous>, transform_indices = @transform_31, window_bounds = array<i64: 128, 128>}, {pipeline_mode = #tpu.pipeline_mode<synchronous>, transform_indices = @transform_32, window_bounds = array<i64: 2, 2>}, {transform_indices = @transform_33, window_bounds = array<i64: 1, 16, 128>}, {transform_indices = @transform_34, window_bounds = array<i64: 1, 8, 128>}, {transform_indices = @transform_35, window_bounds = array<i64: 1, 4, 128>}, {transform_indices = @transform_36, window_bounds = array<i64: 1, 2, 128>}, {transform_indices = @transform_37, window_bounds = array<i64: 1, 1, 128>}]} {
    %c0 = arith.constant 0 : index
    %c0_0 = arith.constant 0 : index
    %c0_1 = arith.constant 0 : index
    %0 = vector.load %arg1[%c0, %c0_0, %c0_1] : memref<1x16x64xbf16, #tpu.memory_space<vmem>>, vector<1x16x64xbf16>
    %1 = vector.shape_cast %0 : vector<1x16x64xbf16> to vector<16x64xbf16>
    %c0_2 = arith.constant 0 : index
    %c0_3 = arith.constant 0 : index
    %c0_4 = arith.constant 0 : index
    %2 = vector.load %arg22[%c0_2, %c0_3, %c0_4] : memref<2x16x16xbf16, #tpu.memory_space<vmem>>, vector<1x16x16xbf16>
    %3 = vector.shape_cast %2 : vector<1x16x16xbf16> to vector<16x16xbf16>
    %c1 = arith.constant 1 : index
    %c0_5 = arith.constant 0 : index
    %c0_6 = arith.constant 0 : index
    %4 = vector.load %arg22[%c1, %c0_5, %c0_6] : memref<2x16x16xbf16, #tpu.memory_space<vmem>>, vector<1x16x16xbf16>
    %5 = vector.shape_cast %4 : vector<1x16x16xbf16> to vector<16x16xbf16>
    %cst = arith.constant dense<0.000000e+00> : vector<16x64xf32>
    %6 = tpu.matmul %3, %1, %cst {dimension_numbers = #tpu.dot_dimension_numbers<[1], [0], [0], [1], [0, 0, 1, 1], [], []>} : vector<16x16xbf16>, vector<16x64xbf16>, vector<16x64xf32> -> vector<16x64xf32>
    %7 = arith.truncf %6 : vector<16x64xf32> to vector<16x64xbf16>
    %cst_7 = arith.constant dense<0.000000e+00> : vector<16x64xf32>
    %8 = tpu.matmul %5, %1, %cst_7 {dimension_numbers = #tpu.dot_dimension_numbers<[1], [0], [0], [1], [0, 0, 1, 1], [], []>} : vector<16x16xbf16>, vector<16x64xbf16>, vector<16x64xf32> -> vector<16x64xf32>
    %9 = arith.truncf %8 : vector<16x64xf32> to vector<16x64xbf16>
    %10 = tpu.concatenate %7, %1, %9 in 1 : vector<16x64xbf16>, vector<16x64xbf16>, vector<16x64xbf16> -> vector<16x192xbf16>
    %c0_8 = arith.constant 0 : index
    %c0_9 = arith.constant 0 : index
    %11 = vector.load %arg2[%c0_8, %c0_9] : memref<192x128xbf16, #tpu.memory_space<vmem>>, vector<192x128xbf16>
    %cst_10 = arith.constant dense<0.000000e+00> : vector<16x128xf32>
    %12 = tpu.matmul %10, %11, %cst_10 {dimension_numbers = #tpu.dot_dimension_numbers<[1], [0], [0], [1], [0, 0, 1, 1], [], []>} : vector<16x192xbf16>, vector<192x128xbf16>, vector<16x128xf32> -> vector<16x128xf32>
    %c0_11 = arith.constant 0 : index
    %c0_12 = arith.constant 0 : index
    %c0_13 = arith.constant 0 : index
    %13 = vector.load %arg3[%c0_11, %c0_12, %c0_13] : memref<2x1x128xf32, #tpu.memory_space<vmem>>, vector<1x1x128xf32>
    %14 = vector.shape_cast %13 : vector<1x1x128xf32> to vector<1x128xf32>
    %15 = vector.broadcast %14 : vector<1x128xf32> to vector<16x128xf32>
    %16 = arith.mulf %12, %15 : vector<16x128xf32>
    %c1_14 = arith.constant 1 : index
    %c0_15 = arith.constant 0 : index
    %c0_16 = arith.constant 0 : index
    %17 = vector.load %arg3[%c1_14, %c0_15, %c0_16] : memref<2x1x128xf32, #tpu.memory_space<vmem>>, vector<1x1x128xf32>
    %18 = vector.shape_cast %17 : vector<1x1x128xf32> to vector<1x128xf32>
    %19 = vector.broadcast %18 : vector<1x128xf32> to vector<16x128xf32>
    %20 = arith.addf %16, %19 : vector<16x128xf32>
    %cst_17 = arith.constant 0.000000e+00 : f32
    %21 = vector.broadcast %cst_17 : f32 to vector<16x128xf32>
    %22 = arith.cmpf oge, %20, %21 : vector<16x128xf32>
    %cst_18 = arith.constant 0.00999999977 : f32
    %23 = vector.broadcast %cst_18 : f32 to vector<16x128xf32>
    %24 = arith.mulf %23, %20 : vector<16x128xf32>
    %25 = arith.select %22, %20, %24 : vector<16x128xi1>, vector<16x128xf32>
    %26 = arith.truncf %25 : vector<16x128xf32> to vector<16x128xbf16>
    %c0_19 = arith.constant 0 : index
    %c0_20 = arith.constant 0 : index
    %c0_21 = arith.constant 0 : index
    %27 = vector.load %arg22[%c0_19, %c0_20, %c0_21] : memref<2x16x16xbf16, #tpu.memory_space<vmem>>, vector<1x16x16xbf16>
    %28 = vector.shape_cast %27 : vector<1x16x16xbf16> to vector<16x16xbf16>
    %c1_22 = arith.constant 1 : index
    %c0_23 = arith.constant 0 : index
    %c0_24 = arith.constant 0 : index
    %29 = vector.load %arg22[%c1_22, %c0_23, %c0_24] : memref<2x16x16xbf16, #tpu.memory_space<vmem>>, vector<1x16x16xbf16>
    %30 = vector.shape_cast %29 : vector<1x16x16xbf16> to vector<16x16xbf16>
    %cst_25 = arith.constant dense<0.000000e+00> : vector<16x128xf32>
    %31 = tpu.matmul %28, %26, %cst_25 {dimension_numbers = #tpu.dot_dimension_numbers<[1], [0], [0], [1], [0, 0, 1, 1], [], []>} : vector<16x16xbf16>, vector<16x128xbf16>, vector<16x128xf32> -> vector<16x128xf32>
    %32 = arith.truncf %31 : vector<16x128xf32> to vector<16x128xbf16>
    %cst_26 = arith.constant dense<0.000000e+00> : vector<16x128xf32>
    %33 = tpu.matmul %30, %26, %cst_26 {dimension_numbers = #tpu.dot_dimension_numbers<[1], [0], [0], [1], [0, 0, 1, 1], [], []>} : vector<16x16xbf16>, vector<16x128xbf16>, vector<16x128xf32> -> vector<16x128xf32>
    %34 = arith.truncf %33 : vector<16x128xf32> to vector<16x128xbf16>
    %35 = tpu.concatenate %32, %26, %34 in 1 : vector<16x128xbf16>, vector<16x128xbf16>, vector<16x128xbf16> -> vector<16x384xbf16>
    %c0_27 = arith.constant 0 : index
    %c0_28 = arith.constant 0 : index
    %36 = vector.load %arg4[%c0_27, %c0_28] : memref<384x128xbf16, #tpu.memory_space<vmem>>, vector<384x128xbf16>
    %cst_29 = arith.constant dense<0.000000e+00> : vector<16x128xf32>
    %37 = tpu.matmul %35, %36, %cst_29 {dimension_numbers = #tpu.dot_dimension_numbers<[1], [0], [0], [1], [0, 0, 1, 1], [], []>} : vector<16x384xbf16>, vector<384x128xbf16>, vector<16x128xf32> -> vector<16x128xf32>
    %c0_30 = arith.constant 0 : index
    %c0_31 = arith.constant 0 : index
    %c0_32 = arith.constant 0 : index
    %38 = vector.load %arg5[%c0_30, %c0_31, %c0_32] : memref<2x1x128xf32, #tpu.memory_space<vmem>>, vector<1x1x128xf32>
    %39 = vector.shape_cast %38 : vector<1x1x128xf32> to vector<1x128xf32>
    %40 = vector.broadcast %39 : vector<1x128xf32> to vector<16x128xf32>
    %41 = arith.mulf %37, %40 : vector<16x128xf32>
    %c1_33 = arith.constant 1 : index
    %c0_34 = arith.constant 0 : index
    %c0_35 = arith.constant 0 : index
    %42 = vector.load %arg5[%c1_33, %c0_34, %c0_35] : memref<2x1x128xf32, #tpu.memory_space<vmem>>, vector<1x1x128xf32>
    %43 = vector.shape_cast %42 : vector<1x1x128xf32> to vector<1x128xf32>
    %44 = vector.broadcast %43 : vector<1x128xf32> to vector<16x128xf32>
    %45 = arith.addf %41, %44 : vector<16x128xf32>
    %cst_36 = arith.constant 0.000000e+00 : f32
    %46 = vector.broadcast %cst_36 : f32 to vector<16x128xf32>
    %47 = arith.cmpf oge, %45, %46 : vector<16x128xf32>
    %cst_37 = arith.constant 0.00999999977 : f32
    %48 = vector.broadcast %cst_37 : f32 to vector<16x128xf32>
    %49 = arith.mulf %48, %45 : vector<16x128xf32>
    %50 = arith.select %47, %45, %49 : vector<16x128xi1>, vector<16x128xf32>
    %c0_38 = arith.constant 0 : index
    %c0_39 = arith.constant 0 : index
    %c0_40 = arith.constant 0 : index
    %51 = vector.load %arg34[%c0_38, %c0_39, %c0_40] : memref<1x16x128xf32, #tpu.memory_space<vmem>>, vector<1x16x128xf32>
    %52 = vector.shape_cast %51 : vector<1x16x128xf32> to vector<16x128xf32>
    %53 = vector.shape_cast %50 : vector<16x128xf32> to vector<1x16x128xf32>
    tpu.vector_store %arg34[%c0_38, %c0_39, %c0_40], %53 {strides = array<i32>} : memref<1x16x128xf32, #tpu.memory_space<vmem>>, vector<1x16x128xf32>,
    %54 = arith.truncf %50 : vector<16x128xf32> to vector<16x128xbf16>
    %c0_41 = arith.constant 0 : index
    %c0_42 = arith.constant 0 : index
    %55 = vector.load %arg26[%c0_41, %c0_42] : memref<128x128xbf16, #tpu.memory_space<vmem>>, vector<128x128xbf16>
    %cst_43 = arith.constant dense<0.000000e+00> : vector<16x128xf32>
    %56 = tpu.matmul %54, %55, %cst_43 {dimension_numbers = #tpu.dot_dimension_numbers<[1], [0], [0], [1], [0, 0, 1, 1], [], []>} : vector<16x128xbf16>, vector<128x128xbf16>, vector<16x128xf32> -> vector<16x128xf32>
    %57 = vector.extract_strided_slice %56 {offsets = [0, 0], sizes = [16, 64], strides = [1, 1]} : vector<16x128xf32> to vector<16x64xf32>
    %58 = vector.extract_strided_slice %56 {offsets = [0, 64], sizes = [16, 64], strides = [1, 1]} : vector<16x128xf32> to vector<16x64xf32>
    %59 = arith.maximumf %57, %58 : vector<16x64xf32>
    %60 = arith.truncf %59 : vector<16x64xf32> to vector<16x64xbf16>
    %c0_44 = arith.constant 0 : index
    %c0_45 = arith.constant 0 : index
    %61 = vector.load %arg27[%c0_44, %c0_45] : memref<16x16xbf16, #tpu.memory_space<vmem>>, vector<16x16xbf16>
    %cst_46 = arith.constant dense<0.000000e+00> : vector<16x64xf32>
    %62 = tpu.matmul %61, %60, %cst_46 {dimension_numbers = #tpu.dot_dimension_numbers<[1], [0], [0], [1], [0, 0, 1, 1], [], []>} : vector<16x16xbf16>, vector<16x64xbf16>, vector<16x64xf32> -> vector<16x64xf32>
    %63 = vector.extract_strided_slice %62 {offsets = [0, 0], sizes = [8, 64], strides = [1, 1]} : vector<16x64xf32> to vector<8x64xf32>
    %64 = vector.extract_strided_slice %62 {offsets = [8, 0], sizes = [8, 64], strides = [1, 1]} : vector<16x64xf32> to vector<8x64xf32>
    %65 = arith.maximumf %63, %64 : vector<8x64xf32>
    %66 = arith.truncf %65 : vector<8x64xf32> to vector<8x64xbf16>
    %c0_47 = arith.constant 0 : index
    %c0_48 = arith.constant 0 : index
    %c0_49 = arith.constant 0 : index
    %67 = vector.load %arg23[%c0_47, %c0_48, %c0_49] : memref<2x8x8xbf16, #tpu.memory_space<vmem>>, vector<1x8x8xbf16>
    %68 = vector.shape_cast %67 : vector<1x8x8xbf16> to vector<8x8xbf16>
    %c1_50 = arith.constant 1 : index
    %c0_51 = arith.constant 0 : index
    %c0_52 = arith.constant 0 : index
    %69 = vector.load %arg23[%c1_50, %c0_51, %c0_52] : memref<2x8x8xbf16, #tpu.memory_space<vmem>>, vector<1x8x8xbf16>
    %70 = vector.shape_cast %69 : vector<1x8x8xbf16> to vector<8x8xbf16>
    %cst_53 = arith.constant dense<0.000000e+00> : vector<8x64xf32>
    %71 = tpu.matmul %68, %66, %cst_53 {dimension_numbers = #tpu.dot_dimension_numbers<[1], [0], [0], [1], [0, 0, 1, 1], [], []>} : vector<8x8xbf16>, vector<8x64xbf16>, vector<8x64xf32> -> vector<8x64xf32>
    %72 = arith.truncf %71 : vector<8x64xf32> to vector<8x64xbf16>
    %cst_54 = arith.constant dense<0.000000e+00> : vector<8x64xf32>
    %73 = tpu.matmul %70, %66, %cst_54 {dimension_numbers = #tpu.dot_dimension_numbers<[1], [0], [0], [1], [0, 0, 1, 1], [], []>} : vector<8x8xbf16>, vector<8x64xbf16>, vector<8x64xf32> -> vector<8x64xf32>
    %74 = arith.truncf %73 : vector<8x64xf32> to vector<8x64xbf16>
    %75 = tpu.concatenate %72, %66, %74 in 1 : vector<8x64xbf16>, vector<8x64xbf16>, vector<8x64xbf16> -> vector<8x192xbf16>
    %c0_55 = arith.constant 0 : index
    %c0_56 = arith.constant 0 : index
    %76 = vector.load %arg6[%c0_55, %c0_56] : memref<192x128xbf16, #tpu.memory_space<vmem>>, vector<192x128xbf16>
    %cst_57 = arith.constant dense<0.000000e+00> : vector<8x128xf32>
    %77 = tpu.matmul %75, %76, %cst_57 {dimension_numbers = #tpu.dot_dimension_numbers<[1], [0], [0], [1], [0, 0, 1, 1], [], []>} : vector<8x192xbf16>, vector<192x128xbf16>, vector<8x128xf32> -> vector<8x128xf32>
    %c0_58 = arith.constant 0 : index
    %c0_59 = arith.constant 0 : index
    %c0_60 = arith.constant 0 : index
    %78 = vector.load %arg7[%c0_58, %c0_59, %c0_60] : memref<2x1x128xf32, #tpu.memory_space<vmem>>, vector<1x1x128xf32>
    %79 = vector.shape_cast %78 : vector<1x1x128xf32> to vector<1x128xf32>
    %80 = vector.broadcast %79 : vector<1x128xf32> to vector<8x128xf32>
    %81 = arith.mulf %77, %80 : vector<8x128xf32>
    %c1_61 = arith.constant 1 : index
    %c0_62 = arith.constant 0 : index
    %c0_63 = arith.constant 0 : index
    %82 = vector.load %arg7[%c1_61, %c0_62, %c0_63] : memref<2x1x128xf32, #tpu.memory_space<vmem>>, vector<1x1x128xf32>
    %83 = vector.shape_cast %82 : vector<1x1x128xf32> to vector<1x128xf32>
    %84 = vector.broadcast %83 : vector<1x128xf32> to vector<8x128xf32>
    %85 = arith.addf %81, %84 : vector<8x128xf32>
    %cst_64 = arith.constant 0.000000e+00 : f32
    %86 = vector.broadcast %cst_64 : f32 to vector<8x128xf32>
    %87 = arith.cmpf oge, %85, %86 : vector<8x128xf32>
    %cst_65 = arith.constant 0.00999999977 : f32
    %88 = vector.broadcast %cst_65 : f32 to vector<8x128xf32>
    %89 = arith.mulf %88, %85 : vector<8x128xf32>
    %90 = arith.select %87, %85, %89 : vector<8x128xi1>, vector<8x128xf32>
    %91 = arith.truncf %90 : vector<8x128xf32> to vector<8x128xbf16>
    %c0_66 = arith.constant 0 : index
    %c0_67 = arith.constant 0 : index
    %c0_68 = arith.constant 0 : index
    %92 = vector.load %arg23[%c0_66, %c0_67, %c0_68] : memref<2x8x8xbf16, #tpu.memory_space<vmem>>, vector<1x8x8xbf16>
    %93 = vector.shape_cast %92 : vector<1x8x8xbf16> to vector<8x8xbf16>
    %c1_69 = arith.constant 1 : index
    %c0_70 = arith.constant 0 : index
    %c0_71 = arith.constant 0 : index
    %94 = vector.load %arg23[%c1_69, %c0_70, %c0_71] : memref<2x8x8xbf16, #tpu.memory_space<vmem>>, vector<1x8x8xbf16>
    %95 = vector.shape_cast %94 : vector<1x8x8xbf16> to vector<8x8xbf16>
    %cst_72 = arith.constant dense<0.000000e+00> : vector<8x128xf32>
    %96 = tpu.matmul %93, %91, %cst_72 {dimension_numbers = #tpu.dot_dimension_numbers<[1], [0], [0], [1], [0, 0, 1, 1], [], []>} : vector<8x8xbf16>, vector<8x128xbf16>, vector<8x128xf32> -> vector<8x128xf32>
    %97 = arith.truncf %96 : vector<8x128xf32> to vector<8x128xbf16>
    %cst_73 = arith.constant dense<0.000000e+00> : vector<8x128xf32>
    %98 = tpu.matmul %95, %91, %cst_73 {dimension_numbers = #tpu.dot_dimension_numbers<[1], [0], [0], [1], [0, 0, 1, 1], [], []>} : vector<8x8xbf16>, vector<8x128xbf16>, vector<8x128xf32> -> vector<8x128xf32>
    %99 = arith.truncf %98 : vector<8x128xf32> to vector<8x128xbf16>
    %100 = tpu.concatenate %97, %91, %99 in 1 : vector<8x128xbf16>, vector<8x128xbf16>, vector<8x128xbf16> -> vector<8x384xbf16>
    %c0_74 = arith.constant 0 : index
    %c0_75 = arith.constant 0 : index
    %101 = vector.load %arg8[%c0_74, %c0_75] : memref<384x128xbf16, #tpu.memory_space<vmem>>, vector<384x128xbf16>
    %cst_76 = arith.constant dense<0.000000e+00> : vector<8x128xf32>
    %102 = tpu.matmul %100, %101, %cst_76 {dimension_numbers = #tpu.dot_dimension_numbers<[1], [0], [0], [1], [0, 0, 1, 1], [], []>} : vector<8x384xbf16>, vector<384x128xbf16>, vector<8x128xf32> -> vector<8x128xf32>
    %c0_77 = arith.constant 0 : index
    %c0_78 = arith.constant 0 : index
    %c0_79 = arith.constant 0 : index
    %103 = vector.load %arg9[%c0_77, %c0_78, %c0_79] : memref<2x1x128xf32, #tpu.memory_space<vmem>>, vector<1x1x128xf32>
    %104 = vector.shape_cast %103 : vector<1x1x128xf32> to vector<1x128xf32>
    %105 = vector.broadcast %104 : vector<1x128xf32> to vector<8x128xf32>
    %106 = arith.mulf %102, %105 : vector<8x128xf32>
    %c1_80 = arith.constant 1 : index
    %c0_81 = arith.constant 0 : index
    %c0_82 = arith.constant 0 : index
    %107 = vector.load %arg9[%c1_80, %c0_81, %c0_82] : memref<2x1x128xf32, #tpu.memory_space<vmem>>, vector<1x1x128xf32>
    %108 = vector.shape_cast %107 : vector<1x1x128xf32> to vector<1x128xf32>
    %109 = vector.broadcast %108 : vector<1x128xf32> to vector<8x128xf32>
    %110 = arith.addf %106, %109 : vector<8x128xf32>
    %cst_83 = arith.constant 0.000000e+00 : f32
    %111 = vector.broadcast %cst_83 : f32 to vector<8x128xf32>
    %112 = arith.cmpf oge, %110, %111 : vector<8x128xf32>
    %cst_84 = arith.constant 0.00999999977 : f32
    %113 = vector.broadcast %cst_84 : f32 to vector<8x128xf32>
    %114 = arith.mulf %113, %110 : vector<8x128xf32>
    %115 = arith.select %112, %110, %114 : vector<8x128xi1>, vector<8x128xf32>
    %c0_85 = arith.constant 0 : index
    %c0_86 = arith.constant 0 : index
    %c0_87 = arith.constant 0 : index
    %116 = vector.load %arg35[%c0_85, %c0_86, %c0_87] : memref<1x8x128xf32, #tpu.memory_space<vmem>>, vector<1x8x128xf32>
    %117 = vector.shape_cast %116 : vector<1x8x128xf32> to vector<8x128xf32>
    %118 = vector.shape_cast %115 : vector<8x128xf32> to vector<1x8x128xf32>
    tpu.vector_store %arg35[%c0_85, %c0_86, %c0_87], %118 {strides = array<i32>} : memref<1x8x128xf32, #tpu.memory_space<vmem>>, vector<1x8x128xf32>,
    %119 = arith.truncf %115 : vector<8x128xf32> to vector<8x128xbf16>
    %c0_88 = arith.constant 0 : index
    %c0_89 = arith.constant 0 : index
    %120 = vector.load %arg28[%c0_88, %c0_89] : memref<128x128xbf16, #tpu.memory_space<vmem>>, vector<128x128xbf16>
    %cst_90 = arith.constant dense<0.000000e+00> : vector<8x128xf32>
    %121 = tpu.matmul %119, %120, %cst_90 {dimension_numbers = #tpu.dot_dimension_numbers<[1], [0], [0], [1], [0, 0, 1, 1], [], []>} : vector<8x128xbf16>, vector<128x128xbf16>, vector<8x128xf32> -> vector<8x128xf32>
    %122 = vector.extract_strided_slice %121 {offsets = [0, 0], sizes = [8, 64], strides = [1, 1]} : vector<8x128xf32> to vector<8x64xf32>
    %123 = vector.extract_strided_slice %121 {offsets = [0, 64], sizes = [8, 64], strides = [1, 1]} : vector<8x128xf32> to vector<8x64xf32>
    %124 = arith.maximumf %122, %123 : vector<8x64xf32>
    %125 = arith.truncf %124 : vector<8x64xf32> to vector<8x64xbf16>
    %c0_91 = arith.constant 0 : index
    %c0_92 = arith.constant 0 : index
    %126 = vector.load %arg29[%c0_91, %c0_92] : memref<8x8xbf16, #tpu.memory_space<vmem>>, vector<8x8xbf16>
    %cst_93 = arith.constant dense<0.000000e+00> : vector<8x64xf32>
    %127 = tpu.matmul %126, %125, %cst_93 {dimension_numbers = #tpu.dot_dimension_numbers<[1], [0], [0], [1], [0, 0, 1, 1], [], []>} : vector<8x8xbf16>, vector<8x64xbf16>, vector<8x64xf32> -> vector<8x64xf32>
    %128 = vector.extract_strided_slice %127 {offsets = [0, 0], sizes = [4, 64], strides = [1, 1]} : vector<8x64xf32> to vector<4x64xf32>
    %129 = vector.extract_strided_slice %127 {offsets = [4, 0], sizes = [4, 64], strides = [1, 1]} : vector<8x64xf32> to vector<4x64xf32>
    %130 = arith.maximumf %128, %129 : vector<4x64xf32>
    %131 = arith.truncf %130 : vector<4x64xf32> to vector<4x64xbf16>
    %c0_94 = arith.constant 0 : index
    %c0_95 = arith.constant 0 : index
    %c0_96 = arith.constant 0 : index
    %132 = vector.load %arg24[%c0_94, %c0_95, %c0_96] : memref<2x4x4xbf16, #tpu.memory_space<vmem>>, vector<1x4x4xbf16>
    %133 = vector.shape_cast %132 : vector<1x4x4xbf16> to vector<4x4xbf16>
    %c1_97 = arith.constant 1 : index
    %c0_98 = arith.constant 0 : index
    %c0_99 = arith.constant 0 : index
    %134 = vector.load %arg24[%c1_97, %c0_98, %c0_99] : memref<2x4x4xbf16, #tpu.memory_space<vmem>>, vector<1x4x4xbf16>
    %135 = vector.shape_cast %134 : vector<1x4x4xbf16> to vector<4x4xbf16>
    %cst_100 = arith.constant dense<0.000000e+00> : vector<4x64xf32>
    %136 = tpu.matmul %133, %131, %cst_100 {dimension_numbers = #tpu.dot_dimension_numbers<[1], [0], [0], [1], [0, 0, 1, 1], [], []>} : vector<4x4xbf16>, vector<4x64xbf16>, vector<4x64xf32> -> vector<4x64xf32>
    %137 = arith.truncf %136 : vector<4x64xf32> to vector<4x64xbf16>
    %cst_101 = arith.constant dense<0.000000e+00> : vector<4x64xf32>
    %138 = tpu.matmul %135, %131, %cst_101 {dimension_numbers = #tpu.dot_dimension_numbers<[1], [0], [0], [1], [0, 0, 1, 1], [], []>} : vector<4x4xbf16>, vector<4x64xbf16>, vector<4x64xf32> -> vector<4x64xf32>
    %139 = arith.truncf %138 : vector<4x64xf32> to vector<4x64xbf16>
    %140 = tpu.concatenate %137, %131, %139 in 1 : vector<4x64xbf16>, vector<4x64xbf16>, vector<4x64xbf16> -> vector<4x192xbf16>
    %c0_102 = arith.constant 0 : index
    %c0_103 = arith.constant 0 : index
    %141 = vector.load %arg10[%c0_102, %c0_103] : memref<192x128xbf16, #tpu.memory_space<vmem>>, vector<192x128xbf16>
    %cst_104 = arith.constant dense<0.000000e+00> : vector<4x128xf32>
    %142 = tpu.matmul %140, %141, %cst_104 {dimension_numbers = #tpu.dot_dimension_numbers<[1], [0], [0], [1], [0, 0, 1, 1], [], []>} : vector<4x192xbf16>, vector<192x128xbf16>, vector<4x128xf32> -> vector<4x128xf32>
    %c0_105 = arith.constant 0 : index
    %c0_106 = arith.constant 0 : index
    %c0_107 = arith.constant 0 : index
    %143 = vector.load %arg11[%c0_105, %c0_106, %c0_107] : memref<2x1x128xf32, #tpu.memory_space<vmem>>, vector<1x1x128xf32>
    %144 = vector.shape_cast %143 : vector<1x1x128xf32> to vector<1x128xf32>
    %145 = vector.broadcast %144 : vector<1x128xf32> to vector<4x128xf32>
    %146 = arith.mulf %142, %145 : vector<4x128xf32>
    %c1_108 = arith.constant 1 : index
    %c0_109 = arith.constant 0 : index
    %c0_110 = arith.constant 0 : index
    %147 = vector.load %arg11[%c1_108, %c0_109, %c0_110] : memref<2x1x128xf32, #tpu.memory_space<vmem>>, vector<1x1x128xf32>
    %148 = vector.shape_cast %147 : vector<1x1x128xf32> to vector<1x128xf32>
    %149 = vector.broadcast %148 : vector<1x128xf32> to vector<4x128xf32>
    %150 = arith.addf %146, %149 : vector<4x128xf32>
    %cst_111 = arith.constant 0.000000e+00 : f32
    %151 = vector.broadcast %cst_111 : f32 to vector<4x128xf32>
    %152 = arith.cmpf oge, %150, %151 : vector<4x128xf32>
    %cst_112 = arith.constant 0.00999999977 : f32
    %153 = vector.broadcast %cst_112 : f32 to vector<4x128xf32>
    %154 = arith.mulf %153, %150 : vector<4x128xf32>
    %155 = arith.select %152, %150, %154 : vector<4x128xi1>, vector<4x128xf32>
    %156 = arith.truncf %155 : vector<4x128xf32> to vector<4x128xbf16>
    %c0_113 = arith.constant 0 : index
    %c0_114 = arith.constant 0 : index
    %c0_115 = arith.constant 0 : index
    %157 = vector.load %arg24[%c0_113, %c0_114, %c0_115] : memref<2x4x4xbf16, #tpu.memory_space<vmem>>, vector<1x4x4xbf16>
    %158 = vector.shape_cast %157 : vector<1x4x4xbf16> to vector<4x4xbf16>
    %c1_116 = arith.constant 1 : index
    %c0_117 = arith.constant 0 : index
    %c0_118 = arith.constant 0 : index
    %159 = vector.load %arg24[%c1_116, %c0_117, %c0_118] : memref<2x4x4xbf16, #tpu.memory_space<vmem>>, vector<1x4x4xbf16>
    %160 = vector.shape_cast %159 : vector<1x4x4xbf16> to vector<4x4xbf16>
    %cst_119 = arith.constant dense<0.000000e+00> : vector<4x128xf32>
    %161 = tpu.matmul %158, %156, %cst_119 {dimension_numbers = #tpu.dot_dimension_numbers<[1], [0], [0], [1], [0, 0, 1, 1], [], []>} : vector<4x4xbf16>, vector<4x128xbf16>, vector<4x128xf32> -> vector<4x128xf32>
    %162 = arith.truncf %161 : vector<4x128xf32> to vector<4x128xbf16>
    %cst_120 = arith.constant dense<0.000000e+00> : vector<4x128xf32>
    %163 = tpu.matmul %160, %156, %cst_120 {dimension_numbers = #tpu.dot_dimension_numbers<[1], [0], [0], [1], [0, 0, 1, 1], [], []>} : vector<4x4xbf16>, vector<4x128xbf16>, vector<4x128xf32> -> vector<4x128xf32>
    %164 = arith.truncf %163 : vector<4x128xf32> to vector<4x128xbf16>
    %165 = tpu.concatenate %162, %156, %164 in 1 : vector<4x128xbf16>, vector<4x128xbf16>, vector<4x128xbf16> -> vector<4x384xbf16>
    %c0_121 = arith.constant 0 : index
    %c0_122 = arith.constant 0 : index
    %166 = vector.load %arg12[%c0_121, %c0_122] : memref<384x128xbf16, #tpu.memory_space<vmem>>, vector<384x128xbf16>
    %cst_123 = arith.constant dense<0.000000e+00> : vector<4x128xf32>
    %167 = tpu.matmul %165, %166, %cst_123 {dimension_numbers = #tpu.dot_dimension_numbers<[1], [0], [0], [1], [0, 0, 1, 1], [], []>} : vector<4x384xbf16>, vector<384x128xbf16>, vector<4x128xf32> -> vector<4x128xf32>
    %c0_124 = arith.constant 0 : index
    %c0_125 = arith.constant 0 : index
    %c0_126 = arith.constant 0 : index
    %168 = vector.load %arg13[%c0_124, %c0_125, %c0_126] : memref<2x1x128xf32, #tpu.memory_space<vmem>>, vector<1x1x128xf32>
    %169 = vector.shape_cast %168 : vector<1x1x128xf32> to vector<1x128xf32>
    %170 = vector.broadcast %169 : vector<1x128xf32> to vector<4x128xf32>
    %171 = arith.mulf %167, %170 : vector<4x128xf32>
    %c1_127 = arith.constant 1 : index
    %c0_128 = arith.constant 0 : index
    %c0_129 = arith.constant 0 : index
    %172 = vector.load %arg13[%c1_127, %c0_128, %c0_129] : memref<2x1x128xf32, #tpu.memory_space<vmem>>, vector<1x1x128xf32>
    %173 = vector.shape_cast %172 : vector<1x1x128xf32> to vector<1x128xf32>
    %174 = vector.broadcast %173 : vector<1x128xf32> to vector<4x128xf32>
    %175 = arith.addf %171, %174 : vector<4x128xf32>
    %cst_130 = arith.constant 0.000000e+00 : f32
    %176 = vector.broadcast %cst_130 : f32 to vector<4x128xf32>
    %177 = arith.cmpf oge, %175, %176 : vector<4x128xf32>
    %cst_131 = arith.constant 0.00999999977 : f32
    %178 = vector.broadcast %cst_131 : f32 to vector<4x128xf32>
    %179 = arith.mulf %178, %175 : vector<4x128xf32>
    %180 = arith.select %177, %175, %179 : vector<4x128xi1>, vector<4x128xf32>
    %c0_132 = arith.constant 0 : index
    %c0_133 = arith.constant 0 : index
    %c0_134 = arith.constant 0 : index
    %181 = vector.load %arg36[%c0_132, %c0_133, %c0_134] : memref<1x4x128xf32, #tpu.memory_space<vmem>>, vector<1x4x128xf32>
    %182 = vector.shape_cast %181 : vector<1x4x128xf32> to vector<4x128xf32>
    %183 = vector.shape_cast %180 : vector<4x128xf32> to vector<1x4x128xf32>
    tpu.vector_store %arg36[%c0_132, %c0_133, %c0_134], %183 {strides = array<i32>} : memref<1x4x128xf32, #tpu.memory_space<vmem>>, vector<1x4x128xf32>,
    %184 = arith.truncf %180 : vector<4x128xf32> to vector<4x128xbf16>
    %c0_135 = arith.constant 0 : index
    %c0_136 = arith.constant 0 : index
    %185 = vector.load %arg30[%c0_135, %c0_136] : memref<128x128xbf16, #tpu.memory_space<vmem>>, vector<128x128xbf16>
    %cst_137 = arith.constant dense<0.000000e+00> : vector<4x128xf32>
    %186 = tpu.matmul %184, %185, %cst_137 {dimension_numbers = #tpu.dot_dimension_numbers<[1], [0], [0], [1], [0, 0, 1, 1], [], []>} : vector<4x128xbf16>, vector<128x128xbf16>, vector<4x128xf32> -> vector<4x128xf32>
    %187 = vector.extract_strided_slice %186 {offsets = [0, 0], sizes = [4, 64], strides = [1, 1]} : vector<4x128xf32> to vector<4x64xf32>
    %188 = vector.extract_strided_slice %186 {offsets = [0, 64], sizes = [4, 64], strides = [1, 1]} : vector<4x128xf32> to vector<4x64xf32>
    %189 = arith.maximumf %187, %188 : vector<4x64xf32>
    %190 = arith.truncf %189 : vector<4x64xf32> to vector<4x64xbf16>
    %c0_138 = arith.constant 0 : index
    %c0_139 = arith.constant 0 : index
    %191 = vector.load %arg31[%c0_138, %c0_139] : memref<4x4xbf16, #tpu.memory_space<vmem>>, vector<4x4xbf16>
    %cst_140 = arith.constant dense<0.000000e+00> : vector<4x64xf32>
    %192 = tpu.matmul %191, %190, %cst_140 {dimension_numbers = #tpu.dot_dimension_numbers<[1], [0], [0], [1], [0, 0, 1, 1], [], []>} : vector<4x4xbf16>, vector<4x64xbf16>, vector<4x64xf32> -> vector<4x64xf32>
    %193 = vector.extract_strided_slice %192 {offsets = [0, 0], sizes = [2, 64], strides = [1, 1]} : vector<4x64xf32> to vector<2x64xf32>
    %194 = vector.extract_strided_slice %192 {offsets = [2, 0], sizes = [2, 64], strides = [1, 1]} : vector<4x64xf32> to vector<2x64xf32>
    %195 = arith.maximumf %193, %194 : vector<2x64xf32>
    %196 = arith.truncf %195 : vector<2x64xf32> to vector<2x64xbf16>
    %c0_141 = arith.constant 0 : index
    %c0_142 = arith.constant 0 : index
    %c0_143 = arith.constant 0 : index
    %197 = vector.load %arg25[%c0_141, %c0_142, %c0_143] : memref<2x2x2xbf16, #tpu.memory_space<vmem>>, vector<1x2x2xbf16>
    %198 = vector.shape_cast %197 : vector<1x2x2xbf16> to vector<2x2xbf16>
    %c1_144 = arith.constant 1 : index
    %c0_145 = arith.constant 0 : index
    %c0_146 = arith.constant 0 : index
    %199 = vector.load %arg25[%c1_144, %c0_145, %c0_146] : memref<2x2x2xbf16, #tpu.memory_space<vmem>>, vector<1x2x2xbf16>
    %200 = vector.shape_cast %199 : vector<1x2x2xbf16> to vector<2x2xbf16>
    %cst_147 = arith.constant dense<0.000000e+00> : vector<2x64xf32>
    %201 = tpu.matmul %198, %196, %cst_147 {dimension_numbers = #tpu.dot_dimension_numbers<[1], [0], [0], [1], [0, 0, 1, 1], [], []>} : vector<2x2xbf16>, vector<2x64xbf16>, vector<2x64xf32> -> vector<2x64xf32>
    %202 = arith.truncf %201 : vector<2x64xf32> to vector<2x64xbf16>
    %cst_148 = arith.constant dense<0.000000e+00> : vector<2x64xf32>
    %203 = tpu.matmul %200, %196, %cst_148 {dimension_numbers = #tpu.dot_dimension_numbers<[1], [0], [0], [1], [0, 0, 1, 1], [], []>} : vector<2x2xbf16>, vector<2x64xbf16>, vector<2x64xf32> -> vector<2x64xf32>
    %204 = arith.truncf %203 : vector<2x64xf32> to vector<2x64xbf16>
    %205 = tpu.concatenate %202, %196, %204 in 1 : vector<2x64xbf16>, vector<2x64xbf16>, vector<2x64xbf16> -> vector<2x192xbf16>
    %c0_149 = arith.constant 0 : index
    %c0_150 = arith.constant 0 : index
    %206 = vector.load %arg14[%c0_149, %c0_150] : memref<192x128xbf16, #tpu.memory_space<vmem>>, vector<192x128xbf16>
    %cst_151 = arith.constant dense<0.000000e+00> : vector<2x128xf32>
    %207 = tpu.matmul %205, %206, %cst_151 {dimension_numbers = #tpu.dot_dimension_numbers<[1], [0], [0], [1], [0, 0, 1, 1], [], []>} : vector<2x192xbf16>, vector<192x128xbf16>, vector<2x128xf32> -> vector<2x128xf32>
    %c0_152 = arith.constant 0 : index
    %c0_153 = arith.constant 0 : index
    %c0_154 = arith.constant 0 : index
    %208 = vector.load %arg15[%c0_152, %c0_153, %c0_154] : memref<2x1x128xf32, #tpu.memory_space<vmem>>, vector<1x1x128xf32>
    %209 = vector.shape_cast %208 : vector<1x1x128xf32> to vector<1x128xf32>
    %210 = vector.broadcast %209 : vector<1x128xf32> to vector<2x128xf32>
    %211 = arith.mulf %207, %210 : vector<2x128xf32>
    %c1_155 = arith.constant 1 : index
    %c0_156 = arith.constant 0 : index
    %c0_157 = arith.constant 0 : index
    %212 = vector.load %arg15[%c1_155, %c0_156, %c0_157] : memref<2x1x128xf32, #tpu.memory_space<vmem>>, vector<1x1x128xf32>
    %213 = vector.shape_cast %212 : vector<1x1x128xf32> to vector<1x128xf32>
    %214 = vector.broadcast %213 : vector<1x128xf32> to vector<2x128xf32>
    %215 = arith.addf %211, %214 : vector<2x128xf32>
    %cst_158 = arith.constant 0.000000e+00 : f32
    %216 = vector.broadcast %cst_158 : f32 to vector<2x128xf32>
    %217 = arith.cmpf oge, %215, %216 : vector<2x128xf32>
    %cst_159 = arith.constant 0.00999999977 : f32
    %218 = vector.broadcast %cst_159 : f32 to vector<2x128xf32>
    %219 = arith.mulf %218, %215 : vector<2x128xf32>
    %220 = arith.select %217, %215, %219 : vector<2x128xi1>, vector<2x128xf32>
    %221 = arith.truncf %220 : vector<2x128xf32> to vector<2x128xbf16>
    %c0_160 = arith.constant 0 : index
    %c0_161 = arith.constant 0 : index
    %c0_162 = arith.constant 0 : index
    %222 = vector.load %arg25[%c0_160, %c0_161, %c0_162] : memref<2x2x2xbf16, #tpu.memory_space<vmem>>, vector<1x2x2xbf16>
    %223 = vector.shape_cast %222 : vector<1x2x2xbf16> to vector<2x2xbf16>
    %c1_163 = arith.constant 1 : index
    %c0_164 = arith.constant 0 : index
    %c0_165 = arith.constant 0 : index
    %224 = vector.load %arg25[%c1_163, %c0_164, %c0_165] : memref<2x2x2xbf16, #tpu.memory_space<vmem>>, vector<1x2x2xbf16>
    %225 = vector.shape_cast %224 : vector<1x2x2xbf16> to vector<2x2xbf16>
    %cst_166 = arith.constant dense<0.000000e+00> : vector<2x128xf32>
    %226 = tpu.matmul %223, %221, %cst_166 {dimension_numbers = #tpu.dot_dimension_numbers<[1], [0], [0], [1], [0, 0, 1, 1], [], []>} : vector<2x2xbf16>, vector<2x128xbf16>, vector<2x128xf32> -> vector<2x128xf32>
    %227 = arith.truncf %226 : vector<2x128xf32> to vector<2x128xbf16>
    %cst_167 = arith.constant dense<0.000000e+00> : vector<2x128xf32>
    %228 = tpu.matmul %225, %221, %cst_167 {dimension_numbers = #tpu.dot_dimension_numbers<[1], [0], [0], [1], [0, 0, 1, 1], [], []>} : vector<2x2xbf16>, vector<2x128xbf16>, vector<2x128xf32> -> vector<2x128xf32>
    %229 = arith.truncf %228 : vector<2x128xf32> to vector<2x128xbf16>
    %230 = tpu.concatenate %227, %221, %229 in 1 : vector<2x128xbf16>, vector<2x128xbf16>, vector<2x128xbf16> -> vector<2x384xbf16>
    %c0_168 = arith.constant 0 : index
    %c0_169 = arith.constant 0 : index
    %231 = vector.load %arg16[%c0_168, %c0_169] : memref<384x128xbf16, #tpu.memory_space<vmem>>, vector<384x128xbf16>
    %cst_170 = arith.constant dense<0.000000e+00> : vector<2x128xf32>
    %232 = tpu.matmul %230, %231, %cst_170 {dimension_numbers = #tpu.dot_dimension_numbers<[1], [0], [0], [1], [0, 0, 1, 1], [], []>} : vector<2x384xbf16>, vector<384x128xbf16>, vector<2x128xf32> -> vector<2x128xf32>
    %c0_171 = arith.constant 0 : index
    %c0_172 = arith.constant 0 : index
    %c0_173 = arith.constant 0 : index
    %233 = vector.load %arg17[%c0_171, %c0_172, %c0_173] : memref<2x1x128xf32, #tpu.memory_space<vmem>>, vector<1x1x128xf32>
    %234 = vector.shape_cast %233 : vector<1x1x128xf32> to vector<1x128xf32>
    %235 = vector.broadcast %234 : vector<1x128xf32> to vector<2x128xf32>
    %236 = arith.mulf %232, %235 : vector<2x128xf32>
    %c1_174 = arith.constant 1 : index
    %c0_175 = arith.constant 0 : index
    %c0_176 = arith.constant 0 : index
    %237 = vector.load %arg17[%c1_174, %c0_175, %c0_176] : memref<2x1x128xf32, #tpu.memory_space<vmem>>, vector<1x1x128xf32>
    %238 = vector.shape_cast %237 : vector<1x1x128xf32> to vector<1x128xf32>
    %239 = vector.broadcast %238 : vector<1x128xf32> to vector<2x128xf32>
    %240 = arith.addf %236, %239 : vector<2x128xf32>
    %cst_177 = arith.constant 0.000000e+00 : f32
    %241 = vector.broadcast %cst_177 : f32 to vector<2x128xf32>
    %242 = arith.cmpf oge, %240, %241 : vector<2x128xf32>
    %cst_178 = arith.constant 0.00999999977 : f32
    %243 = vector.broadcast %cst_178 : f32 to vector<2x128xf32>
    %244 = arith.mulf %243, %240 : vector<2x128xf32>
    %245 = arith.select %242, %240, %244 : vector<2x128xi1>, vector<2x128xf32>
    %c0_179 = arith.constant 0 : index
    %c0_180 = arith.constant 0 : index
    %c0_181 = arith.constant 0 : index
    %246 = vector.load %arg37[%c0_179, %c0_180, %c0_181] : memref<1x2x128xf32, #tpu.memory_space<vmem>>, vector<1x2x128xf32>
    %247 = vector.shape_cast %246 : vector<1x2x128xf32> to vector<2x128xf32>
    %248 = vector.shape_cast %245 : vector<2x128xf32> to vector<1x2x128xf32>
    tpu.vector_store %arg37[%c0_179, %c0_180, %c0_181], %248 {strides = array<i32>} : memref<1x2x128xf32, #tpu.memory_space<vmem>>, vector<1x2x128xf32>,
    %249 = arith.truncf %245 : vector<2x128xf32> to vector<2x128xbf16>
    %c0_182 = arith.constant 0 : index
    %c0_183 = arith.constant 0 : index
    %250 = vector.load %arg32[%c0_182, %c0_183] : memref<128x128xbf16, #tpu.memory_space<vmem>>, vector<128x128xbf16>
    %cst_184 = arith.constant dense<0.000000e+00> : vector<2x128xf32>
    %251 = tpu.matmul %249, %250, %cst_184 {dimension_numbers = #tpu.dot_dimension_numbers<[1], [0], [0], [1], [0, 0, 1, 1], [], []>} : vector<2x128xbf16>, vector<128x128xbf16>, vector<2x128xf32> -> vector<2x128xf32>
    %252 = vector.extract_strided_slice %251 {offsets = [0, 0], sizes = [2, 64], strides = [1, 1]} : vector<2x128xf32> to vector<2x64xf32>
    %253 = vector.extract_strided_slice %251 {offsets = [0, 64], sizes = [2, 64], strides = [1, 1]} : vector<2x128xf32> to vector<2x64xf32>
    %254 = arith.maximumf %252, %253 : vector<2x64xf32>
    %255 = arith.truncf %254 : vector<2x64xf32> to vector<2x64xbf16>
    %c0_185 = arith.constant 0 : index
    %c0_186 = arith.constant 0 : index
    %256 = vector.load %arg33[%c0_185, %c0_186] : memref<2x2xbf16, #tpu.memory_space<vmem>>, vector<2x2xbf16>
    %cst_187 = arith.constant dense<0.000000e+00> : vector<2x64xf32>
    %257 = tpu.matmul %256, %255, %cst_187 {dimension_numbers = #tpu.dot_dimension_numbers<[1], [0], [0], [1], [0, 0, 1, 1], [], []>} : vector<2x2xbf16>, vector<2x64xbf16>, vector<2x64xf32> -> vector<2x64xf32>
    %258 = vector.extract_strided_slice %257 {offsets = [0, 0], sizes = [1, 64], strides = [1, 1]} : vector<2x64xf32> to vector<1x64xf32>
    %259 = vector.extract_strided_slice %257 {offsets = [1, 0], sizes = [1, 64], strides = [1, 1]} : vector<2x64xf32> to vector<1x64xf32>
    %260 = arith.maximumf %258, %259 : vector<1x64xf32>
    %261 = arith.truncf %260 : vector<1x64xf32> to vector<1x64xbf16>
    %c64 = arith.constant 64 : index
    %c0_188 = arith.constant 0 : index
    %262 = vector.load %arg18[%c64, %c0_188] : memref<192x128xbf16, #tpu.memory_space<vmem>>, vector<64x128xbf16>
    %cst_189 = arith.constant dense<0.000000e+00> : vector<1x128xf32>
    %263 = tpu.matmul %261, %262, %cst_189 {dimension_numbers = #tpu.dot_dimension_numbers<[1], [0], [0], [1], [0, 0, 1, 1], [], []>} : vector<1x64xbf16>, vector<64x128xbf16>, vector<1x128xf32> -> vector<1x128xf32>
    %c0_190 = arith.constant 0 : index
    %c0_191 = arith.constant 0 : index
    %c0_192 = arith.constant 0 : index
    %264 = vector.load %arg19[%c0_190, %c0_191, %c0_192] : memref<2x1x128xf32, #tpu.memory_space<vmem>>, vector<1x1x128xf32>
    %265 = vector.shape_cast %264 : vector<1x1x128xf32> to vector<1x128xf32>
    %266 = arith.mulf %263, %265 : vector<1x128xf32>
    %c1_193 = arith.constant 1 : index
    %c0_194 = arith.constant 0 : index
    %c0_195 = arith.constant 0 : index
    %267 = vector.load %arg19[%c1_193, %c0_194, %c0_195] : memref<2x1x128xf32, #tpu.memory_space<vmem>>, vector<1x1x128xf32>
    %268 = vector.shape_cast %267 : vector<1x1x128xf32> to vector<1x128xf32>
    %269 = arith.addf %266, %268 : vector<1x128xf32>
    %cst_196 = arith.constant 0.000000e+00 : f32
    %270 = vector.broadcast %cst_196 : f32 to vector<1x128xf32>
    %271 = arith.cmpf oge, %269, %270 : vector<1x128xf32>
    %cst_197 = arith.constant 0.00999999977 : f32
    %272 = vector.broadcast %cst_197 : f32 to vector<1x128xf32>
    %273 = arith.mulf %272, %269 : vector<1x128xf32>
    %274 = arith.select %271, %269, %273 : vector<1x128xi1>, vector<1x128xf32>
    %275 = arith.truncf %274 : vector<1x128xf32> to vector<1x128xbf16>
    %c128 = arith.constant 128 : index
    %c0_198 = arith.constant 0 : index
    %276 = vector.load %arg20[%c128, %c0_198] : memref<384x128xbf16, #tpu.memory_space<vmem>>, vector<128x128xbf16>
    %cst_199 = arith.constant dense<0.000000e+00> : vector<1x128xf32>
    %277 = tpu.matmul %275, %276, %cst_199 {dimension_numbers = #tpu.dot_dimension_numbers<[1], [0], [0], [1], [0, 0, 1, 1], [], []>} : vector<1x128xbf16>, vector<128x128xbf16>, vector<1x128xf32> -> vector<1x128xf32>
    %c0_200 = arith.constant 0 : index
    %c0_201 = arith.constant 0 : index
    %c0_202 = arith.constant 0 : index
    %278 = vector.load %arg21[%c0_200, %c0_201, %c0_202] : memref<2x1x128xf32, #tpu.memory_space<vmem>>, vector<1x1x128xf32>
    %279 = vector.shape_cast %278 : vector<1x1x128xf32> to vector<1x128xf32>
    %280 = arith.mulf %277, %279 : vector<1x128xf32>
    %c1_203 = arith.constant 1 : index
    %c0_204 = arith.constant 0 : index
    %c0_205 = arith.constant 0 : index
    %281 = vector.load %arg21[%c1_203, %c0_204, %c0_205] : memref<2x1x128xf32, #tpu.memory_space<vmem>>, vector<1x1x128xf32>
    %282 = vector.shape_cast %281 : vector<1x1x128xf32> to vector<1x128xf32>
    %283 = arith.addf %280, %282 : vector<1x128xf32>
    %cst_206 = arith.constant 0.000000e+00 : f32
    %284 = vector.broadcast %cst_206 : f32 to vector<1x128xf32>
    %285 = arith.cmpf oge, %283, %284 : vector<1x128xf32>
    %cst_207 = arith.constant 0.00999999977 : f32
    %286 = vector.broadcast %cst_207 : f32 to vector<1x128xf32>
    %287 = arith.mulf %286, %283 : vector<1x128xf32>
    %288 = arith.select %285, %283, %287 : vector<1x128xi1>, vector<1x128xf32>
    %c0_208 = arith.constant 0 : index
    %c0_209 = arith.constant 0 : index
    %c0_210 = arith.constant 0 : index
    %289 = vector.load %arg38[%c0_208, %c0_209, %c0_210] : memref<1x1x128xf32, #tpu.memory_space<vmem>>, vector<1x1x128xf32>
    %290 = vector.shape_cast %289 : vector<1x1x128xf32> to vector<1x128xf32>
    %291 = vector.shape_cast %288 : vector<1x128xf32> to vector<1x1x128xf32>
    tpu.vector_store %arg38[%c0_208, %c0_209, %c0_210], %291 {strides = array<i32>} : memref<1x1x128xf32, #tpu.memory_space<vmem>>, vector<1x1x128xf32>,
    return
  }
  func.func @transform_0(%arg0: i32) -> (i32, i32, i32) {
    %c0_i32 = arith.constant 0 : i32
    %c0_i32_0 = arith.constant 0 : i32
    %c0_i32_1 = arith.constant 0 : i32
    return %arg0, %c0_i32, %c0_i32_0 : i32, i32, i32
  }
  func.func @transform_1(%arg0: i32) -> (i32, i32) {
    %c0_i32 = arith.constant 0 : i32
    %c0_i32_0 = arith.constant 0 : i32
    %c0_i32_1 = arith.constant 0 : i32
    return %c0_i32, %c0_i32_0 : i32, i32
  }
  func.func @transform_2(%arg0: i32) -> (i32, i32, i32) {
    %c0_i32 = arith.constant 0 : i32
    %c0_i32_0 = arith.constant 0 : i32
    %c0_i32_1 = arith.constant 0 : i32
    %c0_i32_2 = arith.constant 0 : i32
    return %c0_i32, %c0_i32_0, %c0_i32_1 : i32, i32, i32
  }
  func.func @transform_3(%arg0: i32) -> (i32, i32) {
    %c0_i32 = arith.constant 0 : i32
    %c0_i32_0 = arith.constant 0 : i32
    %c0_i32_1 = arith.constant 0 : i32
    return %c0_i32, %c0_i32_0 : i32, i32
  }
  func.func @transform_4(%arg0: i32) -> (i32, i32, i32) {
    %c0_i32 = arith.constant 0 : i32
    %c0_i32_0 = arith.constant 0 : i32
    %c0_i32_1 = arith.constant 0 : i32
    %c0_i32_2 = arith.constant 0 : i32
    return %c0_i32, %c0_i32_0, %c0_i32_1 : i32, i32, i32
  }
  func.func @transform_5(%arg0: i32) -> (i32, i32) {
    %c0_i32 = arith.constant 0 : i32
    %c0_i32_0 = arith.constant 0 : i32
    %c0_i32_1 = arith.constant 0 : i32
    return %c0_i32, %c0_i32_0 : i32, i32
  }
  func.func @transform_6(%arg0: i32) -> (i32, i32, i32) {
    %c0_i32 = arith.constant 0 : i32
    %c0_i32_0 = arith.constant 0 : i32
    %c0_i32_1 = arith.constant 0 : i32
    %c0_i32_2 = arith.constant 0 : i32
    return %c0_i32, %c0_i32_0, %c0_i32_1 : i32, i32, i32
  }
  func.func @transform_7(%arg0: i32) -> (i32, i32) {
    %c0_i32 = arith.constant 0 : i32
    %c0_i32_0 = arith.constant 0 : i32
    %c0_i32_1 = arith.constant 0 : i32
    return %c0_i32, %c0_i32_0 : i32, i32
  }
  func.func @transform_8(%arg0: i32) -> (i32, i32, i32) {
    %c0_i32 = arith.constant 0 : i32
    %c0_i32_0 = arith.constant 0 : i32
    %c0_i32_1 = arith.constant 0 : i32
    %c0_i32_2 = arith.constant 0 : i32
    return %c0_i32, %c0_i32_0, %c0_i32_1 : i32, i32, i32
  }
  func.func @transform_9(%arg0: i32) -> (i32, i32) {
    %c0_i32 = arith.constant 0 : i32
    %c0_i32_0 = arith.constant 0 : i32
    %c0_i32_1 = arith.constant 0 : i32
    return %c0_i32, %c0_i32_0 : i32, i32
  }
  func.func @transform_10(%arg0: i32) -> (i32, i32, i32) {
    %c0_i32 = arith.constant 0 : i32
    %c0_i32_0 = arith.constant 0 : i32
    %c0_i32_1 = arith.constant 0 : i32
    %c0_i32_2 = arith.constant 0 : i32
    return %c0_i32, %c0_i32_0, %c0_i32_1 : i32, i32, i32
  }
  func.func @transform_11(%arg0: i32) -> (i32, i32) {
    %c0_i32 = arith.constant 0 : i32
    %c0_i32_0 = arith.constant 0 : i32
    %c0_i32_1 = arith.constant 0 : i32
    return %c0_i32, %c0_i32_0 : i32, i32
  }
  func.func @transform_12(%arg0: i32) -> (i32, i32, i32) {
    %c0_i32 = arith.constant 0 : i32
    %c0_i32_0 = arith.constant 0 : i32
    %c0_i32_1 = arith.constant 0 : i32
    %c0_i32_2 = arith.constant 0 : i32
    return %c0_i32, %c0_i32_0, %c0_i32_1 : i32, i32, i32
  }
  func.func @transform_13(%arg0: i32) -> (i32, i32) {
    %c0_i32 = arith.constant 0 : i32
    %c0_i32_0 = arith.constant 0 : i32
    %c0_i32_1 = arith.constant 0 : i32
    return %c0_i32, %c0_i32_0 : i32, i32
  }
  func.func @transform_14(%arg0: i32) -> (i32, i32, i32) {
    %c0_i32 = arith.constant 0 : i32
    %c0_i32_0 = arith.constant 0 : i32
    %c0_i32_1 = arith.constant 0 : i32
    %c0_i32_2 = arith.constant 0 : i32
    return %c0_i32, %c0_i32_0, %c0_i32_1 : i32, i32, i32
  }
  func.func @transform_15(%arg0: i32) -> (i32, i32) {
    %c0_i32 = arith.constant 0 : i32
    %c0_i32_0 = arith.constant 0 : i32
    %c0_i32_1 = arith.constant 0 : i32
    return %c0_i32, %c0_i32_0 : i32, i32
  }
  func.func @transform_16(%arg0: i32) -> (i32, i32, i32) {
    %c0_i32 = arith.constant 0 : i32
    %c0_i32_0 = arith.constant 0 : i32
    %c0_i32_1 = arith.constant 0 : i32
    %c0_i32_2 = arith.constant 0 : i32
    return %c0_i32, %c0_i32_0, %c0_i32_1 : i32, i32, i32
  }
  func.func @transform_17(%arg0: i32) -> (i32, i32) {
    %c0_i32 = arith.constant 0 : i32
    %c0_i32_0 = arith.constant 0 : i32
    %c0_i32_1 = arith.constant 0 : i32
    return %c0_i32, %c0_i32_0 : i32, i32
  }
  func.func @transform_18(%arg0: i32) -> (i32, i32, i32) {
    %c0_i32 = arith.constant 0 : i32
    %c0_i32_0 = arith.constant 0 : i32
    %c0_i32_1 = arith.constant 0 : i32
    %c0_i32_2 = arith.constant 0 : i32
    return %c0_i32, %c0_i32_0, %c0_i32_1 : i32, i32, i32
  }
  func.func @transform_19(%arg0: i32) -> (i32, i32) {
    %c0_i32 = arith.constant 0 : i32
    %c0_i32_0 = arith.constant 0 : i32
    %c0_i32_1 = arith.constant 0 : i32
    return %c0_i32, %c0_i32_0 : i32, i32
  }
  func.func @transform_20(%arg0: i32) -> (i32, i32, i32) {
    %c0_i32 = arith.constant 0 : i32
    %c0_i32_0 = arith.constant 0 : i32
    %c0_i32_1 = arith.constant 0 : i32
    %c0_i32_2 = arith.constant 0 : i32
    return %c0_i32, %c0_i32_0, %c0_i32_1 : i32, i32, i32
  }
  func.func @transform_21(%arg0: i32) -> (i32, i32, i32) {
    %c0_i32 = arith.constant 0 : i32
    %c0_i32_0 = arith.constant 0 : i32
    %c0_i32_1 = arith.constant 0 : i32
    %c0_i32_2 = arith.constant 0 : i32
    return %c0_i32, %c0_i32_0, %c0_i32_1 : i32, i32, i32
  }
  func.func @transform_22(%arg0: i32) -> (i32, i32, i32) {
    %c0_i32 = arith.constant 0 : i32
    %c0_i32_0 = arith.constant 0 : i32
    %c0_i32_1 = arith.constant 0 : i32
    %c0_i32_2 = arith.constant 0 : i32
    return %c0_i32, %c0_i32_0, %c0_i32_1 : i32, i32, i32
  }
  func.func @transform_23(%arg0: i32) -> (i32, i32, i32) {
    %c0_i32 = arith.constant 0 : i32
    %c0_i32_0 = arith.constant 0 : i32
    %c0_i32_1 = arith.constant 0 : i32
    %c0_i32_2 = arith.constant 0 : i32
    return %c0_i32, %c0_i32_0, %c0_i32_1 : i32, i32, i32
  }
  func.func @transform_24(%arg0: i32) -> (i32, i32, i32) {
    %c0_i32 = arith.constant 0 : i32
    %c0_i32_0 = arith.constant 0 : i32
    %c0_i32_1 = arith.constant 0 : i32
    %c0_i32_2 = arith.constant 0 : i32
    return %c0_i32, %c0_i32_0, %c0_i32_1 : i32, i32, i32
  }
  func.func @transform_25(%arg0: i32) -> (i32, i32) {
    %c0_i32 = arith.constant 0 : i32
    %c0_i32_0 = arith.constant 0 : i32
    %c0_i32_1 = arith.constant 0 : i32
    return %c0_i32, %c0_i32_0 : i32, i32
  }
  func.func @transform_26(%arg0: i32) -> (i32, i32) {
    %c0_i32 = arith.constant 0 : i32
    %c0_i32_0 = arith.constant 0 : i32
    %c0_i32_1 = arith.constant 0 : i32
    return %c0_i32, %c0_i32_0 : i32, i32
  }
  func.func @transform_27(%arg0: i32) -> (i32, i32) {
    %c0_i32 = arith.constant 0 : i32
    %c0_i32_0 = arith.constant 0 : i32
    %c0_i32_1 = arith.constant 0 : i32
    return %c0_i32, %c0_i32_0 : i32, i32
  }
  func.func @transform_28(%arg0: i32) -> (i32, i32) {
    %c0_i32 = arith.constant 0 : i32
    %c0_i32_0 = arith.constant 0 : i32
    %c0_i32_1 = arith.constant 0 : i32
    return %c0_i32, %c0_i32_0 : i32, i32
  }
  func.func @transform_29(%arg0: i32) -> (i32, i32) {
    %c0_i32 = arith.constant 0 : i32
    %c0_i32_0 = arith.constant 0 : i32
    %c0_i32_1 = arith.constant 0 : i32
    return %c0_i32, %c0_i32_0 : i32, i32
  }
  func.func @transform_30(%arg0: i32) -> (i32, i32) {
    %c0_i32 = arith.constant 0 : i32
    %c0_i32_0 = arith.constant 0 : i32
    %c0_i32_1 = arith.constant 0 : i32
    return %c0_i32, %c0_i32_0 : i32, i32
  }
  func.func @transform_31(%arg0: i32) -> (i32, i32) {
    %c0_i32 = arith.constant 0 : i32
    %c0_i32_0 = arith.constant 0 : i32
    %c0_i32_1 = arith.constant 0 : i32
    return %c0_i32, %c0_i32_0 : i32, i32
  }
  func.func @transform_32(%arg0: i32) -> (i32, i32) {
    %c0_i32 = arith.constant 0 : i32
    %c0_i32_0 = arith.constant 0 : i32
    %c0_i32_1 = arith.constant 0 : i32
    return %c0_i32, %c0_i32_0 : i32, i32
  }
  func.func @transform_33(%arg0: i32) -> (i32, i32, i32) {
    %c0_i32 = arith.constant 0 : i32
    %c0_i32_0 = arith.constant 0 : i32
    %c0_i32_1 = arith.constant 0 : i32
    return %arg0, %c0_i32, %c0_i32_0 : i32, i32, i32
  }
  func.func @transform_34(%arg0: i32) -> (i32, i32, i32) {
    %c0_i32 = arith.constant 0 : i32
    %c0_i32_0 = arith.constant 0 : i32
    %c0_i32_1 = arith.constant 0 : i32
    return %arg0, %c0_i32, %c0_i32_0 : i32, i32, i32
  }
  func.func @transform_35(%arg0: i32) -> (i32, i32, i32) {
    %c0_i32 = arith.constant 0 : i32
    %c0_i32_0 = arith.constant 0 : i32
    %c0_i32_1 = arith.constant 0 : i32
    return %arg0, %c0_i32, %c0_i32_0 : i32, i32, i32
  }
  func.func @transform_36(%arg0: i32) -> (i32, i32, i32) {
    %c0_i32 = arith.constant 0 : i32
    %c0_i32_0 = arith.constant 0 : i32
    %c0_i32_1 = arith.constant 0 : i32
    return %arg0, %c0_i32, %c0_i32_0 : i32, i32, i32
  }
  func.func @transform_37(%arg0: i32) -> (i32, i32, i32) {
    %c0_i32 = arith.constant 0 : i32
    %c0_i32_0 = arith.constant 0 : i32
    %c0_i32_1 = arith.constant 0 : i32
    return %arg0, %c0_i32, %c0_i32_0 : i32, i32, i32
  }
}

</mosaic_0001>

<llo_original>
// kernel: tpu_custom_call.1
$region0: #{tpu_custom_call.1}
  #allocation0 [shape = 'u32[]', space=smem, size = 0x4, offset = 0x4, fixed_abs, tag = 'smem constant byte address 0x4 - core index']
  #allocation1 [shape = 'u32[144,128]{1,0:T(1,128)}', space=vmem, size = 0x12000, scoped, tag = 'internal scratch']
  %s0 = inlined_call_operand.smem [shape: u32[38], index: -1, kind: input, shape index: {}]
  %s1 = sld [smem:[%s0]]
  %s2 = scalar_lea.smem %s0, 1
  %s3 = sld [smem:[%s2]]
  %s4 = scalar_lea.smem %s0, 2
  %s5 = sld [smem:[%s4]]
  %s6 = scalar_lea.smem %s0, 3
  %s7 = sld [smem:[%s6]]
  %s8 = scalar_lea.smem %s0, 4
  %s9 = sld [smem:[%s8]]
  %s10 = scalar_lea.smem %s0, 5
  %s11 = sld [smem:[%s10]]
  %s12 = scalar_lea.smem %s0, 6
  %s13 = sld [smem:[%s12]]
  %s14 = scalar_lea.smem %s0, 7
  %s15 = sld [smem:[%s14]]
  %s16 = scalar_lea.smem %s0, 8
  %s17 = sld [smem:[%s16]]
  %s18 = scalar_lea.smem %s0, 9
  %s19 = sld [smem:[%s18]]
  %s20 = scalar_lea.smem %s0, 10
  %s21 = sld [smem:[%s20]]
  %s22 = scalar_lea.smem %s0, 11
  %s23 = sld [smem:[%s22]]
  %s24 = scalar_lea.smem %s0, 12
  %s25 = sld [smem:[%s24]]
  %s26 = scalar_lea.smem %s0, 13
  %s27 = sld [smem:[%s26]]
  %s28 = scalar_lea.smem %s0, 14
  %s29 = sld [smem:[%s28]]
  %s30 = scalar_lea.smem %s0, 15
  %s31 = sld [smem:[%s30]]
  %s32 = scalar_lea.smem %s0, 16
  %s33 = sld [smem:[%s32]]
  %s34 = scalar_lea.smem %s0, 17
  %s35 = sld [smem:[%s34]]
  %s36 = scalar_lea.smem %s0, 18
  %s37 = sld [smem:[%s36]]
  %s38 = scalar_lea.smem %s0, 19
  %s39 = sld [smem:[%s38]]
  %s40 = scalar_lea.smem %s0, 20
  %s41 = sld [smem:[%s40]]
  %s42 = scalar_lea.smem %s0, 21
  %s43 = sld [smem:[%s42]]
  %s44 = scalar_lea.smem %s0, 22
  %s45 = sld [smem:[%s44]]
  %s46 = scalar_lea.smem %s0, 23
  %s47 = sld [smem:[%s46]]
  %s48 = scalar_lea.smem %s0, 24
  %s49 = sld [smem:[%s48]]
  %s50 = scalar_lea.smem %s0, 25
  %s51 = sld [smem:[%s50]]
  %s52 = scalar_lea.smem %s0, 26
  %s53 = sld [smem:[%s52]]
  %s54 = scalar_lea.smem %s0, 27
  %s55 = sld [smem:[%s54]]
  %s56 = scalar_lea.smem %s0, 28
  %s57 = sld [smem:[%s56]]
  %s58 = scalar_lea.smem %s0, 29
  %s59 = sld [smem:[%s58]]
  %s60 = scalar_lea.smem %s0, 30
  %s61 = sld [smem:[%s60]]
  %s62 = scalar_lea.smem %s0, 31
  %s63 = sld [smem:[%s62]]
  %s64 = scalar_lea.smem %s0, 32
  %s65 = sld [smem:[%s64]]
  %s66 = scalar_lea.smem %s0, 33
  %s67 = sld [smem:[%s66]]
  %s68 = scalar_lea.smem %s0, 34
  %s69 = sld [smem:[%s68]]
  %s70 = scalar_lea.smem %s0, 35
  %s71 = sld [smem:[%s70]]
  %s72 = scalar_lea.smem %s0, 36
  %s73 = sld [smem:[%s72]]
  %s74 = scalar_lea.smem %s0, 37
  %s75 = sld [smem:[%s74]]
  %76 = xla_tuple %s67, %s69, %s71, %s73, %s75
  %s77 = sld [smem:[#allocation0]]
  $region297: #{tpu_custom_call.1} parent=0
    _
  %s79 = ssub.s32 1, %s77
  %s80 = scalar_select 0, %s79, %s77
  $region1: #{tpu_custom_call.1} parent=0
    #allocation2 [shape = 'u8[8192]{0}', space=vmem, size = 0x2000, scoped, tag = 'input window, operand 0']
    #allocation3 [shape = 's32[2]{0}', space=sflag, size = 0x8, scoped, tag = 'scoped memory for tpu_custom_call.1']
    #allocation4 [shape = 's32[2]{0}', space=sflag, size = 0x8, scoped, tag = 'scoped memory for tpu_custom_call.1']
    #allocation5 [shape = 'u8[49152]{0}', space=vmem, size = 0xc000, scoped, tag = 'input window, operand 1, single buffered']
    #allocation6 [shape = 's32[1]{0}', space=sflag, size = 0x4, scoped, tag = 'scoped memory for tpu_custom_call.1']
    #allocation7 [shape = 'u8[98304]{0}', space=vmem, size = 0x18000, scoped, tag = 'input window, operand 3, single buffered']
    #allocation8 [shape = 'u8[1024]{0}', space=vmem, size = 0x400, scoped, tag = 'input window, operand 4, single buffered']
    #allocation9 [shape = 's32[1]{0}', space=sflag, size = 0x4, scoped, tag = 'scoped memory for tpu_custom_call.1']
    #allocation10 [shape = 'u8[49152]{0}', space=vmem, size = 0xc000, scoped, tag = 'input window, operand 5, single buffered']
    #allocation11 [shape = 'u8[1024]{0}', space=vmem, size = 0x400, scoped, tag = 'input window, operand 6, single buffered']
    #allocation12 [shape = 's32[1]{0}', space=sflag, size = 0x4, scoped, tag = 'scoped memory for tpu_custom_call.1']
    #allocation13 [shape = 'u8[98304]{0}', space=vmem, size = 0x18000, scoped, tag = 'input window, operand 7, single buffered']
    #allocation14 [shape = 'u8[1024]{0}', space=vmem, size = 0x400, scoped, tag = 'input window, operand 8, single buffered']
    #allocation15 [shape = 's32[1]{0}', space=sflag, size = 0x4, scoped, tag = 'scoped memory for tpu_custom_call.1']
    #allocation16 [shape = 'u8[49152]{0}', space=vmem, size = 0xc000, scoped, tag = 'input window, operand 9, single buffered']
    #allocation17 [shape = 'u8[1024]{0}', space=vmem, size = 0x400, scoped, tag = 'input window, operand 10, single buffered']
    #allocation18 [shape = 's32[1]{0}', space=sflag, size = 0x4, scoped, tag = 'scoped memory for tpu_custom_call.1']
    #allocation19 [shape = 'u8[98304]{0}', space=vmem, size = 0x18000, scoped, tag = 'input window, operand 11, single buffered']
    #allocation20 [shape = 'u8[1024]{0}', space=vmem, size = 0x400, scoped, tag = 'input window, operand 12, single buffered']
    #allocation21 [shape = 's32[1]{0}', space=sflag, size = 0x4, scoped, tag = 'scoped memory for tpu_custom_call.1']
    #allocation22 [shape = 'u8[49152]{0}', space=vmem, size = 0xc000, scoped, tag = 'input window, operand 13, single buffered']
    #allocation23 [shape = 'u8[1024]{0}', space=vmem, size = 0x400, scoped, tag = 'input window, operand 14, single buffered']
    #allocation24 [shape = 's32[1]{0}', space=sflag, size = 0x4, scoped, tag = 'scoped memory for tpu_custom_call.1']
    #allocation25 [shape = 'u8[98304]{0}', space=vmem, size = 0x18000, scoped, tag = 'input window, operand 15, single buffered']
    #allocation26 [shape = 'u8[1024]{0}', space=vmem, size = 0x400, scoped, tag = 'input window, operand 16, single buffered']
    #allocation27 [shape = 's32[1]{0}', space=sflag, size = 0x4, scoped, tag = 'scoped memory for tpu_custom_call.1']
    #allocation28 [shape = 'u8[49152]{0}', space=vmem, size = 0xc000, scoped, tag = 'input window, operand 17, single buffered']
    #allocation29 [shape = 'u8[1024]{0}', space=vmem, size = 0x400, scoped, tag = 'input window, operand 18, single buffered']
    #allocation30 [shape = 's32[1]{0}', space=sflag, size = 0x4, scoped, tag = 'scoped memory for tpu_custom_call.1']
    #allocation31 [shape = 'u8[98304]{0}', space=vmem, size = 0x18000, scoped, tag = 'input window, operand 19, single buffered']
    #allocation32 [shape = 'u8[1024]{0}', space=vmem, size = 0x400, scoped, tag = 'input window, operand 20, single buffered']
    #allocation33 [shape = 's32[1]{0}', space=sflag, size = 0x4, scoped, tag = 'scoped memory for tpu_custom_call.1']
    #allocation34 [shape = 'u8[2048]{0}', space=vmem, size = 0x800, scoped, tag = 'input window, operand 23, single buffered']
    #allocation35 [shape = 'u8[1024]{0}', space=vmem, size = 0x400, scoped, tag = 'input window, operand 24, single buffered']
    #allocation36 [shape = 's32[1]{0}', space=sflag, size = 0x4, scoped, tag = 'scoped memory for tpu_custom_call.1']
    #allocation37 [shape = 'u8[32768]{0}', space=vmem, size = 0x8000, scoped, tag = 'input window, operand 27, single buffered']
    #allocation38 [shape = 'u8[32768]{0}', space=vmem, size = 0x8000, scoped, tag = 'input window, operand 29, single buffered']
    #allocation39 [shape = 's32[1]{0}', space=sflag, size = 0x4, scoped, tag = 'scoped memory for tpu_custom_call.1']
    #allocation40 [shape = 'u8[32768]{0}', space=vmem, size = 0x8000, scoped, tag = 'input window, operand 31, single buffered']
    #allocation41 [shape = 'u8[16384]{0}', space=vmem, size = 0x4000, scoped, tag = 'output window, operand 0']
    #allocation42 [shape = 'u8[8192]{0}', space=vmem, size = 0x2000, scoped, tag = 'output window, operand 1']
    #allocation43 [shape = 's32[2]{0}', space=sflag, size = 0x8, scoped, tag = 'scoped memory for tpu_custom_call.1']
    #allocation44 [shape = 'u8[4096]{0}', space=vmem, size = 0x1000, scoped, tag = 'output window, operand 2']
    #allocation45 [shape = 'u8[2048]{0}', space=vmem, size = 0x800, scoped, tag = 'output window, operand 3']
    #allocation46 [shape = 's32[2]{0}', space=sflag, size = 0x8, scoped, tag = 'scoped memory for tpu_custom_call.1']
    #allocation47 [shape = 'u8[1024]{0}', space=vmem, size = 0x400, scoped, tag = 'output window, operand 4']
    %81 = vsyncpa [#allocation3], 0
    %s82 = scalar_lea.sflag [#allocation3], 1
    %83 = vsyncpa %s82, 0
    %84 = vsyncpa [#allocation6], 0
    %85 = vsyncpa [#allocation9], 0
    %86 = vsyncpa [#allocation12], 0
    %87 = vsyncpa [#allocation15], 0
    %88 = vsyncpa [#allocation18], 0
    %89 = vsyncpa [#allocation21], 0
    %90 = vsyncpa [#allocation24], 0
    %91 = vsyncpa [#allocation27], 0
    %92 = vsyncpa [#allocation30], 0
    %93 = vsyncpa [#allocation33], 0
    %94 = vsyncpa [#allocation36], 0
    %95 = vsyncpa [#allocation39], 0
    %96 = vsyncpa [#allocation4], 0
    %s97 = scalar_lea.sflag [#allocation4], 1
    %98 = vsyncpa %s97, 0
    %99 = vsyncpa [#allocation43], 0
    %s100 = scalar_lea.sflag [#allocation43], 1
    %101 = vsyncpa %s100, 0
    %102 = vsyncpa [#allocation46], 0
    %s103 = scalar_lea.sflag [#allocation46], 1
    %104 = vsyncpa %s103, 0
    loop: start=0, step=1, limit=4
    $region2: #{tpu_custom_call.1} parent=1 // loop_pre_header
      _
    $region3: #{tpu_custom_call.1} parent=1 // loop_header
      %s106 = sphi 0, %s110
      %p107 = scmp.ge.s32.totalorder %s106, 4
      %s116 = sphi 0, %s118
      %s119 = sphi 0, %s116
      %s120 = sphi 0, %s119
      %s136 = sphi 0, %s120
      %s140 = sphi 0, %s140
      %s142 = sphi 0, %s140
      %s143 = sphi 0, %s142
      %s157 = sphi 0, %s143
      %s161 = sphi 0, %s161
      %s163 = sphi 0, %s161
      %s164 = sphi 0, %s163
      %s178 = sphi 0, %s164
      %s182 = sphi 0, %s182
      %s184 = sphi 0, %s182
      %s185 = sphi 0, %s184
      %s199 = sphi 0, %s185
      %s203 = sphi 0, %s203
      %s205 = sphi 0, %s203
      %s206 = sphi 0, %s205
      %s220 = sphi 0, %s206
      %s224 = sphi 0, %s224
      %s226 = sphi 0, %s224
      %s227 = sphi 0, %s226
      %s241 = sphi 0, %s227
      %s245 = sphi 0, %s245
      %s247 = sphi 0, %s245
      %s248 = sphi 0, %s247
      %s262 = sphi 0, %s248
      %s266 = sphi 0, %s266
      %s268 = sphi 0, %s266
      %s269 = sphi 0, %s268
      %s283 = sphi 0, %s269
      %s287 = sphi 0, %s287
      %s289 = sphi 0, %s287
      %s290 = sphi 0, %s289
      %s304 = sphi 0, %s290
      %s308 = sphi 0, %s308
      %s310 = sphi 0, %s308
      %s311 = sphi 0, %s310
      %s325 = sphi 0, %s311
      %s329 = sphi 0, %s329
      %s331 = sphi 0, %s329
      %s332 = sphi 0, %s331
      %s346 = sphi 0, %s332
      %s350 = sphi 0, %s350
      %s352 = sphi 0, %s350
      %s353 = sphi 0, %s352
      %s367 = sphi 0, %s353
      %s371 = sphi 0, %s371
      %s373 = sphi 0, %s371
      %s374 = sphi 0, %s373
      %s388 = sphi 0, %s374
      %s392 = sphi 0, %s392
      %s394 = sphi 0, %s392
      %s395 = sphi 0, %s394
      %s409 = sphi 0, %s395
      %s413 = sphi 0, %s413
      %s415 = sphi 0, %s413
      %s416 = sphi 0, %s415
      %s430 = sphi 0, %s416
      %s434 = sphi 0, %s434
      %s436 = sphi 0, %s434
      %s437 = sphi 0, %s436
      %s451 = sphi 0, %s437
      %s455 = sphi 0, %s455
      %s457 = sphi 0, %s455
      %s458 = sphi 0, %s457
      %s472 = sphi 0, %s458
      %s476 = sphi 0, %s476
      %s478 = sphi 0, %s476
      %s479 = sphi 0, %s478
      %s493 = sphi 0, %s479
      %s497 = sphi 0, %s497
      %s499 = sphi 0, %s497
      %s500 = sphi 0, %s499
      %s514 = sphi 0, %s500
      %s518 = sphi 0, %s518
      %s520 = sphi 0, %s518
      %s521 = sphi 0, %s520
      %s535 = sphi 0, %s521
      %s539 = sphi 0, %s539
      %s541 = sphi 0, %s539
      %s542 = sphi 0, %s541
      %s556 = sphi 0, %s542
      %s560 = sphi 0, %s560
      %s562 = sphi 0, %s560
      %s563 = sphi 0, %s562
      %s577 = sphi 0, %s563
      %s581 = sphi 0, %s581
      %s583 = sphi 0, %s581
      %s584 = sphi 0, %s583
      %s598 = sphi 0, %s584
      %s602 = sphi 0, %s602
      %s604 = sphi 0, %s602
      %s605 = sphi 0, %s604
      %s619 = sphi 0, %s605
      %s623 = sphi 0, %s623
      %s625 = sphi 0, %s623
      %s626 = sphi 0, %s625
      %s640 = sphi 0, %s626
      %s644 = sphi 0, %s644
      %s646 = sphi 0, %s644
      %s647 = sphi 0, %s646
      %s661 = sphi 0, %s647
      %s665 = sphi 0, %s665
      %s667 = sphi 0, %s665
      %s668 = sphi 0, %s667
      %s682 = sphi 0, %s668
      %s686 = sphi 0, %s686
      %s688 = sphi 0, %s686
      %s689 = sphi 0, %s688
      %s703 = sphi 0, %s689
      %s707 = sphi 0, %s707
      %s709 = sphi 0, %s707
      %s710 = sphi 0, %s709
      %s724 = sphi 0, %s710
      %s728 = sphi 0, %s728
      %s730 = sphi 0, %s728
      %s731 = sphi 0, %s730
      %s745 = sphi 0, %s731
      %s749 = sphi 0, %s749
      %s751 = sphi 0, %s749
      %s752 = sphi 0, %s751
      %s766 = sphi 0, %s752
      %s770 = sphi 0, %s770
      %s772 = sphi 0, %s770
      %s773 = sphi 0, %s772
      %s787 = sphi 0, %s773
      %s791 = sphi 0, %s791
      %s793 = sphi 0, %s791
      %s794 = sphi 0, %s793
      %s808 = sphi 0, %s794
      %s814 = sphi 0, %s816
      %s817 = sphi 0, %s814
      %s818 = sphi 0, %s817
      %s834 = sphi 0, %s818
      %s840 = sphi 0, %s842
      %s843 = sphi 0, %s840
      %s844 = sphi 0, %s843
      %s860 = sphi 0, %s844
      %s866 = sphi 0, %s868
      %s869 = sphi 0, %s866
      %s870 = sphi 0, %s869
      %s886 = sphi 0, %s870
      %s892 = sphi 0, %s894
      %s895 = sphi 0, %s892
      %s896 = sphi 0, %s895
      %s912 = sphi 0, %s896
      %s918 = sphi 0, %s920
      %s921 = sphi 0, %s918
      %s922 = sphi 0, %s921
      %s938 = sphi 0, %s922
    $region4: #{tpu_custom_call.1} parent=1 // loop_header_branch
      %109 = sbr.rel (%p107) target = $region8
    $region5: #{tpu_custom_call.1} parent=1 // loop_body
      %s111 = ssub.s32 %s106, 1
      %s112 = ssub.s32 %s106, 2
      %s113 = sadd.s32 %s106, 1
      %s114 = ssub.s32 %s106, %s113
      %p115 = scmp.eq.s32.totalorder %s114, 0
      %s117 = sadd.s32 %s116, 1
      %s118 = scalar_select %p115, %s116, %s117
      %p121 = pneg %p115
      %p122 = scmp.eq.s32.totalorder %s106, 1
      %p123 = por %p121, %p122
      %p124 = scmp.ne.s32.totalorder %s116, %s119
      %p125 = scmp.eq.s32.totalorder %s106, 0
      %p126 = por %p124, %p125
      %p127 = scmp.ne.s32.totalorder %s116, %s119
      %p128 = scmp.eq.s32.totalorder %s111, 1
      %p129 = por %p127, %p128
      %p130 = scmp.ne.s32.totalorder %s119, %s120
      %p131 = scmp.eq.s32.totalorder %s111, 0
      %p132 = por %p130, %p131
      %p133 = scmp.ne.s32.totalorder %s119, %s120
      %p134 = scmp.eq.s32.totalorder %s112, 1
      %p135 = por %p133, %p134
      %p137 = scmp.ne.s32.totalorder %s120, %s136
      %p138 = scmp.eq.s32.totalorder %s112, 0
      %p139 = por %p137, %p138
      %s141 = sadd.s32 %s140, 1
      %p144 = scmp.eq.s32.totalorder %s106, 1
      %p145 = scmp.ne.s32.totalorder %s140, %s142
      %p146 = scmp.eq.s32.totalorder %s106, 0
      %p147 = por %p145, %p146
      %p148 = scmp.ne.s32.totalorder %s140, %s142
      %p149 = scmp.eq.s32.totalorder %s111, 1
      %p150 = por %p148, %p149
      %p151 = scmp.ne.s32.totalorder %s142, %s143
      %p152 = scmp.eq.s32.totalorder %s111, 0
      %p153 = por %p151, %p152
      %p154 = scmp.ne.s32.totalorder %s142, %s143
      %p155 = scmp.eq.s32.totalorder %s112, 1
      %p156 = por %p154, %p155
      %p158 = scmp.ne.s32.totalorder %s143, %s157
      %p159 = scmp.eq.s32.totalorder %s112, 0
      %p160 = por %p158, %p159
      %s162 = sadd.s32 %s161, 1
      %p165 = scmp.eq.s32.totalorder %s106, 1
      %p166 = scmp.ne.s32.totalorder %s161, %s163
      %p167 = scmp.eq.s32.totalorder %s106, 0
      %p168 = por %p166, %p167
      %p169 = scmp.ne.s32.totalorder %s161, %s163
      %p170 = scmp.eq.s32.totalorder %s111, 1
      %p171 = por %p169, %p170
      %p172 = scmp.ne.s32.totalorder %s163, %s164
      %p173 = scmp.eq.s32.totalorder %s111, 0
      %p174 = por %p172, %p173
      %p175 = scmp.ne.s32.totalorder %s163, %s164
      %p176 = scmp.eq.s32.totalorder %s112, 1
      %p177 = por %p175, %p176
      %p179 = scmp.ne.s32.totalorder %s164, %s178
      %p180 = scmp.eq.s32.totalorder %s112, 0
      %p181 = por %p179, %p180
      %s183 = sadd.s32 %s182, 1
      %p186 = scmp.eq.s32.totalorder %s106, 1
      %p187 = scmp.ne.s32.totalorder %s182, %s184
      %p188 = scmp.eq.s32.totalorder %s106, 0
      %p189 = por %p187, %p188
      %p190 = scmp.ne.s32.totalorder %s182, %s184
      %p191 = scmp.eq.s32.totalorder %s111, 1
      %p192 = por %p190, %p191
      %p193 = scmp.ne.s32.totalorder %s184, %s185
      %p194 = scmp.eq.s32.totalorder %s111, 0
      %p195 = por %p193, %p194
      %p196 = scmp.ne.s32.totalorder %s184, %s185
      %p197 = scmp.eq.s32.totalorder %s112, 1
      %p198 = por %p196, %p197
      %p200 = scmp.ne.s32.totalorder %s185, %s199
      %p201 = scmp.eq.s32.totalorder %s112, 0
      %p202 = por %p200, %p201
      %s204 = sadd.s32 %s203, 1
      %p207 = scmp.eq.s32.totalorder %s106, 1
      %p208 = scmp.ne.s32.totalorder %s203, %s205
      %p209 = scmp.eq.s32.totalorder %s106, 0
      %p210 = por %p208, %p209
      %p211 = scmp.ne.s32.totalorder %s203, %s205
      %p212 = scmp.eq.s32.totalorder %s111, 1
      %p213 = por %p211, %p212
      %p214 = scmp.ne.s32.totalorder %s205, %s206
      %p215 = scmp.eq.s32.totalorder %s111, 0
      %p216 = por %p214, %p215
      %p217 = scmp.ne.s32.totalorder %s205, %s206
      %p218 = scmp.eq.s32.totalorder %s112, 1
      %p219 = por %p217, %p218
      %p221 = scmp.ne.s32.totalorder %s206, %s220
      %p222 = scmp.eq.s32.totalorder %s112, 0
      %p223 = por %p221, %p222
      %s225 = sadd.s32 %s224, 1
      %p228 = scmp.eq.s32.totalorder %s106, 1
      %p229 = scmp.ne.s32.totalorder %s224, %s226
      %p230 = scmp.eq.s32.totalorder %s106, 0
      %p231 = por %p229, %p230
      %p232 = scmp.ne.s32.totalorder %s224, %s226
      %p233 = scmp.eq.s32.totalorder %s111, 1
      %p234 = por %p232, %p233
      %p235 = scmp.ne.s32.totalorder %s226, %s227
      %p236 = scmp.eq.s32.totalorder %s111, 0
      %p237 = por %p235, %p236
      %p238 = scmp.ne.s32.totalorder %s226, %s227
      %p239 = scmp.eq.s32.totalorder %s112, 1
      %p240 = por %p238, %p239
      %p242 = scmp.ne.s32.totalorder %s227, %s241
      %p243 = scmp.eq.s32.totalorder %s112, 0
      %p244 = por %p242, %p243
      %s246 = sadd.s32 %s245, 1
      %p249 = scmp.eq.s32.totalorder %s106, 1
      %p250 = scmp.ne.s32.totalorder %s245, %s247
      %p251 = scmp.eq.s32.totalorder %s106, 0
      %p252 = por %p250, %p251
      %p253 = scmp.ne.s32.totalorder %s245, %s247
      %p254 = scmp.eq.s32.totalorder %s111, 1
      %p255 = por %p253, %p254
      %p256 = scmp.ne.s32.totalorder %s247, %s248
      %p257 = scmp.eq.s32.totalorder %s111, 0
      %p258 = por %p256, %p257
      %p259 = scmp.ne.s32.totalorder %s247, %s248
      %p260 = scmp.eq.s32.totalorder %s112, 1
      %p261 = por %p259, %p260
      %p263 = scmp.ne.s32.totalorder %s248, %s262
      %p264 = scmp.eq.s32.totalorder %s112, 0
      %p265 = por %p263, %p264
      %s267 = sadd.s32 %s266, 1
      %p270 = scmp.eq.s32.totalorder %s106, 1
      %p271 = scmp.ne.s32.totalorder %s266, %s268
      %p272 = scmp.eq.s32.totalorder %s106, 0
      %p273 = por %p271, %p272
      %p274 = scmp.ne.s32.totalorder %s266, %s268
      %p275 = scmp.eq.s32.totalorder %s111, 1
      %p276 = por %p274, %p275
      %p277 = scmp.ne.s32.totalorder %s268, %s269
      %p278 = scmp.eq.s32.totalorder %s111, 0
      %p279 = por %p277, %p278
      %p280 = scmp.ne.s32.totalorder %s268, %s269
      %p281 = scmp.eq.s32.totalorder %s112, 1
      %p282 = por %p280, %p281
      %p284 = scmp.ne.s32.totalorder %s269, %s283
      %p285 = scmp.eq.s32.totalorder %s112, 0
      %p286 = por %p284, %p285
      %s288 = sadd.s32 %s287, 1
      %p291 = scmp.eq.s32.totalorder %s106, 1
      %p292 = scmp.ne.s32.totalorder %s287, %s289
      %p293 = scmp.eq.s32.totalorder %s106, 0
      %p294 = por %p292, %p293
      %p295 = scmp.ne.s32.totalorder %s287, %s289
      %p296 = scmp.eq.s32.totalorder %s111, 1
      %p297 = por %p295, %p296
      %p298 = scmp.ne.s32.totalorder %s289, %s290
      %p299 = scmp.eq.s32.totalorder %s111, 0
      %p300 = por %p298, %p299
      %p301 = scmp.ne.s32.totalorder %s289, %s290
      %p302 = scmp.eq.s32.totalorder %s112, 1
      %p303 = por %p301, %p302
      %p305 = scmp.ne.s32.totalorder %s290, %s304
      %p306 = scmp.eq.s32.totalorder %s112, 0
      %p307 = por %p305, %p306
      %s309 = sadd.s32 %s308, 1
      %p312 = scmp.eq.s32.totalorder %s106, 1
      %p313 = scmp.ne.s32.totalorder %s308, %s310
      %p314 = scmp.eq.s32.totalorder %s106, 0
      %p315 = por %p313, %p314
      %p316 = scmp.ne.s32.totalorder %s308, %s310
      %p317 = scmp.eq.s32.totalorder %s111, 1
      %p318 = por %p316, %p317
      %p319 = scmp.ne.s32.totalorder %s310, %s311
      %p320 = scmp.eq.s32.totalorder %s111, 0
      %p321 = por %p319, %p320
      %p322 = scmp.ne.s32.totalorder %s310, %s311
      %p323 = scmp.eq.s32.totalorder %s112, 1
      %p324 = por %p322, %p323
      %p326 = scmp.ne.s32.totalorder %s311, %s325
      %p327 = scmp.eq.s32.totalorder %s112, 0
      %p328 = por %p326, %p327
      %s330 = sadd.s32 %s329, 1
      %p333 = scmp.eq.s32.totalorder %s106, 1
      %p334 = scmp.ne.s32.totalorder %s329, %s331
      %p335 = scmp.eq.s32.totalorder %s106, 0
      %p336 = por %p334, %p335
      %p337 = scmp.ne.s32.totalorder %s329, %s331
      %p338 = scmp.eq.s32.totalorder %s111, 1
      %p339 = por %p337, %p338
      %p340 = scmp.ne.s32.totalorder %s331, %s332
      %p341 = scmp.eq.s32.totalorder %s111, 0
      %p342 = por %p340, %p341
      %p343 = scmp.ne.s32.totalorder %s331, %s332
      %p344 = scmp.eq.s32.totalorder %s112, 1
      %p345 = por %p343, %p344
      %p347 = scmp.ne.s32.totalorder %s332, %s346
      %p348 = scmp.eq.s32.totalorder %s112, 0
      %p349 = por %p347, %p348
      %s351 = sadd.s32 %s350, 1
      %p354 = scmp.eq.s32.totalorder %s106, 1
      %p355 = scmp.ne.s32.totalorder %s350, %s352
      %p356 = scmp.eq.s32.totalorder %s106, 0
      %p357 = por %p355, %p356
      %p358 = scmp.ne.s32.totalorder %s350, %s352
      %p359 = scmp.eq.s32.totalorder %s111, 1
      %p360 = por %p358, %p359
      %p361 = scmp.ne.s32.totalorder %s352, %s353
      %p362 = scmp.eq.s32.totalorder %s111, 0
      %p363 = por %p361, %p362
      %p364 = scmp.ne.s32.totalorder %s352, %s353
      %p365 = scmp.eq.s32.totalorder %s112, 1
      %p366 = por %p364, %p365
      %p368 = scmp.ne.s32.totalorder %s353, %s367
      %p369 = scmp.eq.s32.totalorder %s112, 0
      %p370 = por %p368, %p369
      %s372 = sadd.s32 %s371, 1
      %p375 = scmp.eq.s32.totalorder %s106, 1
      %p376 = scmp.ne.s32.totalorder %s371, %s373
      %p377 = scmp.eq.s32.totalorder %s106, 0
      %p378 = por %p376, %p377
      %p379 = scmp.ne.s32.totalorder %s371, %s373
      %p380 = scmp.eq.s32.totalorder %s111, 1
      %p381 = por %p379, %p380
      %p382 = scmp.ne.s32.totalorder %s373, %s374
      %p383 = scmp.eq.s32.totalorder %s111, 0
      %p384 = por %p382, %p383
      %p385 = scmp.ne.s32.totalorder %s373, %s374
      %p386 = scmp.eq.s32.totalorder %s112, 1
      %p387 = por %p385, %p386
      %p389 = scmp.ne.s32.totalorder %s374, %s388
      %p390 = scmp.eq.s32.totalorder %s112, 0
      %p391 = por %p389, %p390
      %s393 = sadd.s32 %s392, 1
      %p396 = scmp.eq.s32.totalorder %s106, 1
      %p397 = scmp.ne.s32.totalorder %s392, %s394
      %p398 = scmp.eq.s32.totalorder %s106, 0
      %p399 = por %p397, %p398
      %p400 = scmp.ne.s32.totalorder %s392, %s394
      %p401 = scmp.eq.s32.totalorder %s111, 1
      %p402 = por %p400, %p401
      %p403 = scmp.ne.s32.totalorder %s394, %s395
      %p404 = scmp.eq.s32.totalorder %s111, 0
      %p405 = por %p403, %p404
      %p406 = scmp.ne.s32.totalorder %s394, %s395
      %p407 = scmp.eq.s32.totalorder %s112, 1
      %p408 = por %p406, %p407
      %p410 = scmp.ne.s32.totalorder %s395, %s409
      %p411 = scmp.eq.s32.totalorder %s112, 0
      %p412 = por %p410, %p411
      %s414 = sadd.s32 %s413, 1
      %p417 = scmp.eq.s32.totalorder %s106, 1
      %p418 = scmp.ne.s32.totalorder %s413, %s415
      %p419 = scmp.eq.s32.totalorder %s106, 0
      %p420 = por %p418, %p419
      %p421 = scmp.ne.s32.totalorder %s413, %s415
      %p422 = scmp.eq.s32.totalorder %s111, 1
      %p423 = por %p421, %p422
      %p424 = scmp.ne.s32.totalorder %s415, %s416
      %p425 = scmp.eq.s32.totalorder %s111, 0
      %p426 = por %p424, %p425
      %p427 = scmp.ne.s32.totalorder %s415, %s416
      %p428 = scmp.eq.s32.totalorder %s112, 1
      %p429 = por %p427, %p428
      %p431 = scmp.ne.s32.totalorder %s416, %s430
      %p432 = scmp.eq.s32.totalorder %s112, 0
      %p433 = por %p431, %p432
      %s435 = sadd.s32 %s434, 1
      %p438 = scmp.eq.s32.totalorder %s106, 1
      %p439 = scmp.ne.s32.totalorder %s434, %s436
      %p440 = scmp.eq.s32.totalorder %s106, 0
      %p441 = por %p439, %p440
      %p442 = scmp.ne.s32.totalorder %s434, %s436
      %p443 = scmp.eq.s32.totalorder %s111, 1
      %p444 = por %p442, %p443
      %p445 = scmp.ne.s32.totalorder %s436, %s437
      %p446 = scmp.eq.s32.totalorder %s111, 0
      %p447 = por %p445, %p446
      %p448 = scmp.ne.s32.totalorder %s436, %s437
      %p449 = scmp.eq.s32.totalorder %s112, 1
      %p450 = por %p448, %p449
      %p452 = scmp.ne.s32.totalorder %s437, %s451
      %p453 = scmp.eq.s32.totalorder %s112, 0
      %p454 = por %p452, %p453
      %s456 = sadd.s32 %s455, 1
      %p459 = scmp.eq.s32.totalorder %s106, 1
      %p460 = scmp.ne.s32.totalorder %s455, %s457
      %p461 = scmp.eq.s32.totalorder %s106, 0
      %p462 = por %p460, %p461
      %p463 = scmp.ne.s32.totalorder %s455, %s457
      %p464 = scmp.eq.s32.totalorder %s111, 1
      %p465 = por %p463, %p464
      %p466 = scmp.ne.s32.totalorder %s457, %s458
      %p467 = scmp.eq.s32.totalorder %s111, 0
      %p468 = por %p466, %p467
      %p469 = scmp.ne.s32.totalorder %s457, %s458
      %p470 = scmp.eq.s32.totalorder %s112, 1
      %p471 = por %p469, %p470
      %p473 = scmp.ne.s32.totalorder %s458, %s472
      %p474 = scmp.eq.s32.totalorder %s112, 0
      %p475 = por %p473, %p474
      %s477 = sadd.s32 %s476, 1
      %p480 = scmp.eq.s32.totalorder %s106, 1
      %p481 = scmp.ne.s32.totalorder %s476, %s478
      %p482 = scmp.eq.s32.totalorder %s106, 0
      %p483 = por %p481, %p482
      %p484 = scmp.ne.s32.totalorder %s476, %s478
      %p485 = scmp.eq.s32.totalorder %s111, 1
      %p486 = por %p484, %p485
      %p487 = scmp.ne.s32.totalorder %s478, %s479
      %p488 = scmp.eq.s32.totalorder %s111, 0
      %p489 = por %p487, %p488
      %p490 = scmp.ne.s32.totalorder %s478, %s479
      %p491 = scmp.eq.s32.totalorder %s112, 1
      %p492 = por %p490, %p491
      %p494 = scmp.ne.s32.totalorder %s479, %s493
      %p495 = scmp.eq.s32.totalorder %s112, 0
      %p496 = por %p494, %p495
      %s498 = sadd.s32 %s497, 1
      %p501 = scmp.eq.s32.totalorder %s106, 1
      %p502 = scmp.ne.s32.totalorder %s497, %s499
      %p503 = scmp.eq.s32.totalorder %s106, 0
      %p504 = por %p502, %p503
      %p505 = scmp.ne.s32.totalorder %s497, %s499
      %p506 = scmp.eq.s32.totalorder %s111, 1
      %p507 = por %p505, %p506
      %p508 = scmp.ne.s32.totalorder %s499, %s500
      %p509 = scmp.eq.s32.totalorder %s111, 0
      %p510 = por %p508, %p509
      %p511 = scmp.ne.s32.totalorder %s499, %s500
      %p512 = scmp.eq.s32.totalorder %s112, 1
      %p513 = por %p511, %p512
      %p515 = scmp.ne.s32.totalorder %s500, %s514
      %p516 = scmp.eq.s32.totalorder %s112, 0
      %p517 = por %p515, %p516
      %s519 = sadd.s32 %s518, 1
      %p522 = scmp.eq.s32.totalorder %s106, 1
      %p523 = scmp.ne.s32.totalorder %s518, %s520
      %p524 = scmp.eq.s32.totalorder %s106, 0
      %p525 = por %p523, %p524
      %p526 = scmp.ne.s32.totalorder %s518, %s520
      %p527 = scmp.eq.s32.totalorder %s111, 1
      %p528 = por %p526, %p527
      %p529 = scmp.ne.s32.totalorder %s520, %s521
      %p530 = scmp.eq.s32.totalorder %s111, 0
      %p531 = por %p529, %p530
      %p532 = scmp.ne.s32.totalorder %s520, %s521
      %p533 = scmp.eq.s32.totalorder %s112, 1
      %p534 = por %p532, %p533
      %p536 = scmp.ne.s32.totalorder %s521, %s535
      %p537 = scmp.eq.s32.totalorder %s112, 0
      %p538 = por %p536, %p537
      %s540 = sadd.s32 %s539, 1
      %p543 = scmp.eq.s32.totalorder %s106, 1
      %p544 = scmp.ne.s32.totalorder %s539, %s541
      %p545 = scmp.eq.s32.totalorder %s106, 0
      %p546 = por %p544, %p545
      %p547 = scmp.ne.s32.totalorder %s539, %s541
      %p548 = scmp.eq.s32.totalorder %s111, 1
      %p549 = por %p547, %p548
      %p550 = scmp.ne.s32.totalorder %s541, %s542
      %p551 = scmp.eq.s32.totalorder %s111, 0
      %p552 = por %p550, %p551
      %p553 = scmp.ne.s32.totalorder %s541, %s542
      %p554 = scmp.eq.s32.totalorder %s112, 1
      %p555 = por %p553, %p554
      %p557 = scmp.ne.s32.totalorder %s542, %s556
      %p558 = scmp.eq.s32.totalorder %s112, 0
      %p559 = por %p557, %p558
      %s561 = sadd.s32 %s560, 1
      %p564 = scmp.eq.s32.totalorder %s106, 1
      %p565 = scmp.ne.s32.totalorder %s560, %s562
      %p566 = scmp.eq.s32.totalorder %s106, 0
      %p567 = por %p565, %p566
      %p568 = scmp.ne.s32.totalorder %s560, %s562
      %p569 = scmp.eq.s32.totalorder %s111, 1
      %p570 = por %p568, %p569
      %p571 = scmp.ne.s32.totalorder %s562, %s563
      %p572 = scmp.eq.s32.totalorder %s111, 0
      %p573 = por %p571, %p572
      %p574 = scmp.ne.s32.totalorder %s562, %s563
      %p575 = scmp.eq.s32.totalorder %s112, 1
      %p576 = por %p574, %p575
      %p578 = scmp.ne.s32.totalorder %s563, %s577
      %p579 = scmp.eq.s32.totalorder %s112, 0
      %p580 = por %p578, %p579
      %s582 = sadd.s32 %s581, 1
      %p585 = scmp.eq.s32.totalorder %s106, 1
      %p586 = scmp.ne.s32.totalorder %s581, %s583
      %p587 = scmp.eq.s32.totalorder %s106, 0
      %p588 = por %p586, %p587
      %p589 = scmp.ne.s32.totalorder %s581, %s583
      %p590 = scmp.eq.s32.totalorder %s111, 1
      %p591 = por %p589, %p590
      %p592 = scmp.ne.s32.totalorder %s583, %s584
      %p593 = scmp.eq.s32.totalorder %s111, 0
      %p594 = por %p592, %p593
      %p595 = scmp.ne.s32.totalorder %s583, %s584
      %p596 = scmp.eq.s32.totalorder %s112, 1
      %p597 = por %p595, %p596
      %p599 = scmp.ne.s32.totalorder %s584, %s598
      %p600 = scmp.eq.s32.totalorder %s112, 0
      %p601 = por %p599, %p600
      %s603 = sadd.s32 %s602, 1
      %p606 = scmp.eq.s32.totalorder %s106, 1
      %p607 = scmp.ne.s32.totalorder %s602, %s604
      %p608 = scmp.eq.s32.totalorder %s106, 0
      %p609 = por %p607, %p608
      %p610 = scmp.ne.s32.totalorder %s602, %s604
      %p611 = scmp.eq.s32.totalorder %s111, 1
      %p612 = por %p610, %p611
      %p613 = scmp.ne.s32.totalorder %s604, %s605
      %p614 = scmp.eq.s32.totalorder %s111, 0
      %p615 = por %p613, %p614
      %p616 = scmp.ne.s32.totalorder %s604, %s605
      %p617 = scmp.eq.s32.totalorder %s112, 1
      %p618 = por %p616, %p617
      %p620 = scmp.ne.s32.totalorder %s605, %s619
      %p621 = scmp.eq.s32.totalorder %s112, 0
      %p622 = por %p620, %p621
      %s624 = sadd.s32 %s623, 1
      %p627 = scmp.eq.s32.totalorder %s106, 1
      %p628 = scmp.ne.s32.totalorder %s623, %s625
      %p629 = scmp.eq.s32.totalorder %s106, 0
      %p630 = por %p628, %p629
      %p631 = scmp.ne.s32.totalorder %s623, %s625
      %p632 = scmp.eq.s32.totalorder %s111, 1
      %p633 = por %p631, %p632
      %p634 = scmp.ne.s32.totalorder %s625, %s626
      %p635 = scmp.eq.s32.totalorder %s111, 0
      %p636 = por %p634, %p635
      %p637 = scmp.ne.s32.totalorder %s625, %s626
      %p638 = scmp.eq.s32.totalorder %s112, 1
      %p639 = por %p637, %p638
      %p641 = scmp.ne.s32.totalorder %s626, %s640
      %p642 = scmp.eq.s32.totalorder %s112, 0
      %p643 = por %p641, %p642
      %s645 = sadd.s32 %s644, 1
      %p648 = scmp.eq.s32.totalorder %s106, 1
      %p649 = scmp.ne.s32.totalorder %s644, %s646
      %p650 = scmp.eq.s32.totalorder %s106, 0
      %p651 = por %p649, %p650
      %p652 = scmp.ne.s32.totalorder %s644, %s646
      %p653 = scmp.eq.s32.totalorder %s111, 1
      %p654 = por %p652, %p653
      %p655 = scmp.ne.s32.totalorder %s646, %s647
      %p656 = scmp.eq.s32.totalorder %s111, 0
      %p657 = por %p655, %p656
      %p658 = scmp.ne.s32.totalorder %s646, %s647
      %p659 = scmp.eq.s32.totalorder %s112, 1
      %p660 = por %p658, %p659
      %p662 = scmp.ne.s32.totalorder %s647, %s661
      %p663 = scmp.eq.s32.totalorder %s112, 0
      %p664 = por %p662, %p663
      %s666 = sadd.s32 %s665, 1
      %p669 = scmp.eq.s32.totalorder %s106, 1
      %p670 = scmp.ne.s32.totalorder %s665, %s667
      %p671 = scmp.eq.s32.totalorder %s106, 0
      %p672 = por %p670, %p671
      %p673 = scmp.ne.s32.totalorder %s665, %s667
      %p674 = scmp.eq.s32.totalorder %s111, 1
      %p675 = por %p673, %p674
      %p676 = scmp.ne.s32.totalorder %s667, %s668
      %p677 = scmp.eq.s32.totalorder %s111, 0
      %p678 = por %p676, %p677
      %p679 = scmp.ne.s32.totalorder %s667, %s668
      %p680 = scmp.eq.s32.totalorder %s112, 1
      %p681 = por %p679, %p680
      %p683 = scmp.ne.s32.totalorder %s668, %s682
      %p684 = scmp.eq.s32.totalorder %s112, 0
      %p685 = por %p683, %p684
      %s687 = sadd.s32 %s686, 1
      %p690 = scmp.eq.s32.totalorder %s106, 1
      %p691 = scmp.ne.s32.totalorder %s686, %s688
      %p692 = scmp.eq.s32.totalorder %s106, 0
      %p693 = por %p691, %p692
      %p694 = scmp.ne.s32.totalorder %s686, %s688
      %p695 = scmp.eq.s32.totalorder %s111, 1
      %p696 = por %p694, %p695
      %p697 = scmp.ne.s32.totalorder %s688, %s689
      %p698 = scmp.eq.s32.totalorder %s111, 0
      %p699 = por %p697, %p698
      %p700 = scmp.ne.s32.totalorder %s688, %s689
      %p701 = scmp.eq.s32.totalorder %s112, 1
      %p702 = por %p700, %p701
      %p704 = scmp.ne.s32.totalorder %s689, %s703
      %p705 = scmp.eq.s32.totalorder %s112, 0
      %p706 = por %p704, %p705
      %s708 = sadd.s32 %s707, 1
      %p711 = scmp.eq.s32.totalorder %s106, 1
      %p712 = scmp.ne.s32.totalorder %s707, %s709
      %p713 = scmp.eq.s32.totalorder %s106, 0
      %p714 = por %p712, %p713
      %p715 = scmp.ne.s32.totalorder %s707, %s709
      %p716 = scmp.eq.s32.totalorder %s111, 1
      %p717 = por %p715, %p716
      %p718 = scmp.ne.s32.totalorder %s709, %s710
      %p719 = scmp.eq.s32.totalorder %s111, 0
      %p720 = por %p718, %p719
      %p721 = scmp.ne.s32.totalorder %s709, %s710
      %p722 = scmp.eq.s32.totalorder %s112, 1
      %p723 = por %p721, %p722
      %p725 = scmp.ne.s32.totalorder %s710, %s724
      %p726 = scmp.eq.s32.totalorder %s112, 0
      %p727 = por %p725, %p726
      %s729 = sadd.s32 %s728, 1
      %p732 = scmp.eq.s32.totalorder %s106, 1
      %p733 = scmp.ne.s32.totalorder %s728, %s730
      %p734 = scmp.eq.s32.totalorder %s106, 0
      %p735 = por %p733, %p734
      %p736 = scmp.ne.s32.totalorder %s728, %s730
      %p737 = scmp.eq.s32.totalorder %s111, 1
      %p738 = por %p736, %p737
      %p739 = scmp.ne.s32.totalorder %s730, %s731
      %p740 = scmp.eq.s32.totalorder %s111, 0
      %p741 = por %p739, %p740
      %p742 = scmp.ne.s32.totalorder %s730, %s731
      %p743 = scmp.eq.s32.totalorder %s112, 1
      %p744 = por %p742, %p743
      %p746 = scmp.ne.s32.totalorder %s731, %s745
      %p747 = scmp.eq.s32.totalorder %s112, 0
      %p748 = por %p746, %p747
      %s750 = sadd.s32 %s749, 1
      %p753 = scmp.eq.s32.totalorder %s106, 1
      %p754 = scmp.ne.s32.totalorder %s749, %s751
      %p755 = scmp.eq.s32.totalorder %s106, 0
      %p756 = por %p754, %p755
      %p757 = scmp.ne.s32.totalorder %s749, %s751
      %p758 = scmp.eq.s32.totalorder %s111, 1
      %p759 = por %p757, %p758
      %p760 = scmp.ne.s32.totalorder %s751, %s752
      %p761 = scmp.eq.s32.totalorder %s111, 0
      %p762 = por %p760, %p761
      %p763 = scmp.ne.s32.totalorder %s751, %s752
      %p764 = scmp.eq.s32.totalorder %s112, 1
      %p765 = por %p763, %p764
      %p767 = scmp.ne.s32.totalorder %s752, %s766
      %p768 = scmp.eq.s32.totalorder %s112, 0
      %p769 = por %p767, %p768
      %s771 = sadd.s32 %s770, 1
      %p774 = scmp.eq.s32.totalorder %s106, 1
      %p775 = scmp.ne.s32.totalorder %s770, %s772
      %p776 = scmp.eq.s32.totalorder %s106, 0
      %p777 = por %p775, %p776
      %p778 = scmp.ne.s32.totalorder %s770, %s772
      %p779 = scmp.eq.s32.totalorder %s111, 1
      %p780 = por %p778, %p779
      %p781 = scmp.ne.s32.totalorder %s772, %s773
      %p782 = scmp.eq.s32.totalorder %s111, 0
      %p783 = por %p781, %p782
      %p784 = scmp.ne.s32.totalorder %s772, %s773
      %p785 = scmp.eq.s32.totalorder %s112, 1
      %p786 = por %p784, %p785
      %p788 = scmp.ne.s32.totalorder %s773, %s787
      %p789 = scmp.eq.s32.totalorder %s112, 0
      %p790 = por %p788, %p789
      %s792 = sadd.s32 %s791, 1
      %p795 = scmp.eq.s32.totalorder %s106, 1
      %p796 = scmp.ne.s32.totalorder %s791, %s793
      %p797 = scmp.eq.s32.totalorder %s106, 0
      %p798 = por %p796, %p797
      %p799 = scmp.ne.s32.totalorder %s791, %s793
      %p800 = scmp.eq.s32.totalorder %s111, 1
      %p801 = por %p799, %p800
      %p802 = scmp.ne.s32.totalorder %s793, %s794
      %p803 = scmp.eq.s32.totalorder %s111, 0
      %p804 = por %p802, %p803
      %p805 = scmp.ne.s32.totalorder %s793, %s794
      %p806 = scmp.eq.s32.totalorder %s112, 1
      %p807 = por %p805, %p806
      %p809 = scmp.ne.s32.totalorder %s794, %s808
      %p810 = scmp.eq.s32.totalorder %s112, 0
      %p811 = por %p809, %p810
      %s812 = ssub.s32 %s106, %s113
      %p813 = scmp.eq.s32.totalorder %s812, 0
      %s815 = sadd.s32 %s814, 1
      %s816 = scalar_select %p813, %s814, %s815
      %p819 = pneg %p813
      %p820 = scmp.eq.s32.totalorder %s106, 1
      %p821 = por %p819, %p820
      %p822 = scmp.ne.s32.totalorder %s814, %s817
      %p823 = scmp.eq.s32.totalorder %s106, 0
      %p824 = por %p822, %p823
      %p825 = scmp.ne.s32.totalorder %s814, %s817
      %p826 = scmp.eq.s32.totalorder %s111, 1
      %p827 = por %p825, %p826
      %p828 = scmp.ne.s32.totalorder %s817, %s818
      %p829 = scmp.eq.s32.totalorder %s111, 0
      %p830 = por %p828, %p829
      %p831 = scmp.ne.s32.totalorder %s817, %s818
      %p832 = scmp.eq.s32.totalorder %s112, 1
      %p833 = por %p831, %p832
      %p835 = scmp.ne.s32.totalorder %s818, %s834
      %p836 = scmp.eq.s32.totalorder %s112, 0
      %p837 = por %p835, %p836
      %s838 = ssub.s32 %s106, %s113
      %p839 = scmp.eq.s32.totalorder %s838, 0
      %s841 = sadd.s32 %s840, 1
      %s842 = scalar_select %p839, %s840, %s841
      %p845 = pneg %p839
      %p846 = scmp.eq.s32.totalorder %s106, 1
      %p847 = por %p845, %p846
      %p848 = scmp.ne.s32.totalorder %s840, %s843
      %p849 = scmp.eq.s32.totalorder %s106, 0
      %p850 = por %p848, %p849
      %p851 = scmp.ne.s32.totalorder %s840, %s843
      %p852 = scmp.eq.s32.totalorder %s111, 1
      %p853 = por %p851, %p852
      %p854 = scmp.ne.s32.totalorder %s843, %s844
      %p855 = scmp.eq.s32.totalorder %s111, 0
      %p856 = por %p854, %p855
      %p857 = scmp.ne.s32.totalorder %s843, %s844
      %p858 = scmp.eq.s32.totalorder %s112, 1
      %p859 = por %p857, %p858
      %p861 = scmp.ne.s32.totalorder %s844, %s860
      %p862 = scmp.eq.s32.totalorder %s112, 0
      %p863 = por %p861, %p862
      %s864 = ssub.s32 %s106, %s113
      %p865 = scmp.eq.s32.totalorder %s864, 0
      %s867 = sadd.s32 %s866, 1
      %s868 = scalar_select %p865, %s866, %s867
      %p871 = pneg %p865
      %p872 = scmp.eq.s32.totalorder %s106, 1
      %p873 = por %p871, %p872
      %p874 = scmp.ne.s32.totalorder %s866, %s869
      %p875 = scmp.eq.s32.totalorder %s106, 0
      %p876 = por %p874, %p875
      %p877 = scmp.ne.s32.totalorder %s866, %s869
      %p878 = scmp.eq.s32.totalorder %s111, 1
      %p879 = por %p877, %p878
      %p880 = scmp.ne.s32.totalorder %s869, %s870
      %p881 = scmp.eq.s32.totalorder %s111, 0
      %p882 = por %p880, %p881
      %p883 = scmp.ne.s32.totalorder %s869, %s870
      %p884 = scmp.eq.s32.totalorder %s112, 1
      %p885 = por %p883, %p884
      %p887 = scmp.ne.s32.totalorder %s870, %s886
      %p888 = scmp.eq.s32.totalorder %s112, 0
      %p889 = por %p887, %p888
      %s890 = ssub.s32 %s106, %s113
      %p891 = scmp.eq.s32.totalorder %s890, 0
      %s893 = sadd.s32 %s892, 1
      %s894 = scalar_select %p891, %s892, %s893
      %p897 = pneg %p891
      %p898 = scmp.eq.s32.totalorder %s106, 1
      %p899 = por %p897, %p898
      %p900 = scmp.ne.s32.totalorder %s892, %s895
      %p901 = scmp.eq.s32.totalorder %s106, 0
      %p902 = por %p900, %p901
      %p903 = scmp.ne.s32.totalorder %s892, %s895
      %p904 = scmp.eq.s32.totalorder %s111, 1
      %p905 = por %p903, %p904
      %p906 = scmp.ne.s32.totalorder %s895, %s896
      %p907 = scmp.eq.s32.totalorder %s111, 0
      %p908 = por %p906, %p907
      %p909 = scmp.ne.s32.totalorder %s895, %s896
      %p910 = scmp.eq.s32.totalorder %s112, 1
      %p911 = por %p909, %p910
      %p913 = scmp.ne.s32.totalorder %s896, %s912
      %p914 = scmp.eq.s32.totalorder %s112, 0
      %p915 = por %p913, %p914
      %s916 = ssub.s32 %s106, %s113
      %p917 = scmp.eq.s32.totalorder %s916, 0
      %s919 = sadd.s32 %s918, 1
      %s920 = scalar_select %p917, %s918, %s919
      %p923 = pneg %p917
      %p924 = scmp.eq.s32.totalorder %s106, 1
      %p925 = por %p923, %p924
      %p926 = scmp.ne.s32.totalorder %s918, %s921
      %p927 = scmp.eq.s32.totalorder %s106, 0
      %p928 = por %p926, %p927
      %p929 = scmp.ne.s32.totalorder %s918, %s921
      %p930 = scmp.eq.s32.totalorder %s111, 1
      %p931 = por %p929, %p930
      %p932 = scmp.ne.s32.totalorder %s921, %s922
      %p933 = scmp.eq.s32.totalorder %s111, 0
      %p934 = por %p932, %p933
      %p935 = scmp.ne.s32.totalorder %s921, %s922
      %p936 = scmp.eq.s32.totalorder %s112, 1
      %p937 = por %p935, %p936
      %p939 = scmp.ne.s32.totalorder %s922, %s938
      %p940 = scmp.eq.s32.totalorder %s112, 0
      %p941 = por %p939, %p940
      %p942 = scmp.le.s32.totalorder 1, %s106
      %p943 = scmp.lt.s32.totalorder %s106, 3
      %p944 = pnand %p942, %p943
      %p945 = pneg %p944
      // Predicated region
      $region9: #{tpu_custom_call.1} parent=5 // pred_check
        _
      $region10: #{tpu_custom_call.1} parent=5 // pred_check_branch
        %947 = sbr.rel (%p944) target = $region12
      $region11: #{tpu_custom_call.1} parent=5 // pred_region
        %s948 = ssub.s32 %s106, 1
        // Predicated region
        $region13: #{tpu_custom_call.1} parent=11 // pred_check
          %p949 = pneg %p153
        $region14: #{tpu_custom_call.1} parent=11 // pred_check_branch
          %951 = sbr.rel (%p949) target = $region16
        $region15: #{tpu_custom_call.1} parent=11 // pred_region
          %s953 = ssub.s32 1536, 1536
          %954 = vsyncadd [#allocation6], %s953
          %s955 = sshll.u32 [#allocation5], 4
          %s956 = int_to_ptr.vmem [resolvable:$true] %s955
          %961 = dma.hbm_to_vmem [thread:$0]  %s3, 1536, %s956, [#allocation6], 64, 64, 4
        $region16: #{tpu_custom_call.1} parent=11 // pred_fallthru
          _
        // Predicated region
        $region17: #{tpu_custom_call.1} parent=11 // pred_check
          %p962 = pneg %p174
        $region18: #{tpu_custom_call.1} parent=11 // pred_check_branch
          %964 = sbr.rel (%p962) target = $region20
        $region19: #{tpu_custom_call.1} parent=11 // pred_region
          _
        $region20: #{tpu_custom_call.1} parent=11 // pred_fallthru
          _
        // Predicated region
        $region21: #{tpu_custom_call.1} parent=11 // pred_check
          %p965 = pneg %p195
        $region22: #{tpu_custom_call.1} parent=11 // pred_check_branch
          %967 = sbr.rel (%p965) target = $region24
        $region23: #{tpu_custom_call.1} parent=11 // pred_region
          %s969 = ssub.s32 3072, 3072
          %970 = vsyncadd [#allocation6], %s969
          %s971 = sshll.u32 [#allocation7], 4
          %s972 = int_to_ptr.vmem [resolvable:$true] %s971
          %977 = dma.hbm_to_vmem [thread:$0]  %s7, 3072, %s972, [#allocation6], 64, 64, 4
        $region24: #{tpu_custom_call.1} parent=11 // pred_fallthru
          _
        // Predicated region
        $region25: #{tpu_custom_call.1} parent=11 // pred_check
          %p978 = pneg %p216
        $region26: #{tpu_custom_call.1} parent=11 // pred_check_branch
          %980 = sbr.rel (%p978) target = $region28
        $region27: #{tpu_custom_call.1} parent=11 // pred_region
          %s982 = ssub.s32 32, 32
          %983 = vsyncadd [#allocation9], %s982
          %s984 = sshll.u32 [#allocation8], 4
          %s985 = int_to_ptr.vmem [resolvable:$true] %s984
          %990 = dma.hbm_to_vmem [thread:$0]  %s9, 32, %s985, [#allocation9], 16, 16, 1
        $region28: #{tpu_custom_call.1} parent=11 // pred_fallthru
          _
        // Predicated region
        $region29: #{tpu_custom_call.1} parent=11 // pred_check
          %p991 = pneg %p237
        $region30: #{tpu_custom_call.1} parent=11 // pred_check_branch
          %993 = sbr.rel (%p991) target = $region32
        $region31: #{tpu_custom_call.1} parent=11 // pred_region
          %s995 = ssub.s32 1536, 1536
          %996 = vsyncadd [#allocation9], %s995
          %s997 = sshll.u32 [#allocation10], 4
          %s998 = int_to_ptr.vmem [resolvable:$true] %s997
          %1003 = dma.hbm_to_vmem [thread:$0]  %s11, 1536, %s998, [#allocation9], 64, 64, 4
        $region32: #{tpu_custom_call.1} parent=11 // pred_fallthru
          _
        // Predicated region
        $region33: #{tpu_custom_call.1} parent=11 // pred_check
          %p1004 = pneg %p258
        $region34: #{tpu_custom_call.1} parent=11 // pred_check_branch
          %1006 = sbr.rel (%p1004) target = $region36
        $region35: #{tpu_custom_call.1} parent=11 // pred_region
          %s1008 = ssub.s32 32, 32
          %1009 = vsyncadd [#allocation12], %s1008
          %s1010 = sshll.u32 [#allocation11], 4
          %s1011 = int_to_ptr.vmem [resolvable:$true] %s1010
          %1016 = dma.hbm_to_vmem [thread:$0]  %s13, 32, %s1011, [#allocation12], 16, 16, 1
        $region36: #{tpu_custom_call.1} parent=11 // pred_fallthru
          _
        // Predicated region
        $region37: #{tpu_custom_call.1} parent=11 // pred_check
          %p1017 = pneg %p279
        $region38: #{tpu_custom_call.1} parent=11 // pred_check_branch
          %1019 = sbr.rel (%p1017) target = $region40
        $region39: #{tpu_custom_call.1} parent=11 // pred_region
          %s1021 = ssub.s32 3072, 3072
          %1022 = vsyncadd [#allocation12], %s1021
          %s1023 = sshll.u32 [#allocation13], 4
          %s1024 = int_to_ptr.vmem [resolvable:$true] %s1023
          %1029 = dma.hbm_to_vmem [thread:$0]  %s15, 3072, %s1024, [#allocation12], 64, 64, 4
        $region40: #{tpu_custom_call.1} parent=11 // pred_fallthru
          _
        // Predicated region
        $region41: #{tpu_custom_call.1} parent=11 // pred_check
          %p1030 = pneg %p300
        $region42: #{tpu_custom_call.1} parent=11 // pred_check_branch
          %1032 = sbr.rel (%p1030) target = $region44
        $region43: #{tpu_custom_call.1} parent=11 // pred_region
          %s1034 = ssub.s32 32, 32
          %1035 = vsyncadd [#allocation15], %s1034
          %s1036 = sshll.u32 [#allocation14], 4
          %s1037 = int_to_ptr.vmem [resolvable:$true] %s1036
          %1042 = dma.hbm_to_vmem [thread:$0]  %s17, 32, %s1037, [#allocation15], 16, 16, 1
        $region44: #{tpu_custom_call.1} parent=11 // pred_fallthru
          _
        // Predicated region
        $region45: #{tpu_custom_call.1} parent=11 // pred_check
          %p1043 = pneg %p321
        $region46: #{tpu_custom_call.1} parent=11 // pred_check_branch
          %1045 = sbr.rel (%p1043) target = $region48
        $region47: #{tpu_custom_call.1} parent=11 // pred_region
          %s1047 = ssub.s32 1536, 1536
          %1048 = vsyncadd [#allocation15], %s1047
          %s1049 = sshll.u32 [#allocation16], 4
          %s1050 = int_to_ptr.vmem [resolvable:$true] %s1049
          %1055 = dma.hbm_to_vmem [thread:$0]  %s19, 1536, %s1050, [#allocation15], 64, 64, 4
        $region48: #{tpu_custom_call.1} parent=11 // pred_fallthru
          _
        // Predicated region
        $region49: #{tpu_custom_call.1} parent=11 // pred_check
          %p1056 = pneg %p342
        $region50: #{tpu_custom_call.1} parent=11 // pred_check_branch
          %1058 = sbr.rel (%p1056) target = $region52
        $region51: #{tpu_custom_call.1} parent=11 // pred_region
          %s1060 = ssub.s32 32, 32
          %1061 = vsyncadd [#allocation18], %s1060
          %s1062 = sshll.u32 [#allocation17], 4
          %s1063 = int_to_ptr.vmem [resolvable:$true] %s1062
          %1068 = dma.hbm_to_vmem [thread:$0]  %s21, 32, %s1063, [#allocation18], 16, 16, 1
        $region52: #{tpu_custom_call.1} parent=11 // pred_fallthru
          _
        // Predicated region
        $region53: #{tpu_custom_call.1} parent=11 // pred_check
          %p1069 = pneg %p363
        $region54: #{tpu_custom_call.1} parent=11 // pred_check_branch
          %1071 = sbr.rel (%p1069) target = $region56
        $region55: #{tpu_custom_call.1} parent=11 // pred_region
          %s1073 = ssub.s32 3072, 3072
          %1074 = vsyncadd [#allocation18], %s1073
          %s1075 = sshll.u32 [#allocation19], 4
          %s1076 = int_to_ptr.vmem [resolvable:$true] %s1075
          %1081 = dma.hbm_to_vmem [thread:$0]  %s23, 3072, %s1076, [#allocation18], 64, 64, 4
        $region56: #{tpu_custom_call.1} parent=11 // pred_fallthru
          _
        // Predicated region
        $region57: #{tpu_custom_call.1} parent=11 // pred_check
          %p1082 = pneg %p384
        $region58: #{tpu_custom_call.1} parent=11 // pred_check_branch
          %1084 = sbr.rel (%p1082) target = $region60
        $region59: #{tpu_custom_call.1} parent=11 // pred_region
          %s1086 = ssub.s32 32, 32
          %1087 = vsyncadd [#allocation21], %s1086
          %s1088 = sshll.u32 [#allocation20], 4
          %s1089 = int_to_ptr.vmem [resolvable:$true] %s1088
          %1094 = dma.hbm_to_vmem [thread:$0]  %s25, 32, %s1089, [#allocation21], 16, 16, 1
        $region60: #{tpu_custom_call.1} parent=11 // pred_fallthru
          _
        // Predicated region
        $region61: #{tpu_custom_call.1} parent=11 // pred_check
          %p1095 = pneg %p405
        $region62: #{tpu_custom_call.1} parent=11 // pred_check_branch
          %1097 = sbr.rel (%p1095) target = $region64
        $region63: #{tpu_custom_call.1} parent=11 // pred_region
          %s1099 = ssub.s32 1536, 1536
          %1100 = vsyncadd [#allocation21], %s1099
          %s1101 = sshll.u32 [#allocation22], 4
          %s1102 = int_to_ptr.vmem [resolvable:$true] %s1101
          %1107 = dma.hbm_to_vmem [thread:$0]  %s27, 1536, %s1102, [#allocation21], 64, 64, 4
        $region64: #{tpu_custom_call.1} parent=11 // pred_fallthru
          _
        // Predicated region
        $region65: #{tpu_custom_call.1} parent=11 // pred_check
          %p1108 = pneg %p426
        $region66: #{tpu_custom_call.1} parent=11 // pred_check_branch
          %1110 = sbr.rel (%p1108) target = $region68
        $region67: #{tpu_custom_call.1} parent=11 // pred_region
          %s1112 = ssub.s32 32, 32
          %1113 = vsyncadd [#allocation24], %s1112
          %s1114 = sshll.u32 [#allocation23], 4
          %s1115 = int_to_ptr.vmem [resolvable:$true] %s1114
          %1120 = dma.hbm_to_vmem [thread:$0]  %s29, 32, %s1115, [#allocation24], 16, 16, 1
        $region68: #{tpu_custom_call.1} parent=11 // pred_fallthru
          _
        // Predicated region
        $region69: #{tpu_custom_call.1} parent=11 // pred_check
          %p1121 = pneg %p447
        $region70: #{tpu_custom_call.1} parent=11 // pred_check_branch
          %1123 = sbr.rel (%p1121) target = $region72
        $region71: #{tpu_custom_call.1} parent=11 // pred_region
          %s1125 = ssub.s32 3072, 3072
          %1126 = vsyncadd [#allocation24], %s1125
          %s1127 = sshll.u32 [#allocation25], 4
          %s1128 = int_to_ptr.vmem [resolvable:$true] %s1127
          %1133 = dma.hbm_to_vmem [thread:$0]  %s31, 3072, %s1128, [#allocation24], 64, 64, 4
        $region72: #{tpu_custom_call.1} parent=11 // pred_fallthru
          _
        // Predicated region
        $region73: #{tpu_custom_call.1} parent=11 // pred_check
          %p1134 = pneg %p468
        $region74: #{tpu_custom_call.1} parent=11 // pred_check_branch
          %1136 = sbr.rel (%p1134) target = $region76
        $region75: #{tpu_custom_call.1} parent=11 // pred_region
          %s1138 = ssub.s32 32, 32
          %1139 = vsyncadd [#allocation27], %s1138
          %s1140 = sshll.u32 [#allocation26], 4
          %s1141 = int_to_ptr.vmem [resolvable:$true] %s1140
          %1146 = dma.hbm_to_vmem [thread:$0]  %s33, 32, %s1141, [#allocation27], 16, 16, 1
        $region76: #{tpu_custom_call.1} parent=11 // pred_fallthru
          _
        // Predicated region
        $region77: #{tpu_custom_call.1} parent=11 // pred_check
          %p1147 = pneg %p489
        $region78: #{tpu_custom_call.1} parent=11 // pred_check_branch
          %1149 = sbr.rel (%p1147) target = $region80
        $region79: #{tpu_custom_call.1} parent=11 // pred_region
          %s1151 = ssub.s32 1536, 1536
          %1152 = vsyncadd [#allocation27], %s1151
          %s1153 = sshll.u32 [#allocation28], 4
          %s1154 = int_to_ptr.vmem [resolvable:$true] %s1153
          %1159 = dma.hbm_to_vmem [thread:$0]  %s35, 1536, %s1154, [#allocation27], 64, 64, 4
        $region80: #{tpu_custom_call.1} parent=11 // pred_fallthru
          _
        // Predicated region
        $region81: #{tpu_custom_call.1} parent=11 // pred_check
          %p1160 = pneg %p510
        $region82: #{tpu_custom_call.1} parent=11 // pred_check_branch
          %1162 = sbr.rel (%p1160) target = $region84
        $region83: #{tpu_custom_call.1} parent=11 // pred_region
          %s1164 = ssub.s32 32, 32
          %1165 = vsyncadd [#allocation30], %s1164
          %s1166 = sshll.u32 [#allocation29], 4
          %s1167 = int_to_ptr.vmem [resolvable:$true] %s1166
          %1172 = dma.hbm_to_vmem [thread:$0]  %s37, 32, %s1167, [#allocation30], 16, 16, 1
        $region84: #{tpu_custom_call.1} parent=11 // pred_fallthru
          _
        // Predicated region
        $region85: #{tpu_custom_call.1} parent=11 // pred_check
          %p1173 = pneg %p531
        $region86: #{tpu_custom_call.1} parent=11 // pred_check_branch
          %1175 = sbr.rel (%p1173) target = $region88
        $region87: #{tpu_custom_call.1} parent=11 // pred_region
          %s1177 = ssub.s32 3072, 3072
          %1178 = vsyncadd [#allocation30], %s1177
          %s1179 = sshll.u32 [#allocation31], 4
          %s1180 = int_to_ptr.vmem [resolvable:$true] %s1179
          %1185 = dma.hbm_to_vmem [thread:$0]  %s39, 3072, %s1180, [#allocation30], 64, 64, 4
        $region88: #{tpu_custom_call.1} parent=11 // pred_fallthru
          _
        // Predicated region
        $region89: #{tpu_custom_call.1} parent=11 // pred_check
          %p1186 = pneg %p552
        $region90: #{tpu_custom_call.1} parent=11 // pred_check_branch
          %1188 = sbr.rel (%p1186) target = $region92
        $region91: #{tpu_custom_call.1} parent=11 // pred_region
          %s1190 = ssub.s32 32, 32
          %1191 = vsyncadd [#allocation33], %s1190
          %s1192 = sshll.u32 [#allocation32], 4
          %s1193 = int_to_ptr.vmem [resolvable:$true] %s1192
          %1198 = dma.hbm_to_vmem [thread:$0]  %s41, 32, %s1193, [#allocation33], 16, 16, 1
        $region92: #{tpu_custom_call.1} parent=11 // pred_fallthru
          _
        // Predicated region
        $region93: #{tpu_custom_call.1} parent=11 // pred_check
          %p1199 = pneg %p573
        $region94: #{tpu_custom_call.1} parent=11 // pred_check_branch
          %1201 = sbr.rel (%p1199) target = $region96
        $region95: #{tpu_custom_call.1} parent=11 // pred_region
          _
        $region96: #{tpu_custom_call.1} parent=11 // pred_fallthru
          _
        // Predicated region
        $region97: #{tpu_custom_call.1} parent=11 // pred_check
          %p1202 = pneg %p594
        $region98: #{tpu_custom_call.1} parent=11 // pred_check_branch
          %1204 = sbr.rel (%p1202) target = $region100
        $region99: #{tpu_custom_call.1} parent=11 // pred_region
          _
        $region100: #{tpu_custom_call.1} parent=11 // pred_fallthru
          _
        // Predicated region
        $region101: #{tpu_custom_call.1} parent=11 // pred_check
          %p1205 = pneg %p615
        $region102: #{tpu_custom_call.1} parent=11 // pred_check_branch
          %1207 = sbr.rel (%p1205) target = $region104
        $region103: #{tpu_custom_call.1} parent=11 // pred_region
          %s1209 = ssub.s32 64, 64
          %1210 = vsyncadd [#allocation33], %s1209
          %s1211 = sshll.u32 [#allocation34], 4
          %s1212 = int_to_ptr.vmem [resolvable:$true] %s1211
          %1217 = dma.hbm_to_vmem [thread:$0]  %s47, 64, %s1212, [#allocation33], 32, 32, 2
        $region104: #{tpu_custom_call.1} parent=11 // pred_fallthru
          _
        // Predicated region
        $region105: #{tpu_custom_call.1} parent=11 // pred_check
          %p1218 = pneg %p636
        $region106: #{tpu_custom_call.1} parent=11 // pred_check_branch
          %1220 = sbr.rel (%p1218) target = $region108
        $region107: #{tpu_custom_call.1} parent=11 // pred_region
          %s1222 = ssub.s32 32, 32
          %1223 = vsyncadd [#allocation36], %s1222
          %s1224 = sshll.u32 [#allocation35], 4
          %s1225 = int_to_ptr.vmem [resolvable:$true] %s1224
          %1230 = dma.hbm_to_vmem [thread:$0]  %s49, 32, %s1225, [#allocation36], 16, 16, 1
        $region108: #{tpu_custom_call.1} parent=11 // pred_fallthru
          _
        // Predicated region
        $region109: #{tpu_custom_call.1} parent=11 // pred_check
          %p1231 = pneg %p657
        $region110: #{tpu_custom_call.1} parent=11 // pred_check_branch
          %1233 = sbr.rel (%p1231) target = $region112
        $region111: #{tpu_custom_call.1} parent=11 // pred_region
          _
        $region112: #{tpu_custom_call.1} parent=11 // pred_fallthru
          _
        // Predicated region
        $region113: #{tpu_custom_call.1} parent=11 // pred_check
          %p1234 = pneg %p678
        $region114: #{tpu_custom_call.1} parent=11 // pred_check_branch
          %1236 = sbr.rel (%p1234) target = $region116
        $region115: #{tpu_custom_call.1} parent=11 // pred_region
          _
        $region116: #{tpu_custom_call.1} parent=11 // pred_fallthru
          _
        // Predicated region
        $region117: #{tpu_custom_call.1} parent=11 // pred_check
          %p1237 = pneg %p699
        $region118: #{tpu_custom_call.1} parent=11 // pred_check_branch
          %1239 = sbr.rel (%p1237) target = $region120
        $region119: #{tpu_custom_call.1} parent=11 // pred_region
          %s1241 = ssub.s32 1024, 1024
          %1242 = vsyncadd [#allocation36], %s1241
          %s1243 = sshll.u32 [#allocation37], 4
          %s1244 = int_to_ptr.vmem [resolvable:$true] %s1243
          %1249 = dma.hbm_to_vmem [thread:$0]  %s55, 1024, %s1244, [#allocation36], 64, 64, 4
        $region120: #{tpu_custom_call.1} parent=11 // pred_fallthru
          _
        // Predicated region
        $region121: #{tpu_custom_call.1} parent=11 // pred_check
          %p1250 = pneg %p720
        $region122: #{tpu_custom_call.1} parent=11 // pred_check_branch
          %1252 = sbr.rel (%p1250) target = $region124
        $region123: #{tpu_custom_call.1} parent=11 // pred_region
          _
        $region124: #{tpu_custom_call.1} parent=11 // pred_fallthru
          _
        // Predicated region
        $region125: #{tpu_custom_call.1} parent=11 // pred_check
          %p1253 = pneg %p741
        $region126: #{tpu_custom_call.1} parent=11 // pred_check_branch
          %1255 = sbr.rel (%p1253) target = $region128
        $region127: #{tpu_custom_call.1} parent=11 // pred_region
          %s1257 = ssub.s32 1024, 1024
          %1258 = vsyncadd [#allocation39], %s1257
          %s1259 = sshll.u32 [#allocation38], 4
          %s1260 = int_to_ptr.vmem [resolvable:$true] %s1259
          %1265 = dma.hbm_to_vmem [thread:$0]  %s59, 1024, %s1260, [#allocation39], 64, 64, 4
        $region128: #{tpu_custom_call.1} parent=11 // pred_fallthru
          _
        // Predicated region
        $region129: #{tpu_custom_call.1} parent=11 // pred_check
          %p1266 = pneg %p762
        $region130: #{tpu_custom_call.1} parent=11 // pred_check_branch
          %1268 = sbr.rel (%p1266) target = $region132
        $region131: #{tpu_custom_call.1} parent=11 // pred_region
          _
        $region132: #{tpu_custom_call.1} parent=11 // pred_fallthru
          _
        // Predicated region
        $region133: #{tpu_custom_call.1} parent=11 // pred_check
          %p1269 = pneg %p783
        $region134: #{tpu_custom_call.1} parent=11 // pred_check_branch
          %1271 = sbr.rel (%p1269) target = $region136
        $region135: #{tpu_custom_call.1} parent=11 // pred_region
          %s1273 = ssub.s32 1024, 1024
          %1274 = vsyncadd [#allocation39], %s1273
          %s1275 = sshll.u32 [#allocation40], 4
          %s1276 = int_to_ptr.vmem [resolvable:$true] %s1275
          %1281 = dma.hbm_to_vmem [thread:$0]  %s63, 1024, %s1276, [#allocation39], 64, 64, 4
        $region136: #{tpu_custom_call.1} parent=11 // pred_fallthru
          _
        // Predicated region
        $region137: #{tpu_custom_call.1} parent=11 // pred_check
          %p1282 = pneg %p804
        $region138: #{tpu_custom_call.1} parent=11 // pred_check_branch
          %1284 = sbr.rel (%p1282) target = $region140
        $region139: #{tpu_custom_call.1} parent=11 // pred_region
          _
        $region140: #{tpu_custom_call.1} parent=11 // pred_fallthru
          _
      $region12: #{tpu_custom_call.1} parent=5 // pred_fallthru
        _
      %p1285 = scmp.lt.s32.totalorder %s106, 2
      // Predicated region
      $region141: #{tpu_custom_call.1} parent=5 // pred_check
        %p1286 = pneg %p1285
      $region142: #{tpu_custom_call.1} parent=5 // pred_check_branch
        %1288 = sbr.rel (%p1286) target = $region144
      $region143: #{tpu_custom_call.1} parent=5 // pred_region
        // Predicated region
        $region145: #{tpu_custom_call.1} parent=143 // pred_check
          %p1289 = pneg %p126
        $region146: #{tpu_custom_call.1} parent=143 // pred_check_branch
          %1291 = sbr.rel (%p1289) target = $region148
        $region147: #{tpu_custom_call.1} parent=143 // pred_region
          %s1292 = sand.u32 %s116, 1
          %s1293 = scalar_lea.sflag [#allocation3], %s1292
          %s1294 = sand.u32 %s116, 1
          %s1295 = smul.addr %s1294, 8
          %s1296 = scalar_lea.vmem [#allocation2], %s1295
          %s1298 = ssub.s32 128, 128
          %1299 = vsyncadd %s1293, %s1298
          %s1300 = smul.addr %s106, 2
          %s1301 = smul.addr %s1300, 64
          %s1302 = scalar_lea.hbm %s1, %s1301
          %s1303 = sshll.u32 %s1296, 4
          %s1304 = int_to_ptr.vmem [resolvable:$true] %s1303
          %1309 = dma.hbm_to_vmem [thread:$0]  %s1302, 128, %s1304, %s1293, 64, 64, 4
        $region148: #{tpu_custom_call.1} parent=143 // pred_fallthru
          _
      $region144: #{tpu_custom_call.1} parent=5 // pred_fallthru
        _
      %p1310 = scmp.le.s32.totalorder 1, %s106
      %p1311 = scmp.lt.s32.totalorder %s106, 3
      %p1312 = pnand %p1310, %p1311
      %p1313 = pneg %p1312
      // Predicated region
      $region149: #{tpu_custom_call.1} parent=5 // pred_check
        _
      $region150: #{tpu_custom_call.1} parent=5 // pred_check_branch
        %1315 = sbr.rel (%p1312) target = $region152
      $region151: #{tpu_custom_call.1} parent=5 // pred_region
        %s1316 = ssub.s32 %s106, 1
        %s1317 = sand.u32 %s119, 1
        %s1318 = scalar_lea.sflag [#allocation3], %s1317
        %s1319 = sand.u32 %s119, 1
        %s1320 = smul.addr %s1319, 8
        %s1321 = scalar_lea.vmem [#allocation2], %s1320
        // Predicated region
        $region153: #{tpu_custom_call.1} parent=151 // pred_check
          %p1322 = pneg %p132
        $region154: #{tpu_custom_call.1} parent=151 // pred_check_branch
          %1324 = sbr.rel (%p1322) target = $region156
        $region155: #{tpu_custom_call.1} parent=151 // pred_region
          %1325 = dma.done %s1318, 128
        $region156: #{tpu_custom_call.1} parent=151 // pred_fallthru
          _
        // Predicated region
        $region157: #{tpu_custom_call.1} parent=151 // pred_check
          %p1326 = pneg %p153
        $region158: #{tpu_custom_call.1} parent=151 // pred_check_branch
          %1328 = sbr.rel (%p1326) target = $region160
        $region159: #{tpu_custom_call.1} parent=151 // pred_region
          %1329 = dma.done [#allocation6], 1536
        $region160: #{tpu_custom_call.1} parent=151 // pred_fallthru
          _
        // Predicated region
        $region161: #{tpu_custom_call.1} parent=151 // pred_check
          %p1330 = pneg %p195
        $region162: #{tpu_custom_call.1} parent=151 // pred_check_branch
          %1332 = sbr.rel (%p1330) target = $region164
        $region163: #{tpu_custom_call.1} parent=151 // pred_region
          %1333 = dma.done [#allocation6], 3072
        $region164: #{tpu_custom_call.1} parent=151 // pred_fallthru
          _
        // Predicated region
        $region165: #{tpu_custom_call.1} parent=151 // pred_check
          %p1334 = pneg %p216
        $region166: #{tpu_custom_call.1} parent=151 // pred_check_branch
          %1336 = sbr.rel (%p1334) target = $region168
        $region167: #{tpu_custom_call.1} parent=151 // pred_region
          %1337 = dma.done [#allocation9], 32
        $region168: #{tpu_custom_call.1} parent=151 // pred_fallthru
          _
        // Predicated region
        $region169: #{tpu_custom_call.1} parent=151 // pred_check
          %p1338 = pneg %p237
        $region170: #{tpu_custom_call.1} parent=151 // pred_check_branch
          %1340 = sbr.rel (%p1338) target = $region172
        $region171: #{tpu_custom_call.1} parent=151 // pred_region
          %1341 = dma.done [#allocation9], 1536
        $region172: #{tpu_custom_call.1} parent=151 // pred_fallthru
          _
        // Predicated region
        $region173: #{tpu_custom_call.1} parent=151 // pred_check
          %p1342 = pneg %p258
        $region174: #{tpu_custom_call.1} parent=151 // pred_check_branch
          %1344 = sbr.rel (%p1342) target = $region176
        $region175: #{tpu_custom_call.1} parent=151 // pred_region
          %1345 = dma.done [#allocation12], 32
        $region176: #{tpu_custom_call.1} parent=151 // pred_fallthru
          _
        // Predicated region
        $region177: #{tpu_custom_call.1} parent=151 // pred_check
          %p1346 = pneg %p279
        $region178: #{tpu_custom_call.1} parent=151 // pred_check_branch
          %1348 = sbr.rel (%p1346) target = $region180
        $region179: #{tpu_custom_call.1} parent=151 // pred_region
          %1349 = dma.done [#allocation12], 3072
        $region180: #{tpu_custom_call.1} parent=151 // pred_fallthru
          _
        // Predicated region
        $region181: #{tpu_custom_call.1} parent=151 // pred_check
          %p1350 = pneg %p300
        $region182: #{tpu_custom_call.1} parent=151 // pred_check_branch
          %1352 = sbr.rel (%p1350) target = $region184
        $region183: #{tpu_custom_call.1} parent=151 // pred_region
          %1353 = dma.done [#allocation15], 32
        $region184: #{tpu_custom_call.1} parent=151 // pred_fallthru
          _
        // Predicated region
        $region185: #{tpu_custom_call.1} parent=151 // pred_check
          %p1354 = pneg %p321
        $region186: #{tpu_custom_call.1} parent=151 // pred_check_branch
          %1356 = sbr.rel (%p1354) target = $region188
        $region187: #{tpu_custom_call.1} parent=151 // pred_region
          %1357 = dma.done [#allocation15], 1536
        $region188: #{tpu_custom_call.1} parent=151 // pred_fallthru
          _
        // Predicated region
        $region189: #{tpu_custom_call.1} parent=151 // pred_check
          %p1358 = pneg %p342
        $region190: #{tpu_custom_call.1} parent=151 // pred_check_branch
          %1360 = sbr.rel (%p1358) target = $region192
        $region191: #{tpu_custom_call.1} parent=151 // pred_region
          %1361 = dma.done [#allocation18], 32
        $region192: #{tpu_custom_call.1} parent=151 // pred_fallthru
          _
        // Predicated region
        $region193: #{tpu_custom_call.1} parent=151 // pred_check
          %p1362 = pneg %p363
        $region194: #{tpu_custom_call.1} parent=151 // pred_check_branch
          %1364 = sbr.rel (%p1362) target = $region196
        $region195: #{tpu_custom_call.1} parent=151 // pred_region
          %1365 = dma.done [#allocation18], 3072
        $region196: #{tpu_custom_call.1} parent=151 // pred_fallthru
          _
        // Predicated region
        $region197: #{tpu_custom_call.1} parent=151 // pred_check
          %p1366 = pneg %p384
        $region198: #{tpu_custom_call.1} parent=151 // pred_check_branch
          %1368 = sbr.rel (%p1366) target = $region200
        $region199: #{tpu_custom_call.1} parent=151 // pred_region
          %1369 = dma.done [#allocation21], 32
        $region200: #{tpu_custom_call.1} parent=151 // pred_fallthru
          _
        // Predicated region
        $region201: #{tpu_custom_call.1} parent=151 // pred_check
          %p1370 = pneg %p405
        $region202: #{tpu_custom_call.1} parent=151 // pred_check_branch
          %1372 = sbr.rel (%p1370) target = $region204
        $region203: #{tpu_custom_call.1} parent=151 // pred_region
          %1373 = dma.done [#allocation21], 1536
        $region204: #{tpu_custom_call.1} parent=151 // pred_fallthru
          _
        // Predicated region
        $region205: #{tpu_custom_call.1} parent=151 // pred_check
          %p1374 = pneg %p426
        $region206: #{tpu_custom_call.1} parent=151 // pred_check_branch
          %1376 = sbr.rel (%p1374) target = $region208
        $region207: #{tpu_custom_call.1} parent=151 // pred_region
          %1377 = dma.done [#allocation24], 32
        $region208: #{tpu_custom_call.1} parent=151 // pred_fallthru
          _
        // Predicated region
        $region209: #{tpu_custom_call.1} parent=151 // pred_check
          %p1378 = pneg %p447
        $region210: #{tpu_custom_call.1} parent=151 // pred_check_branch
          %1380 = sbr.rel (%p1378) target = $region212
        $region211: #{tpu_custom_call.1} parent=151 // pred_region
          %1381 = dma.done [#allocation24], 3072
        $region212: #{tpu_custom_call.1} parent=151 // pred_fallthru
          _
        // Predicated region
        $region213: #{tpu_custom_call.1} parent=151 // pred_check
          %p1382 = pneg %p468
        $region214: #{tpu_custom_call.1} parent=151 // pred_check_branch
          %1384 = sbr.rel (%p1382) target = $region216
        $region215: #{tpu_custom_call.1} parent=151 // pred_region
          %1385 = dma.done [#allocation27], 32
        $region216: #{tpu_custom_call.1} parent=151 // pred_fallthru
          _
        // Predicated region
        $region217: #{tpu_custom_call.1} parent=151 // pred_check
          %p1386 = pneg %p489
        $region218: #{tpu_custom_call.1} parent=151 // pred_check_branch
          %1388 = sbr.rel (%p1386) target = $region220
        $region219: #{tpu_custom_call.1} parent=151 // pred_region
          %1389 = dma.done [#allocation27], 1536
        $region220: #{tpu_custom_call.1} parent=151 // pred_fallthru
          _
        // Predicated region
        $region221: #{tpu_custom_call.1} parent=151 // pred_check
          %p1390 = pneg %p510
        $region222: #{tpu_custom_call.1} parent=151 // pred_check_branch
          %1392 = sbr.rel (%p1390) target = $region224
        $region223: #{tpu_custom_call.1} parent=151 // pred_region
          %1393 = dma.done [#allocation30], 32
        $region224: #{tpu_custom_call.1} parent=151 // pred_fallthru
          _
        // Predicated region
        $region225: #{tpu_custom_call.1} parent=151 // pred_check
          %p1394 = pneg %p531
        $region226: #{tpu_custom_call.1} parent=151 // pred_check_branch
          %1396 = sbr.rel (%p1394) target = $region228
        $region227: #{tpu_custom_call.1} parent=151 // pred_region
          %1397 = dma.done [#allocation30], 3072
        $region228: #{tpu_custom_call.1} parent=151 // pred_fallthru
          _
        // Predicated region
        $region229: #{tpu_custom_call.1} parent=151 // pred_check
          %p1398 = pneg %p552
        $region230: #{tpu_custom_call.1} parent=151 // pred_check_branch
          %1400 = sbr.rel (%p1398) target = $region232
        $region231: #{tpu_custom_call.1} parent=151 // pred_region
          %1401 = dma.done [#allocation33], 32
        $region232: #{tpu_custom_call.1} parent=151 // pred_fallthru
          _
        // Predicated region
        $region233: #{tpu_custom_call.1} parent=151 // pred_check
          %p1402 = pneg %p615
        $region234: #{tpu_custom_call.1} parent=151 // pred_check_branch
          %1404 = sbr.rel (%p1402) target = $region236
        $region235: #{tpu_custom_call.1} parent=151 // pred_region
          %1405 = dma.done [#allocation33], 64
        $region236: #{tpu_custom_call.1} parent=151 // pred_fallthru
          _
        // Predicated region
        $region237: #{tpu_custom_call.1} parent=151 // pred_check
          %p1406 = pneg %p636
        $region238: #{tpu_custom_call.1} parent=151 // pred_check_branch
          %1408 = sbr.rel (%p1406) target = $region240
        $region239: #{tpu_custom_call.1} parent=151 // pred_region
          %1409 = dma.done [#allocation36], 32
        $region240: #{tpu_custom_call.1} parent=151 // pred_fallthru
          _
        // Predicated region
        $region241: #{tpu_custom_call.1} parent=151 // pred_check
          %p1410 = pneg %p699
        $region242: #{tpu_custom_call.1} parent=151 // pred_check_branch
          %1412 = sbr.rel (%p1410) target = $region244
        $region243: #{tpu_custom_call.1} parent=151 // pred_region
          %1413 = dma.done [#allocation36], 1024
        $region244: #{tpu_custom_call.1} parent=151 // pred_fallthru
          _
        // Predicated region
        $region245: #{tpu_custom_call.1} parent=151 // pred_check
          %p1414 = pneg %p741
        $region246: #{tpu_custom_call.1} parent=151 // pred_check_branch
          %1416 = sbr.rel (%p1414) target = $region248
        $region247: #{tpu_custom_call.1} parent=151 // pred_region
          %1417 = dma.done [#allocation39], 1024
        $region248: #{tpu_custom_call.1} parent=151 // pred_fallthru
          _
        // Predicated region
        $region249: #{tpu_custom_call.1} parent=151 // pred_check
          %p1418 = pneg %p783
        $region250: #{tpu_custom_call.1} parent=151 // pred_check_branch
          %1420 = sbr.rel (%p1418) target = $region252
        $region251: #{tpu_custom_call.1} parent=151 // pred_region
          %1421 = dma.done [#allocation39], 1024
        $region252: #{tpu_custom_call.1} parent=151 // pred_fallthru
          _
        %s1422 = sand.u32 %s119, 1
        %s1423 = scalar_lea.sflag [#allocation3], %s1422
        %s1424 = sand.u32 %s119, 1
        %s1425 = smul.addr %s1424, 8
        %s1426 = scalar_lea.vmem [#allocation2], %s1425
        %p1427 = pneg %p132
        %p1428 = pneg %p129
        %p1429 = pneg %p153
        %p1430 = pneg %p150
        %p1431 = pneg %p174
        %p1432 = pneg %p171
        %p1433 = pneg %p195
        %p1434 = pneg %p192
        %p1435 = pneg %p216
        %p1436 = pneg %p213
        %p1437 = pneg %p237
        %p1438 = pneg %p234
        %p1439 = pneg %p258
        %p1440 = pneg %p255
        %p1441 = pneg %p279
        %p1442 = pneg %p276
        %p1443 = pneg %p300
        %p1444 = pneg %p297
        %p1445 = pneg %p321
        %p1446 = pneg %p318
        %p1447 = pneg %p342
        %p1448 = pneg %p339
        %p1449 = pneg %p363
        %p1450 = pneg %p360
        %p1451 = pneg %p384
        %p1452 = pneg %p381
        %p1453 = pneg %p405
        %p1454 = pneg %p402
        %p1455 = pneg %p426
        %p1456 = pneg %p423
        %p1457 = pneg %p447
        %p1458 = pneg %p444
        %p1459 = pneg %p468
        %p1460 = pneg %p465
        %p1461 = pneg %p489
        %p1462 = pneg %p486
        %p1463 = pneg %p510
        %p1464 = pneg %p507
        %p1465 = pneg %p531
        %p1466 = pneg %p528
        %p1467 = pneg %p552
        %p1468 = pneg %p549
        %p1469 = pneg %p573
        %p1470 = pneg %p570
        %p1471 = pneg %p594
        %p1472 = pneg %p591
        %p1473 = pneg %p615
        %p1474 = pneg %p612
        %p1475 = pneg %p636
        %p1476 = pneg %p633
        %p1477 = pneg %p657
        %p1478 = pneg %p654
        %p1479 = pneg %p678
        %p1480 = pneg %p675
        %p1481 = pneg %p699
        %p1482 = pneg %p696
        %p1483 = pneg %p720
        %p1484 = pneg %p717
        %p1485 = pneg %p741
        %p1486 = pneg %p738
        %p1487 = pneg %p762
        %p1488 = pneg %p759
        %p1489 = pneg %p783
        %p1490 = pneg %p780
        %p1491 = pneg %p804
        %p1492 = pneg %p801
        %p1493 = pneg %p830
        %p1494 = pneg %p827
        %s1495 = sand.u32 %s817, 1
        %s1496 = scalar_lea.sflag [#allocation4], %s1495
        %s1497 = sand.u32 %s817, 1
        %s1498 = smul.addr %s1497, 16
        %s1499 = scalar_lea.vmem [#allocation41], %s1498
        %p1500 = pneg %p856
        %p1501 = pneg %p853
        %s1502 = sand.u32 %s111, 1
        %s1503 = scalar_lea.sflag [#allocation43], %s1502
        %s1504 = sand.u32 %s843, 1
        %s1505 = smul.addr %s1504, 8
        %s1506 = scalar_lea.vmem [#allocation42], %s1505
        %p1507 = pneg %p882
        %p1508 = pneg %p879
        %s1509 = sand.u32 %s111, 1
        %s1510 = scalar_lea.sflag [#allocation43], %s1509
        %s1511 = sand.u32 %s869, 1
        %s1512 = smul.addr %s1511, 4
        %s1513 = scalar_lea.vmem [#allocation44], %s1512
        %p1514 = pneg %p908
        %p1515 = pneg %p905
        %s1516 = sand.u32 %s111, 1
        %s1517 = scalar_lea.sflag [#allocation46], %s1516
        %s1518 = sand.u32 %s895, 1
        %s1519 = smul.addr %s1518, 2
        %s1520 = scalar_lea.vmem [#allocation45], %s1519
        %p1521 = pneg %p934
        %p1522 = pneg %p931
        %s1523 = sand.u32 %s111, 1
        %s1524 = scalar_lea.sflag [#allocation46], %s1523
        %s1525 = sand.u32 %s921, 1
        %s1526 = scalar_lea.vmem [#allocation47], %s1525
        %v1528 = vld [vmem:[%s1321] sm:$0xf]
        %v1529 = vld [vmem:[%s1321 + $0x4] sm:$0xf]
        %v1530 = vld [vmem:[%s43] sm:$0xf]
        %v1531 = vld [vmem:[%s43 + $0x4] sm:$0xf]
        %s1532 = scalar_lea.vmem %s43, 8
        %v1533 = vld [vmem:[%s1532] sm:$0xf]
        %v1534 = vld [vmem:[%s1532 + $0x4] sm:$0xf]
        %v1537 = vunpack.c.l.b16 %v1530
        %v1538 = vunpack.c.l.b16 %v1531
        %v1539 = vpack.c.b16 %v1538, %v1537
        %v1542 = vunpack.c.l.b16 %v1528
        %v1543 = vunpack.c.l.b16 %v1529
        %v1544 = vpack.c.b16 %v1543, %v1542
        %vm1546 = vcmask 130048
        %v1548 = vsel %vm1546, %v1539, 0
        %1550 = vmatprep.subr.bf16.mxu0 0
        %1551 = vmatpush1.bf16.msra.mxu0 %v1544
        %1552 = vmatprep.subr.bf16.mxu0 0
        %1553 = vmatpush1.bf16.msra.mxu0 0
        %1554 = vmatprep.subr.bf16.mxu0 0
        %1555 = vmatpush1.bf16.msra.mxu0 0
        %1556 = vmatprep.subr.bf16.mxu0 0
        %1557 = vmatpush1.bf16.msra.mxu0 0
        %1558 = vmatprep.subr.bf16.mxu0 0
        %1559 = vmatpush1.bf16.msra.mxu0 0
        %1560 = vmatprep.subr.bf16.mxu0 0
        %1561 = vmatpush1.bf16.msra.mxu0 0
        %1562 = vmatprep.subr.bf16.mxu0 0
        %1563 = vmatpush1.bf16.msra.mxu0 0
        %1564 = vmatprep.subr.bf16.mxu0 0
        %1565 = vmatpush1.bf16.msra.mxu0 0
        %1566 = vmatprep.subr.bf16.mxu0 0
        %1567 = vmatpush1.bf16.msra.mxu0 0
        %1568 = vmatprep.subr.bf16.mxu0 0
        %1569 = vmatpush1.bf16.msra.mxu0 0
        %1570 = vmatprep.subr.bf16.mxu0 0
        %1571 = vmatpush1.bf16.msra.mxu0 0
        %1572 = vmatprep.subr.bf16.mxu0 0
        %1573 = vmatpush1.bf16.msra.mxu0 0
        %1574 = vmatprep.subr.bf16.mxu0 0
        %1575 = vmatpush1.bf16.msra.mxu0 0
        %1576 = vmatprep.subr.bf16.mxu0 0
        %1577 = vmatpush1.bf16.msra.mxu0 0
        %1578 = vmatprep.subr.bf16.mxu0 0
        %1579 = vmatpush1.bf16.msra.mxu0 0
        %1580 = vmatprep.subr.bf16.mxu0 0
        %1581 = vmatpush1.bf16.msra.mxu0 0
        %1582 = vmatprep.mubr.bf16.mxu0 0
        %1583 = vmatmul.mubr.bf16.gmra.mrb[0].mxu0 %v1548
        %v1584 = vpop.f32.mrb[0].mxu0
        %v1585 = vadd.f32 0.0, %v1584
        %v1586 = vpop.f32.mrb[0].mxu0
        %v1587 = vpop.f32.mrb[0].mxu0
        %v1588 = vadd.f32 0.0, %v1587
        %v1589 = vpop.f32.mrb[0].mxu0
        %1590 = vdwg.mxu0
        %v1591 = vpack.c.bf16 %v1588, %v1585
        %v1594 = vunpack.c.l.b16 %v1533
        %v1595 = vunpack.c.l.b16 %v1534
        %v1596 = vpack.c.b16 %v1595, %v1594
        %v1598 = vsel %vm1546, %v1596, 0
        %1600 = vmatprep.subr.bf16.mxu0 0
        %1601 = vmatpush1.bf16.msra.mxu0 %v1544
        %1602 = vmatprep.subr.bf16.mxu0 0
        %1603 = vmatpush1.bf16.msra.mxu0 0
        %1604 = vmatprep.subr.bf16.mxu0 0
        %1605 = vmatpush1.bf16.msra.mxu0 0
        %1606 = vmatprep.subr.bf16.mxu0 0
        %1607 = vmatpush1.bf16.msra.mxu0 0
        %1608 = vmatprep.subr.bf16.mxu0 0
        %1609 = vmatpush1.bf16.msra.mxu0 0
        %1610 = vmatprep.subr.bf16.mxu0 0
        %1611 = vmatpush1.bf16.msra.mxu0 0
        %1612 = vmatprep.subr.bf16.mxu0 0
        %1613 = vmatpush1.bf16.msra.mxu0 0
        %1614 = vmatprep.subr.bf16.mxu0 0
        %1615 = vmatpush1.bf16.msra.mxu0 0
        %1616 = vmatprep.subr.bf16.mxu0 0
        %1617 = vmatpush1.bf16.msra.mxu0 0
        %1618 = vmatprep.subr.bf16.mxu0 0
        %1619 = vmatpush1.bf16.msra.mxu0 0
        %1620 = vmatprep.subr.bf16.mxu0 0
        %1621 = vmatpush1.bf16.msra.mxu0 0
        %1622 = vmatprep.subr.bf16.mxu0 0
        %1623 = vmatpush1.bf16.msra.mxu0 0
        %1624 = vmatprep.subr.bf16.mxu0 0
        %1625 = vmatpush1.bf16.msra.mxu0 0
        %1626 = vmatprep.subr.bf16.mxu0 0
        %1627 = vmatpush1.bf16.msra.mxu0 0
        %1628 = vmatprep.subr.bf16.mxu0 0
        %1629 = vmatpush1.bf16.msra.mxu0 0
        %1630 = vmatprep.subr.bf16.mxu0 0
        %1631 = vmatpush1.bf16.msra.mxu0 0
        %1632 = vmatprep.mubr.bf16.mxu0 0
        %1633 = vmatmul.mubr.bf16.gmra.mrb[0].mxu0 %v1598
        %v1634 = vpop.f32.mrb[0].mxu0
        %v1635 = vadd.f32 0.0, %v1634
        %v1636 = vpop.f32.mrb[0].mxu0
        %v1637 = vpop.f32.mrb[0].mxu0
        %v1638 = vadd.f32 0.0, %v1637
        %v1639 = vpop.f32.mrb[0].mxu0
        %1640 = vdwg.mxu0
        %v1641 = vpack.c.bf16 %v1638, %v1635
        %1642 = vrot.lane.b32.xlu0 %v1544, 64
        %v1643 = vpop.permute.xlu0 %1642
        %vm1644 = vcmask 523264
        %v1647 = vsel %vm1644, %v1591, %v1643
        %v1649 = vld [vmem:[#allocation5] sm:$0xf]
        %v1650 = vld [vmem:[#allocation5 + $0x4] sm:$0xf]
        %v1651 = vld [vmem:[#allocation5 + $0x8] sm:$0xf]
        %v1652 = vld [vmem:[#allocation5 + $0xc] sm:$0xf]
        %v1653 = vld [vmem:[#allocation5 + $0x10] sm:$0xf]
        %v1654 = vld [vmem:[#allocation5 + $0x14] sm:$0xf]
        %v1655 = vld [vmem:[#allocation5 + $0x18] sm:$0xf]
        %v1656 = vld [vmem:[#allocation5 + $0x1c] sm:$0xf]
        %v1657 = vld [vmem:[#allocation5 + $0x20] sm:$0xf]
        %v1658 = vld [vmem:[#allocation5 + $0x24] sm:$0xf]
        %v1659 = vld [vmem:[#allocation5 + $0x28] sm:$0xf]
        %v1660 = vld [vmem:[#allocation5 + $0x2c] sm:$0xf]
        %v1661 = vld [vmem:[#allocation5 + $0x30] sm:$0xf]
        %v1662 = vld [vmem:[#allocation5 + $0x34] sm:$0xf]
        %v1663 = vld [vmem:[#allocation5 + $0x38] sm:$0xf]
        %v1664 = vld [vmem:[#allocation5 + $0x3c] sm:$0xf]
        %v1665 = vld [vmem:[#allocation5 + $0x40] sm:$0xf]
        %v1666 = vld [vmem:[#allocation5 + $0x44] sm:$0xf]
        %v1667 = vld [vmem:[#allocation5 + $0x48] sm:$0xf]
        %v1668 = vld [vmem:[#allocation5 + $0x4c] sm:$0xf]
        %v1669 = vld [vmem:[#allocation5 + $0x50] sm:$0xf]
        %v1670 = vld [vmem:[#allocation5 + $0x54] sm:$0xf]
        %v1671 = vld [vmem:[#allocation5 + $0x58] sm:$0xf]
        %v1672 = vld [vmem:[#allocation5 + $0x5c] sm:$0xf]
        %v1697 = vunpack.c.l.b16 %v1649
        %v1698 = vunpack.c.l.b16 %v1650
        %v1699 = vunpack.c.l.b16 %v1651
        %v1700 = vunpack.c.l.b16 %v1652
        %v1701 = vunpack.c.l.b16 %v1653
        %v1702 = vunpack.c.l.b16 %v1654
        %v1703 = vunpack.c.l.b16 %v1655
        %v1704 = vunpack.c.l.b16 %v1656
        %v1705 = vunpack.c.l.b16 %v1657
        %v1706 = vunpack.c.l.b16 %v1658
        %v1707 = vunpack.c.l.b16 %v1659
        %v1708 = vunpack.c.l.b16 %v1660
        %v1709 = vunpack.c.l.b16 %v1661
        %v1710 = vunpack.c.l.b16 %v1662
        %v1711 = vunpack.c.l.b16 %v1663
        %v1712 = vunpack.c.l.b16 %v1664
        %v1713 = vunpack.c.l.b16 %v1665
        %v1714 = vunpack.c.l.b16 %v1666
        %v1715 = vunpack.c.l.b16 %v1667
        %v1716 = vunpack.c.l.b16 %v1668
        %v1717 = vunpack.c.l.b16 %v1669
        %v1718 = vunpack.c.l.b16 %v1670
        %v1719 = vunpack.c.l.b16 %v1671
        %v1720 = vunpack.c.l.b16 %v1672
        %v1721 = vpack.c.b16 %v1698, %v1697
        %v1722 = vpack.c.b16 %v1700, %v1699
        %v1723 = vpack.c.b16 %v1702, %v1701
        %v1724 = vpack.c.b16 %v1704, %v1703
        %v1725 = vpack.c.b16 %v1706, %v1705
        %v1726 = vpack.c.b16 %v1708, %v1707
        %v1727 = vpack.c.b16 %v1710, %v1709
        %v1728 = vpack.c.b16 %v1712, %v1711
        %v1729 = vpack.c.b16 %v1714, %v1713
        %v1730 = vpack.c.b16 %v1716, %v1715
        %v1731 = vpack.c.b16 %v1718, %v1717
        %v1732 = vpack.c.b16 %v1720, %v1719
        %v1746 = vsel %vm1644, %v1641, 0
        %1748 = vmatprep.subr.bf16.mxu0 0
        %1749 = vmatpush1.bf16.msra.mxu0 %v1721
        %1750 = vmatprep.subr.bf16.mxu0 0
        %1751 = vmatpush1.bf16.msra.mxu0 %v1722
        %1752 = vmatprep.subr.bf16.mxu0 0
        %1753 = vmatpush1.bf16.msra.mxu0 %v1723
        %1754 = vmatprep.subr.bf16.mxu0 0
        %1755 = vmatpush1.bf16.msra.mxu0 %v1724
        %1756 = vmatprep.subr.bf16.mxu0 0
        %1757 = vmatpush1.bf16.msra.mxu0 %v1725
        %1758 = vmatprep.subr.bf16.mxu0 0
        %1759 = vmatpush1.bf16.msra.mxu0 %v1726
        %1760 = vmatprep.subr.bf16.mxu0 0
        %1761 = vmatpush1.bf16.msra.mxu0 %v1727
        %1762 = vmatprep.subr.bf16.mxu0 0
        %1763 = vmatpush1.bf16.msra.mxu0 %v1728
        %1764 = vmatprep.subr.bf16.mxu0 0
        %1765 = vmatpush1.bf16.msra.mxu0 %v1729
        %1766 = vmatprep.subr.bf16.mxu0 0
        %1767 = vmatpush1.bf16.msra.mxu0 %v1730
        %1768 = vmatprep.subr.bf16.mxu0 0
        %1769 = vmatpush1.bf16.msra.mxu0 %v1731
        %1770 = vmatprep.subr.bf16.mxu0 0
        %1771 = vmatpush1.bf16.msra.mxu0 %v1732
        %1772 = vmatprep.subr.bf16.mxu0 0
        %1773 = vmatpush1.bf16.msra.mxu0 0
        %1774 = vmatprep.subr.bf16.mxu0 0
        %1775 = vmatpush1.bf16.msra.mxu0 0
        %1776 = vmatprep.subr.bf16.mxu0 0
        %1777 = vmatpush1.bf16.msra.mxu0 0
        %1778 = vmatprep.subr.bf16.mxu0 0
        %1779 = vmatpush1.bf16.msra.mxu0 0
        %1780 = vmatprep.mubr.bf16.mxu0 %v1746
        %1781 = vmatmul.mubr.bf16.gmra.mrb[0].mxu0 %v1647
        %v1782 = vpop.f32.mrb[0].mxu0
        %v1783 = vadd.f32 0.0, %v1782
        %v1784 = vpop.f32.mrb[0].mxu0
        %v1785 = vpop.f32.mrb[0].mxu0
        %v1786 = vadd.f32 0.0, %v1785
        %v1787 = vpop.f32.mrb[0].mxu0
        %1788 = vdwg.mxu0
        %v1789 = vld [vmem:[%s5] sm:$0x1]
        %v1791 = vlaneseq
        %v1792 = vshrl.u32 %v1791, 7
        %v1793 = vsub.s32 0, %v1792
        %v1794 = vrot.slane %v1789, %v1793
        %v1796 = vmul.f32 %v1783, %v1794
        %v1797 = vmul.f32 %v1786, %v1794
        %s1798 = scalar_lea.vmem %s5, 1
        %v1799 = vld [vmem:[%s1798] sm:$0x1]
        %v1801 = vlaneseq
        %v1802 = vshrl.u32 %v1801, 7
        %v1803 = vsub.s32 0, %v1802
        %v1804 = vrot.slane %v1799, %v1803
        %v1806 = vadd.f32 %v1796, %v1804
        %v1807 = vadd.f32 %v1797, %v1804
        %vm1808 = vcmp.ge.f32.partialorder %v1806, 0.0
        %vm1809 = vcmp.ge.f32.partialorder %v1807, 0.0
        %v1810 = vmul.f32 %v1806, 0.01
        %v1811 = vmul.f32 %v1807, 0.01
        %v1812 = vsel %vm1808, %v1806, %v1810
        %v1813 = vsel %vm1809, %v1807, %v1811
        %v1814 = vpack.c.bf16 %v1813, %v1812
        %1815 = vmatprep.subr.bf16.mxu0 0
        %1816 = vmatpush1.bf16.msra.mxu0 %v1814
        %1817 = vmatprep.subr.bf16.mxu0 0
        %1818 = vmatpush1.bf16.msra.mxu0 0
        %1819 = vmatprep.subr.bf16.mxu0 0
        %1820 = vmatpush1.bf16.msra.mxu0 0
        %1821 = vmatprep.subr.bf16.mxu0 0
        %1822 = vmatpush1.bf16.msra.mxu0 0
        %1823 = vmatprep.subr.bf16.mxu0 0
        %1824 = vmatpush1.bf16.msra.mxu0 0
        %1825 = vmatprep.subr.bf16.mxu0 0
        %1826 = vmatpush1.bf16.msra.mxu0 0
        %1827 = vmatprep.subr.bf16.mxu0 0
        %1828 = vmatpush1.bf16.msra.mxu0 0
        %1829 = vmatprep.subr.bf16.mxu0 0
        %1830 = vmatpush1.bf16.msra.mxu0 0
        %1831 = vmatprep.subr.bf16.mxu0 0
        %1832 = vmatpush1.bf16.msra.mxu0 0
        %1833 = vmatprep.subr.bf16.mxu0 0
        %1834 = vmatpush1.bf16.msra.mxu0 0
        %1835 = vmatprep.subr.bf16.mxu0 0
        %1836 = vmatpush1.bf16.msra.mxu0 0
        %1837 = vmatprep.subr.bf16.mxu0 0
        %1838 = vmatpush1.bf16.msra.mxu0 0
        %1839 = vmatprep.subr.bf16.mxu0 0
        %1840 = vmatpush1.bf16.msra.mxu0 0
        %1841 = vmatprep.subr.bf16.mxu0 0
        %1842 = vmatpush1.bf16.msra.mxu0 0
        %1843 = vmatprep.subr.bf16.mxu0 0
        %1844 = vmatpush1.bf16.msra.mxu0 0
        %1845 = vmatprep.subr.bf16.mxu0 0
        %1846 = vmatpush1.bf16.msra.mxu0 0
        %1847 = vmatprep.mubr.bf16.mxu0 0
        %1848 = vmatmul.mubr.bf16.gmra.mrb[0].mxu0 %v1548
        %v1849 = vpop.f32.mrb[0].mxu0
        %v1850 = vadd.f32 0.0, %v1849
        %v1851 = vpop.f32.mrb[0].mxu0
        %v1852 = vpop.f32.mrb[0].mxu0
        %v1853 = vadd.f32 0.0, %v1852
        %v1854 = vpop.f32.mrb[0].mxu0
        %1855 = vdwg.mxu0
        %v1856 = vpack.c.bf16 %v1853, %v1850
        %1857 = vmatprep.subr.bf16.mxu0 0
        %1858 = vmatpush1.bf16.msra.mxu0 %v1814
        %1859 = vmatprep.subr.bf16.mxu0 0
        %1860 = vmatpush1.bf16.msra.mxu0 0
        %1861 = vmatprep.subr.bf16.mxu0 0
        %1862 = vmatpush1.bf16.msra.mxu0 0
        %1863 = vmatprep.subr.bf16.mxu0 0
        %1864 = vmatpush1.bf16.msra.mxu0 0
        %1865 = vmatprep.subr.bf16.mxu0 0
        %1866 = vmatpush1.bf16.msra.mxu0 0
        %1867 = vmatprep.subr.bf16.mxu0 0
        %1868 = vmatpush1.bf16.msra.mxu0 0
        %1869 = vmatprep.subr.bf16.mxu0 0
        %1870 = vmatpush1.bf16.msra.mxu0 0
        %1871 = vmatprep.subr.bf16.mxu0 0
        %1872 = vmatpush1.bf16.msra.mxu0 0
        %1873 = vmatprep.subr.bf16.mxu0 0
        %1874 = vmatpush1.bf16.msra.mxu0 0
        %1875 = vmatprep.subr.bf16.mxu0 0
        %1876 = vmatpush1.bf16.msra.mxu0 0
        %1877 = vmatprep.subr.bf16.mxu0 0
        %1878 = vmatpush1.bf16.msra.mxu0 0
        %1879 = vmatprep.subr.bf16.mxu0 0
        %1880 = vmatpush1.bf16.msra.mxu0 0
        %1881 = vmatprep.subr.bf16.mxu0 0
        %1882 = vmatpush1.bf16.msra.mxu0 0
        %1883 = vmatprep.subr.bf16.mxu0 0
        %1884 = vmatpush1.bf16.msra.mxu0 0
        %1885 = vmatprep.subr.bf16.mxu0 0
        %1886 = vmatpush1.bf16.msra.mxu0 0
        %1887 = vmatprep.subr.bf16.mxu0 0
        %1888 = vmatpush1.bf16.msra.mxu0 0
        %1889 = vmatprep.mubr.bf16.mxu0 0
        %1890 = vmatmul.mubr.bf16.gmra.mrb[0].mxu0 %v1598
        %v1891 = vpop.f32.mrb[0].mxu0
        %v1892 = vadd.f32 0.0, %v1891
        %v1893 = vpop.f32.mrb[0].mxu0
        %v1894 = vpop.f32.mrb[0].mxu0
        %v1895 = vadd.f32 0.0, %v1894
        %v1896 = vpop.f32.mrb[0].mxu0
        %1897 = vdwg.mxu0
        %v1898 = vpack.c.bf16 %v1895, %v1892
        %v1899 = vld [vmem:[#allocation7] sm:$0xf]
        %v1900 = vld [vmem:[#allocation7 + $0x4] sm:$0xf]
        %v1901 = vld [vmem:[#allocation7 + $0x8] sm:$0xf]
        %v1902 = vld [vmem:[#allocation7 + $0xc] sm:$0xf]
        %v1903 = vld [vmem:[#allocation7 + $0x10] sm:$0xf]
        %v1904 = vld [vmem:[#allocation7 + $0x14] sm:$0xf]
        %v1905 = vld [vmem:[#allocation7 + $0x18] sm:$0xf]
        %v1906 = vld [vmem:[#allocation7 + $0x1c] sm:$0xf]
        %v1907 = vld [vmem:[#allocation7 + $0x20] sm:$0xf]
        %v1908 = vld [vmem:[#allocation7 + $0x24] sm:$0xf]
        %v1909 = vld [vmem:[#allocation7 + $0x28] sm:$0xf]
        %v1910 = vld [vmem:[#allocation7 + $0x2c] sm:$0xf]
        %v1911 = vld [vmem:[#allocation7 + $0x30] sm:$0xf]
        %v1912 = vld [vmem:[#allocation7 + $0x34] sm:$0xf]
        %v1913 = vld [vmem:[#allocation7 + $0x38] sm:$0xf]
        %v1914 = vld [vmem:[#allocation7 + $0x3c] sm:$0xf]
        %v1915 = vld [vmem:[#allocation7 + $0x40] sm:$0xf]
        %v1916 = vld [vmem:[#allocation7 + $0x44] sm:$0xf]
        %v1917 = vld [vmem:[#allocation7 + $0x48] sm:$0xf]
        %v1918 = vld [vmem:[#allocation7 + $0x4c] sm:$0xf]
        %v1919 = vld [vmem:[#allocation7 + $0x50] sm:$0xf]
        %v1920 = vld [vmem:[#allocation7 + $0x54] sm:$0xf]
        %v1921 = vld [vmem:[#allocation7 + $0x58] sm:$0xf]
        %v1922 = vld [vmem:[#allocation7 + $0x5c] sm:$0xf]
        %v1923 = vld [vmem:[#allocation7 + $0x60] sm:$0xf]
        %v1924 = vld [vmem:[#allocation7 + $0x64] sm:$0xf]
        %v1925 = vld [vmem:[#allocation7 + $0x68] sm:$0xf]
        %v1926 = vld [vmem:[#allocation7 + $0x6c] sm:$0xf]
        %v1927 = vld [vmem:[#allocation7 + $0x70] sm:$0xf]
        %v1928 = vld [vmem:[#allocation7 + $0x74] sm:$0xf]
        %v1929 = vld [vmem:[#allocation7 + $0x78] sm:$0xf]
        %v1930 = vld [vmem:[#allocation7 + $0x7c] sm:$0xf]
        %v1931 = vld [vmem:[#allocation7 + $0x80] sm:$0xf]
        %v1932 = vld [vmem:[#allocation7 + $0x84] sm:$0xf]
        %v1933 = vld [vmem:[#allocation7 + $0x88] sm:$0xf]
        %v1934 = vld [vmem:[#allocation7 + $0x8c] sm:$0xf]
        %v1935 = vld [vmem:[#allocation7 + $0x90] sm:$0xf]
        %v1936 = vld [vmem:[#allocation7 + $0x94] sm:$0xf]
        %v1937 = vld [vmem:[#allocation7 + $0x98] sm:$0xf]
        %v1938 = vld [vmem:[#allocation7 + $0x9c] sm:$0xf]
        %v1939 = vld [vmem:[#allocation7 + $0xa0] sm:$0xf]
        %v1940 = vld [vmem:[#allocation7 + $0xa4] sm:$0xf]
        %v1941 = vld [vmem:[#allocation7 + $0xa8] sm:$0xf]
        %v1942 = vld [vmem:[#allocation7 + $0xac] sm:$0xf]
        %v1943 = vld [vmem:[#allocation7 + $0xb0] sm:$0xf]
        %v1944 = vld [vmem:[#allocation7 + $0xb4] sm:$0xf]
        %v1945 = vld [vmem:[#allocation7 + $0xb8] sm:$0xf]
        %v1946 = vld [vmem:[#allocation7 + $0xbc] sm:$0xf]
        %v1995 = vunpack.c.l.b16 %v1899
        %v1996 = vunpack.c.l.b16 %v1900
        %v1997 = vunpack.c.l.b16 %v1901
        %v1998 = vunpack.c.l.b16 %v1902
        %v1999 = vunpack.c.l.b16 %v1903
        %v2000 = vunpack.c.l.b16 %v1904
        %v2001 = vunpack.c.l.b16 %v1905
        %v2002 = vunpack.c.l.b16 %v1906
        %v2003 = vunpack.c.l.b16 %v1907
        %v2004 = vunpack.c.l.b16 %v1908
        %v2005 = vunpack.c.l.b16 %v1909
        %v2006 = vunpack.c.l.b16 %v1910
        %v2007 = vunpack.c.l.b16 %v1911
        %v2008 = vunpack.c.l.b16 %v1912
        %v2009 = vunpack.c.l.b16 %v1913
        %v2010 = vunpack.c.l.b16 %v1914
        %v2011 = vunpack.c.l.b16 %v1915
        %v2012 = vunpack.c.l.b16 %v1916
        %v2013 = vunpack.c.l.b16 %v1917
        %v2014 = vunpack.c.l.b16 %v1918
        %v2015 = vunpack.c.l.b16 %v1919
        %v2016 = vunpack.c.l.b16 %v1920
        %v2017 = vunpack.c.l.b16 %v1921
        %v2018 = vunpack.c.l.b16 %v1922
        %v2019 = vunpack.c.l.b16 %v1923
        %v2020 = vunpack.c.l.b16 %v1924
        %v2021 = vunpack.c.l.b16 %v1925
        %v2022 = vunpack.c.l.b16 %v1926
        %v2023 = vunpack.c.l.b16 %v1927
        %v2024 = vunpack.c.l.b16 %v1928
        %v2025 = vunpack.c.l.b16 %v1929
        %v2026 = vunpack.c.l.b16 %v1930
        %v2027 = vunpack.c.l.b16 %v1931
        %v2028 = vunpack.c.l.b16 %v1932
        %v2029 = vunpack.c.l.b16 %v1933
        %v2030 = vunpack.c.l.b16 %v1934
        %v2031 = vunpack.c.l.b16 %v1935
        %v2032 = vunpack.c.l.b16 %v1936
        %v2033 = vunpack.c.l.b16 %v1937
        %v2034 = vunpack.c.l.b16 %v1938
        %v2035 = vunpack.c.l.b16 %v1939
        %v2036 = vunpack.c.l.b16 %v1940
        %v2037 = vunpack.c.l.b16 %v1941
        %v2038 = vunpack.c.l.b16 %v1942
        %v2039 = vunpack.c.l.b16 %v1943
        %v2040 = vunpack.c.l.b16 %v1944
        %v2041 = vunpack.c.l.b16 %v1945
        %v2042 = vunpack.c.l.b16 %v1946
        %v2043 = vpack.c.b16 %v1996, %v1995
        %v2044 = vpack.c.b16 %v1998, %v1997
        %v2045 = vpack.c.b16 %v2000, %v1999
        %v2046 = vpack.c.b16 %v2002, %v2001
        %v2047 = vpack.c.b16 %v2004, %v2003
        %v2048 = vpack.c.b16 %v2006, %v2005
        %v2049 = vpack.c.b16 %v2008, %v2007
        %v2050 = vpack.c.b16 %v2010, %v2009
        %v2051 = vpack.c.b16 %v2012, %v2011
        %v2052 = vpack.c.b16 %v2014, %v2013
        %v2053 = vpack.c.b16 %v2016, %v2015
        %v2054 = vpack.c.b16 %v2018, %v2017
        %v2055 = vpack.c.b16 %v2020, %v2019
        %v2056 = vpack.c.b16 %v2022, %v2021
        %v2057 = vpack.c.b16 %v2024, %v2023
        %v2058 = vpack.c.b16 %v2026, %v2025
        %v2059 = vpack.c.b16 %v2028, %v2027
        %v2060 = vpack.c.b16 %v2030, %v2029
        %v2061 = vpack.c.b16 %v2032, %v2031
        %v2062 = vpack.c.b16 %v2034, %v2033
        %v2063 = vpack.c.b16 %v2036, %v2035
        %v2064 = vpack.c.b16 %v2038, %v2037
        %v2065 = vpack.c.b16 %v2040, %v2039
        %v2066 = vpack.c.b16 %v2042, %v2041
        %2091 = vmatprep.subr.bf16.mxu0 0
        %2092 = vmatpush1.bf16.msra.mxu0 %v2043
        %2093 = vmatprep.subr.bf16.mxu0 0
        %2094 = vmatpush1.bf16.msra.mxu0 %v2044
        %2095 = vmatprep.subr.bf16.mxu0 0
        %2096 = vmatpush1.bf16.msra.mxu0 %v2045
        %2097 = vmatprep.subr.bf16.mxu0 0
        %2098 = vmatpush1.bf16.msra.mxu0 %v2046
        %2099 = vmatprep.subr.bf16.mxu0 0
        %2100 = vmatpush1.bf16.msra.mxu0 %v2047
        %2101 = vmatprep.subr.bf16.mxu0 0
        %2102 = vmatpush1.bf16.msra.mxu0 %v2048
        %2103 = vmatprep.subr.bf16.mxu0 0
        %2104 = vmatpush1.bf16.msra.mxu0 %v2049
        %2105 = vmatprep.subr.bf16.mxu0 0
        %2106 = vmatpush1.bf16.msra.mxu0 %v2050
        %2107 = vmatprep.subr.bf16.mxu0 0
        %2108 = vmatpush1.bf16.msra.mxu0 %v2051
        %2109 = vmatprep.subr.bf16.mxu0 0
        %2110 = vmatpush1.bf16.msra.mxu0 %v2052
        %2111 = vmatprep.subr.bf16.mxu0 0
        %2112 = vmatpush1.bf16.msra.mxu0 %v2053
        %2113 = vmatprep.subr.bf16.mxu0 0
        %2114 = vmatpush1.bf16.msra.mxu0 %v2054
        %2115 = vmatprep.subr.bf16.mxu0 0
        %2116 = vmatpush1.bf16.msra.mxu0 %v2055
        %2117 = vmatprep.subr.bf16.mxu0 0
        %2118 = vmatpush1.bf16.msra.mxu0 %v2056
        %2119 = vmatprep.subr.bf16.mxu0 0
        %2120 = vmatpush1.bf16.msra.mxu0 %v2057
        %2121 = vmatprep.subr.bf16.mxu0 0
        %2122 = vmatpush1.bf16.msra.mxu0 %v2058
        %2123 = vmatprep.mubr.bf16.mxu0 %v1814
        %2124 = vmatmul.mubr.bf16.gmra.mrb[0].mxu0 %v1856
        %v2125 = vpop.f32.mrb[0].mxu0
        %v2126 = vadd.f32 0.0, %v2125
        %v2127 = vpop.f32.mrb[0].mxu0
        %v2128 = vpop.f32.mrb[0].mxu0
        %v2129 = vadd.f32 0.0, %v2128
        %v2130 = vpop.f32.mrb[0].mxu0
        %2131 = vdwg.mxu0
        %2132 = vmatprep.subr.bf16.mxu0 0
        %2133 = vmatpush1.bf16.msra.mxu0 %v2059
        %2134 = vmatprep.subr.bf16.mxu0 0
        %2135 = vmatpush1.bf16.msra.mxu0 %v2060
        %2136 = vmatprep.subr.bf16.mxu0 0
        %2137 = vmatpush1.bf16.msra.mxu0 %v2061
        %2138 = vmatprep.subr.bf16.mxu0 0
        %2139 = vmatpush1.bf16.msra.mxu0 %v2062
        %2140 = vmatprep.subr.bf16.mxu0 0
        %2141 = vmatpush1.bf16.msra.mxu0 %v2063
        %2142 = vmatprep.subr.bf16.mxu0 0
        %2143 = vmatpush1.bf16.msra.mxu0 %v2064
        %2144 = vmatprep.subr.bf16.mxu0 0
        %2145 = vmatpush1.bf16.msra.mxu0 %v2065
        %2146 = vmatprep.subr.bf16.mxu0 0
        %2147 = vmatpush1.bf16.msra.mxu0 %v2066
        %2148 = vmatprep.subr.bf16.mxu0 0
        %2149 = vmatpush1.bf16.msra.mxu0 0
        %2150 = vmatprep.subr.bf16.mxu0 0
        %2151 = vmatpush1.bf16.msra.mxu0 0
        %2152 = vmatprep.subr.bf16.mxu0 0
        %2153 = vmatpush1.bf16.msra.mxu0 0
        %2154 = vmatprep.subr.bf16.mxu0 0
        %2155 = vmatpush1.bf16.msra.mxu0 0
        %2156 = vmatprep.subr.bf16.mxu0 0
        %2157 = vmatpush1.bf16.msra.mxu0 0
        %2158 = vmatprep.subr.bf16.mxu0 0
        %2159 = vmatpush1.bf16.msra.mxu0 0
        %2160 = vmatprep.subr.bf16.mxu0 0
        %2161 = vmatpush1.bf16.msra.mxu0 0
        %2162 = vmatprep.subr.bf16.mxu0 0
        %2163 = vmatpush1.bf16.msra.mxu0 0
        %2164 = vmatprep.mubr.bf16.mxu0 0
        %2165 = vmatmul.mubr.bf16.gmra.mrb[0].mxu0 %v1898
        %v2166 = vpop.f32.mrb[0].mxu0
        %v2167 = vadd.f32 %v2126, %v2166
        %v2168 = vpop.f32.mrb[0].mxu0
        %v2169 = vpop.f32.mrb[0].mxu0
        %v2170 = vadd.f32 %v2129, %v2169
        %v2171 = vpop.f32.mrb[0].mxu0
        %2172 = vdwg.mxu0
        %v2173 = vld [vmem:[#allocation8] sm:$0x1]
        %v2175 = vlaneseq
        %v2176 = vshrl.u32 %v2175, 7
        %v2177 = vsub.s32 0, %v2176
        %v2178 = vrot.slane %v2173, %v2177
        %v2180 = vmul.f32 %v2167, %v2178
        %v2181 = vmul.f32 %v2170, %v2178
        %s2182 = scalar_lea.vmem [#allocation8], 1
        %v2183 = vld [vmem:[%s2182] sm:$0x1]
        %v2185 = vlaneseq
        %v2186 = vshrl.u32 %v2185, 7
        %v2187 = vsub.s32 0, %v2186
        %v2188 = vrot.slane %v2183, %v2187
        %v2190 = vadd.f32 %v2180, %v2188
        %v2191 = vadd.f32 %v2181, %v2188
        %vm2192 = vcmp.ge.f32.partialorder %v2190, 0.0
        %vm2193 = vcmp.ge.f32.partialorder %v2191, 0.0
        %v2194 = vmul.f32 %v2190, 0.01
        %v2195 = vmul.f32 %v2191, 0.01
        %v2196 = vsel %vm2192, %v2190, %v2194
        %v2197 = vsel %vm2193, %v2191, %v2195
        %2198 = vst [vmem:[%s1499] sm:$0xff] %v2196
        %2199 = vst [vmem:[%s1499 + $0x8] sm:$0xff] %v2197
        %v2200 = vpack.c.bf16 %v2197, %v2196
        %v2201 = vld [vmem:[%s51] sm:$0xf]
        %v2202 = vld [vmem:[%s51 + $0x4] sm:$0xf]
        %v2203 = vld [vmem:[%s51 + $0x8] sm:$0xf]
        %v2204 = vld [vmem:[%s51 + $0xc] sm:$0xf]
        %v2205 = vld [vmem:[%s51 + $0x10] sm:$0xf]
        %v2206 = vld [vmem:[%s51 + $0x14] sm:$0xf]
        %v2207 = vld [vmem:[%s51 + $0x18] sm:$0xf]
        %v2208 = vld [vmem:[%s51 + $0x1c] sm:$0xf]
        %v2209 = vld [vmem:[%s51 + $0x20] sm:$0xf]
        %v2210 = vld [vmem:[%s51 + $0x24] sm:$0xf]
        %v2211 = vld [vmem:[%s51 + $0x28] sm:$0xf]
        %v2212 = vld [vmem:[%s51 + $0x2c] sm:$0xf]
        %v2213 = vld [vmem:[%s51 + $0x30] sm:$0xf]
        %v2214 = vld [vmem:[%s51 + $0x34] sm:$0xf]
        %v2215 = vld [vmem:[%s51 + $0x38] sm:$0xf]
        %v2216 = vld [vmem:[%s51 + $0x3c] sm:$0xf]
        %v2233 = vunpack.c.l.b16 %v2201
        %v2234 = vunpack.c.l.b16 %v2202
        %v2235 = vunpack.c.l.b16 %v2203
        %v2236 = vunpack.c.l.b16 %v2204
        %v2237 = vunpack.c.l.b16 %v2205
        %v2238 = vunpack.c.l.b16 %v2206
        %v2239 = vunpack.c.l.b16 %v2207
        %v2240 = vunpack.c.l.b16 %v2208
        %v2241 = vunpack.c.l.b16 %v2209
        %v2242 = vunpack.c.l.b16 %v2210
        %v2243 = vunpack.c.l.b16 %v2211
        %v2244 = vunpack.c.l.b16 %v2212
        %v2245 = vunpack.c.l.b16 %v2213
        %v2246 = vunpack.c.l.b16 %v2214
        %v2247 = vunpack.c.l.b16 %v2215
        %v2248 = vunpack.c.l.b16 %v2216
        %v2249 = vpack.c.b16 %v2234, %v2233
        %v2250 = vpack.c.b16 %v2236, %v2235
        %v2251 = vpack.c.b16 %v2238, %v2237
        %v2252 = vpack.c.b16 %v2240, %v2239
        %v2253 = vpack.c.b16 %v2242, %v2241
        %v2254 = vpack.c.b16 %v2244, %v2243
        %v2255 = vpack.c.b16 %v2246, %v2245
        %v2256 = vpack.c.b16 %v2248, %v2247
        %2265 = vmatprep.subr.bf16.mxu0 0
        %2266 = vmatpush1.bf16.msra.mxu0 %v2249
        %2267 = vmatprep.subr.bf16.mxu0 0
        %2268 = vmatpush1.bf16.msra.mxu0 %v2250
        %2269 = vmatprep.subr.bf16.mxu0 0
        %2270 = vmatpush1.bf16.msra.mxu0 %v2251
        %2271 = vmatprep.subr.bf16.mxu0 0
        %2272 = vmatpush1.bf16.msra.mxu0 %v2252
        %2273 = vmatprep.subr.bf16.mxu0 0
        %2274 = vmatpush1.bf16.msra.mxu0 %v2253
        %2275 = vmatprep.subr.bf16.mxu0 0
        %2276 = vmatpush1.bf16.msra.mxu0 %v2254
        %2277 = vmatprep.subr.bf16.mxu0 0
        %2278 = vmatpush1.bf16.msra.mxu0 %v2255
        %2279 = vmatprep.subr.bf16.mxu0 0
        %2280 = vmatpush1.bf16.msra.mxu0 %v2256
        %2281 = vmatprep.subr.bf16.mxu0 0
        %2282 = vmatpush1.bf16.msra.mxu0 0
        %2283 = vmatprep.subr.bf16.mxu0 0
        %2284 = vmatpush1.bf16.msra.mxu0 0
        %2285 = vmatprep.subr.bf16.mxu0 0
        %2286 = vmatpush1.bf16.msra.mxu0 0
        %2287 = vmatprep.subr.bf16.mxu0 0
        %2288 = vmatpush1.bf16.msra.mxu0 0
        %2289 = vmatprep.subr.bf16.mxu0 0
        %2290 = vmatpush1.bf16.msra.mxu0 0
        %2291 = vmatprep.subr.bf16.mxu0 0
        %2292 = vmatpush1.bf16.msra.mxu0 0
        %2293 = vmatprep.subr.bf16.mxu0 0
        %2294 = vmatpush1.bf16.msra.mxu0 0
        %2295 = vmatprep.subr.bf16.mxu0 0
        %2296 = vmatpush1.bf16.msra.mxu0 0
        %2297 = vmatprep.mubr.bf16.mxu0 0
        %2298 = vmatmul.mubr.bf16.gmra.mrb[0].mxu0 %v2200
        %v2299 = vpop.f32.mrb[0].mxu0
        %v2300 = vadd.f32 0.0, %v2299
        %v2301 = vpop.f32.mrb[0].mxu0
        %v2302 = vpop.f32.mrb[0].mxu0
        %v2303 = vadd.f32 0.0, %v2302
        %v2304 = vpop.f32.mrb[0].mxu0
        %2305 = vdwg.mxu0
        %2308 = vrot.lane.b32.xlu0 %v2300, 64
        %v2309 = vpop.permute.xlu0 %2308
        %2310 = vrot.lane.b32.xlu0 %v2303, 64
        %v2311 = vpop.permute.xlu0 %2310
        %v2314 = vmax.f32 %v2300, %v2309
        %v2315 = vmax.f32 %v2303, %v2311
        %v2316 = vpack.c.bf16 %v2315, %v2314
        %v2317 = vld [vmem:[%s53] sm:$0xf]
        %v2318 = vld [vmem:[%s53 + $0x4] sm:$0xf]
        %v2321 = vunpack.c.l.b16 %v2317
        %v2322 = vunpack.c.l.b16 %v2318
        %v2323 = vpack.c.b16 %v2322, %v2321
        %v2325 = vsel %vm1546, %v2323, 0
        %2327 = vmatprep.subr.bf16.mxu0 0
        %2328 = vmatpush1.bf16.msra.mxu0 %v2316
        %2329 = vmatprep.subr.bf16.mxu0 0
        %2330 = vmatpush1.bf16.msra.mxu0 0
        %2331 = vmatprep.subr.bf16.mxu0 0
        %2332 = vmatpush1.bf16.msra.mxu0 0
        %2333 = vmatprep.subr.bf16.mxu0 0
        %2334 = vmatpush1.bf16.msra.mxu0 0
        %2335 = vmatprep.subr.bf16.mxu0 0
        %2336 = vmatpush1.bf16.msra.mxu0 0
        %2337 = vmatprep.subr.bf16.mxu0 0
        %2338 = vmatpush1.bf16.msra.mxu0 0
        %2339 = vmatprep.subr.bf16.mxu0 0
        %2340 = vmatpush1.bf16.msra.mxu0 0
        %2341 = vmatprep.subr.bf16.mxu0 0
        %2342 = vmatpush1.bf16.msra.mxu0 0
        %2343 = vmatprep.subr.bf16.mxu0 0
        %2344 = vmatpush1.bf16.msra.mxu0 0
        %2345 = vmatprep.subr.bf16.mxu0 0
        %2346 = vmatpush1.bf16.msra.mxu0 0
        %2347 = vmatprep.subr.bf16.mxu0 0
        %2348 = vmatpush1.bf16.msra.mxu0 0
        %2349 = vmatprep.subr.bf16.mxu0 0
        %2350 = vmatpush1.bf16.msra.mxu0 0
        %2351 = vmatprep.subr.bf16.mxu0 0
        %2352 = vmatpush1.bf16.msra.mxu0 0
        %2353 = vmatprep.subr.bf16.mxu0 0
        %2354 = vmatpush1.bf16.msra.mxu0 0
        %2355 = vmatprep.subr.bf16.mxu0 0
        %2356 = vmatpush1.bf16.msra.mxu0 0
        %2357 = vmatprep.subr.bf16.mxu0 0
        %2358 = vmatpush1.bf16.msra.mxu0 0
        %2359 = vmatprep.mubr.bf16.mxu0 0
        %2360 = vmatmul.mubr.bf16.gmra.mrb[0].mxu0 %v2325
        %v2361 = vpop.f32.mrb[0].mxu0
        %v2362 = vadd.f32 0.0, %v2361
        %v2363 = vpop.f32.mrb[0].mxu0
        %v2364 = vpop.f32.mrb[0].mxu0
        %v2365 = vadd.f32 0.0, %v2364
        %v2366 = vpop.f32.mrb[0].mxu0
        %2367 = vdwg.mxu0
        %v2368 = vmax.f32 %v2362, %v2365
        %v2369 = vpack.c.bf16 %v2368, %v2368
        %v2370 = vld [vmem:[%s45] sm:$0xf]
        %s2371 = scalar_lea.vmem %s45, 4
        %v2372 = vld [vmem:[%s2371] sm:$0xf]
        %vm2373 = vcmask 64512
        %v2375 = vsel %vm2373, %v2370, 0
        %vm2377 = vcmask 1043456
        %v2379 = vsel %vm2377, %v2369, 0
        %2381 = vmatprep.subr.bf16.mxu0 0
        %2382 = vmatpush1.bf16.msra.mxu0 %v2379
        %2383 = vmatprep.subr.bf16.mxu0 0
        %2384 = vmatpush1.bf16.msra.mxu0 0
        %2385 = vmatprep.subr.bf16.mxu0 0
        %2386 = vmatpush1.bf16.msra.mxu0 0
        %2387 = vmatprep.subr.bf16.mxu0 0
        %2388 = vmatpush1.bf16.msra.mxu0 0
        %2389 = vmatprep.subr.bf16.mxu0 0
        %2390 = vmatpush1.bf16.msra.mxu0 0
        %2391 = vmatprep.subr.bf16.mxu0 0
        %2392 = vmatpush1.bf16.msra.mxu0 0
        %2393 = vmatprep.subr.bf16.mxu0 0
        %2394 = vmatpush1.bf16.msra.mxu0 0
        %2395 = vmatprep.subr.bf16.mxu0 0
        %2396 = vmatpush1.bf16.msra.mxu0 0
        %2397 = vmatprep.subr.bf16.mxu0 0
        %2398 = vmatpush1.bf16.msra.mxu0 0
        %2399 = vmatprep.subr.bf16.mxu0 0
        %2400 = vmatpush1.bf16.msra.mxu0 0
        %2401 = vmatprep.subr.bf16.mxu0 0
        %2402 = vmatpush1.bf16.msra.mxu0 0
        %2403 = vmatprep.subr.bf16.mxu0 0
        %2404 = vmatpush1.bf16.msra.mxu0 0
        %2405 = vmatprep.subr.bf16.mxu0 0
        %2406 = vmatpush1.bf16.msra.mxu0 0
        %2407 = vmatprep.subr.bf16.mxu0 0
        %2408 = vmatpush1.bf16.msra.mxu0 0
        %2409 = vmatprep.subr.bf16.mxu0 0
        %2410 = vmatpush1.bf16.msra.mxu0 0
        %2411 = vmatprep.subr.bf16.mxu0 0
        %2412 = vmatpush1.bf16.msra.mxu0 0
        %2413 = vmatprep.mubr.bf16.mxu0 0
        %2414 = vmatmul.mubr.bf16.gmra.mrb[0].mxu0 %v2375
        %v2415 = vpop.f32.mrb[0].mxu0
        %v2416 = vadd.f32 0.0, %v2415
        %v2417 = vpop.f32.mrb[0].mxu0
        %v2418 = vpop.f32.mrb[0].mxu0
        %v2419 = vpop.f32.mrb[0].mxu0
        %2420 = vdwg.mxu0
        %v2421 = vpack.c.bf16 %v2416, %v2416
        %v2423 = vsel %vm2373, %v2372, 0
        %2425 = vmatprep.subr.bf16.mxu0 0
        %2426 = vmatpush1.bf16.msra.mxu0 %v2379
        %2427 = vmatprep.subr.bf16.mxu0 0
        %2428 = vmatpush1.bf16.msra.mxu0 0
        %2429 = vmatprep.subr.bf16.mxu0 0
        %2430 = vmatpush1.bf16.msra.mxu0 0
        %2431 = vmatprep.subr.bf16.mxu0 0
        %2432 = vmatpush1.bf16.msra.mxu0 0
        %2433 = vmatprep.subr.bf16.mxu0 0
        %2434 = vmatpush1.bf16.msra.mxu0 0
        %2435 = vmatprep.subr.bf16.mxu0 0
        %2436 = vmatpush1.bf16.msra.mxu0 0
        %2437 = vmatprep.subr.bf16.mxu0 0
        %2438 = vmatpush1.bf16.msra.mxu0 0
        %2439 = vmatprep.subr.bf16.mxu0 0
        %2440 = vmatpush1.bf16.msra.mxu0 0
        %2441 = vmatprep.subr.bf16.mxu0 0
        %2442 = vmatpush1.bf16.msra.mxu0 0
        %2443 = vmatprep.subr.bf16.mxu0 0
        %2444 = vmatpush1.bf16.msra.mxu0 0
        %2445 = vmatprep.subr.bf16.mxu0 0
        %2446 = vmatpush1.bf16.msra.mxu0 0
        %2447 = vmatprep.subr.bf16.mxu0 0
        %2448 = vmatpush1.bf16.msra.mxu0 0
        %2449 = vmatprep.subr.bf16.mxu0 0
        %2450 = vmatpush1.bf16.msra.mxu0 0
        %2451 = vmatprep.subr.bf16.mxu0 0
        %2452 = vmatpush1.bf16.msra.mxu0 0
        %2453 = vmatprep.subr.bf16.mxu0 0
        %2454 = vmatpush1.bf16.msra.mxu0 0
        %2455 = vmatprep.subr.bf16.mxu0 0
        %2456 = vmatpush1.bf16.msra.mxu0 0
        %2457 = vmatprep.mubr.bf16.mxu0 0
        %2458 = vmatmul.mubr.bf16.gmra.mrb[0].mxu0 %v2423
        %v2459 = vpop.f32.mrb[0].mxu0
        %v2460 = vadd.f32 0.0, %v2459
        %v2461 = vpop.f32.mrb[0].mxu0
        %v2462 = vpop.f32.mrb[0].mxu0
        %v2463 = vpop.f32.mrb[0].mxu0
        %2464 = vdwg.mxu0
        %v2465 = vpack.c.bf16 %v2460, %v2460
        %2467 = vrot.lane.b32.xlu0 %v2369, 64
        %v2468 = vpop.permute.xlu0 %2467
        %v2471 = vsel %vm1644, %v2421, %v2468
        %v2473 = vld [vmem:[#allocation10] sm:$0xf]
        %v2474 = vld [vmem:[#allocation10 + $0x4] sm:$0xf]
        %v2475 = vld [vmem:[#allocation10 + $0x8] sm:$0xf]
        %v2476 = vld [vmem:[#allocation10 + $0xc] sm:$0xf]
        %v2477 = vld [vmem:[#allocation10 + $0x10] sm:$0xf]
        %v2478 = vld [vmem:[#allocation10 + $0x14] sm:$0xf]
        %v2479 = vld [vmem:[#allocation10 + $0x18] sm:$0xf]
        %v2480 = vld [vmem:[#allocation10 + $0x1c] sm:$0xf]
        %v2481 = vld [vmem:[#allocation10 + $0x20] sm:$0xf]
        %v2482 = vld [vmem:[#allocation10 + $0x24] sm:$0xf]
        %v2483 = vld [vmem:[#allocation10 + $0x28] sm:$0xf]
        %v2484 = vld [vmem:[#allocation10 + $0x2c] sm:$0xf]
        %v2485 = vld [vmem:[#allocation10 + $0x30] sm:$0xf]
        %v2486 = vld [vmem:[#allocation10 + $0x34] sm:$0xf]
        %v2487 = vld [vmem:[#allocation10 + $0x38] sm:$0xf]
        %v2488 = vld [vmem:[#allocation10 + $0x3c] sm:$0xf]
        %v2489 = vld [vmem:[#allocation10 + $0x40] sm:$0xf]
        %v2490 = vld [vmem:[#allocation10 + $0x44] sm:$0xf]
        %v2491 = vld [vmem:[#allocation10 + $0x48] sm:$0xf]
        %v2492 = vld [vmem:[#allocation10 + $0x4c] sm:$0xf]
        %v2493 = vld [vmem:[#allocation10 + $0x50] sm:$0xf]
        %v2494 = vld [vmem:[#allocation10 + $0x54] sm:$0xf]
        %v2495 = vld [vmem:[#allocation10 + $0x58] sm:$0xf]
        %v2496 = vld [vmem:[#allocation10 + $0x5c] sm:$0xf]
        %v2521 = vunpack.c.l.b16 %v2473
        %v2522 = vunpack.c.l.b16 %v2474
        %v2523 = vunpack.c.l.b16 %v2475
        %v2524 = vunpack.c.l.b16 %v2476
        %v2525 = vunpack.c.l.b16 %v2477
        %v2526 = vunpack.c.l.b16 %v2478
        %v2527 = vunpack.c.l.b16 %v2479
        %v2528 = vunpack.c.l.b16 %v2480
        %v2529 = vunpack.c.l.b16 %v2481
        %v2530 = vunpack.c.l.b16 %v2482
        %v2531 = vunpack.c.l.b16 %v2483
        %v2532 = vunpack.c.l.b16 %v2484
        %v2533 = vunpack.c.l.b16 %v2485
        %v2534 = vunpack.c.l.b16 %v2486
        %v2535 = vunpack.c.l.b16 %v2487
        %v2536 = vunpack.c.l.b16 %v2488
        %v2537 = vunpack.c.l.b16 %v2489
        %v2538 = vunpack.c.l.b16 %v2490
        %v2539 = vunpack.c.l.b16 %v2491
        %v2540 = vunpack.c.l.b16 %v2492
        %v2541 = vunpack.c.l.b16 %v2493
        %v2542 = vunpack.c.l.b16 %v2494
        %v2543 = vunpack.c.l.b16 %v2495
        %v2544 = vunpack.c.l.b16 %v2496
        %v2545 = vpack.c.b16 %v2522, %v2521
        %v2546 = vpack.c.b16 %v2524, %v2523
        %v2547 = vpack.c.b16 %v2526, %v2525
        %v2548 = vpack.c.b16 %v2528, %v2527
        %v2549 = vpack.c.b16 %v2530, %v2529
        %v2550 = vpack.c.b16 %v2532, %v2531
        %v2551 = vpack.c.b16 %v2534, %v2533
        %v2552 = vpack.c.b16 %v2536, %v2535
        %v2553 = vpack.c.b16 %v2538, %v2537
        %v2554 = vpack.c.b16 %v2540, %v2539
        %v2555 = vpack.c.b16 %v2542, %v2541
        %v2556 = vpack.c.b16 %v2544, %v2543
        %v2570 = vsel %vm1644, %v2465, 0
        %2572 = vmatprep.subr.bf16.mxu0 0
        %2573 = vmatpush1.bf16.msra.mxu0 %v2545
        %2574 = vmatprep.subr.bf16.mxu0 0
        %2575 = vmatpush1.bf16.msra.mxu0 %v2546
        %2576 = vmatprep.subr.bf16.mxu0 0
        %2577 = vmatpush1.bf16.msra.mxu0 %v2547
        %2578 = vmatprep.subr.bf16.mxu0 0
        %2579 = vmatpush1.bf16.msra.mxu0 %v2548
        %2580 = vmatprep.subr.bf16.mxu0 0
        %2581 = vmatpush1.bf16.msra.mxu0 %v2549
        %2582 = vmatprep.subr.bf16.mxu0 0
        %2583 = vmatpush1.bf16.msra.mxu0 %v2550
        %2584 = vmatprep.subr.bf16.mxu0 0
        %2585 = vmatpush1.bf16.msra.mxu0 %v2551
        %2586 = vmatprep.subr.bf16.mxu0 0
        %2587 = vmatpush1.bf16.msra.mxu0 %v2552
        %2588 = vmatprep.subr.bf16.mxu0 0
        %2589 = vmatpush1.bf16.msra.mxu0 %v2553
        %2590 = vmatprep.subr.bf16.mxu0 0
        %2591 = vmatpush1.bf16.msra.mxu0 %v2554
        %2592 = vmatprep.subr.bf16.mxu0 0
        %2593 = vmatpush1.bf16.msra.mxu0 %v2555
        %2594 = vmatprep.subr.bf16.mxu0 0
        %2595 = vmatpush1.bf16.msra.mxu0 %v2556
        %2596 = vmatprep.subr.bf16.mxu0 0
        %2597 = vmatpush1.bf16.msra.mxu0 0
        %2598 = vmatprep.subr.bf16.mxu0 0
        %2599 = vmatpush1.bf16.msra.mxu0 0
        %2600 = vmatprep.subr.bf16.mxu0 0
        %2601 = vmatpush1.bf16.msra.mxu0 0
        %2602 = vmatprep.subr.bf16.mxu0 0
        %2603 = vmatpush1.bf16.msra.mxu0 0
        %2604 = vmatprep.mubr.bf16.mxu0 %v2570
        %2605 = vmatmul.mubr.bf16.gmra.mrb[0].mxu0 %v2471
        %v2606 = vpop.f32.mrb[0].mxu0
        %v2607 = vadd.f32 0.0, %v2606
        %v2608 = vpop.f32.mrb[0].mxu0
        %v2609 = vpop.f32.mrb[0].mxu0
        %v2610 = vpop.f32.mrb[0].mxu0
        %2611 = vdwg.mxu0
        %v2612 = vld [vmem:[#allocation11] sm:$0x1]
        %v2614 = vlaneseq
        %v2615 = vshrl.u32 %v2614, 7
        %v2616 = vsub.s32 0, %v2615
        %v2617 = vrot.slane %v2612, %v2616
        %v2619 = vmul.f32 %v2607, %v2617
        %s2620 = scalar_lea.vmem [#allocation11], 1
        %v2621 = vld [vmem:[%s2620] sm:$0x1]
        %v2623 = vlaneseq
        %v2624 = vshrl.u32 %v2623, 7
        %v2625 = vsub.s32 0, %v2624
        %v2626 = vrot.slane %v2621, %v2625
        %v2628 = vadd.f32 %v2619, %v2626
        %vm2629 = vcmp.ge.f32.partialorder %v2628, 0.0
        %v2630 = vmul.f32 %v2628, 0.01
        %v2631 = vsel %vm2629, %v2628, %v2630
        %v2632 = vpack.c.bf16 %v2631, %v2631
        %v2634 = vsel %vm2377, %v2632, 0
        %2636 = vmatprep.subr.bf16.mxu0 0
        %2637 = vmatpush1.bf16.msra.mxu0 %v2634
        %2638 = vmatprep.subr.bf16.mxu0 0
        %2639 = vmatpush1.bf16.msra.mxu0 0
        %2640 = vmatprep.subr.bf16.mxu0 0
        %2641 = vmatpush1.bf16.msra.mxu0 0
        %2642 = vmatprep.subr.bf16.mxu0 0
        %2643 = vmatpush1.bf16.msra.mxu0 0
        %2644 = vmatprep.subr.bf16.mxu0 0
        %2645 = vmatpush1.bf16.msra.mxu0 0
        %2646 = vmatprep.subr.bf16.mxu0 0
        %2647 = vmatpush1.bf16.msra.mxu0 0
        %2648 = vmatprep.subr.bf16.mxu0 0
        %2649 = vmatpush1.bf16.msra.mxu0 0
        %2650 = vmatprep.subr.bf16.mxu0 0
        %2651 = vmatpush1.bf16.msra.mxu0 0
        %2652 = vmatprep.subr.bf16.mxu0 0
        %2653 = vmatpush1.bf16.msra.mxu0 0
        %2654 = vmatprep.subr.bf16.mxu0 0
        %2655 = vmatpush1.bf16.msra.mxu0 0
        %2656 = vmatprep.subr.bf16.mxu0 0
        %2657 = vmatpush1.bf16.msra.mxu0 0
        %2658 = vmatprep.subr.bf16.mxu0 0
        %2659 = vmatpush1.bf16.msra.mxu0 0
        %2660 = vmatprep.subr.bf16.mxu0 0
        %2661 = vmatpush1.bf16.msra.mxu0 0
        %2662 = vmatprep.subr.bf16.mxu0 0
        %2663 = vmatpush1.bf16.msra.mxu0 0
        %2664 = vmatprep.subr.bf16.mxu0 0
        %2665 = vmatpush1.bf16.msra.mxu0 0
        %2666 = vmatprep.subr.bf16.mxu0 0
        %2667 = vmatpush1.bf16.msra.mxu0 0
        %2668 = vmatprep.mubr.bf16.mxu0 0
        %2669 = vmatmul.mubr.bf16.gmra.mrb[0].mxu0 %v2375
        %v2670 = vpop.f32.mrb[0].mxu0
        %v2671 = vadd.f32 0.0, %v2670
        %v2672 = vpop.f32.mrb[0].mxu0
        %v2673 = vpop.f32.mrb[0].mxu0
        %v2674 = vpop.f32.mrb[0].mxu0
        %2675 = vdwg.mxu0
        %v2676 = vpack.c.bf16 %v2671, %v2671
        %2677 = vmatprep.subr.bf16.mxu0 0
        %2678 = vmatpush1.bf16.msra.mxu0 %v2634
        %2679 = vmatprep.subr.bf16.mxu0 0
        %2680 = vmatpush1.bf16.msra.mxu0 0
        %2681 = vmatprep.subr.bf16.mxu0 0
        %2682 = vmatpush1.bf16.msra.mxu0 0
        %2683 = vmatprep.subr.bf16.mxu0 0
        %2684 = vmatpush1.bf16.msra.mxu0 0
        %2685 = vmatprep.subr.bf16.mxu0 0
        %2686 = vmatpush1.bf16.msra.mxu0 0
        %2687 = vmatprep.subr.bf16.mxu0 0
        %2688 = vmatpush1.bf16.msra.mxu0 0
        %2689 = vmatprep.subr.bf16.mxu0 0
        %2690 = vmatpush1.bf16.msra.mxu0 0
        %2691 = vmatprep.subr.bf16.mxu0 0
        %2692 = vmatpush1.bf16.msra.mxu0 0
        %2693 = vmatprep.subr.bf16.mxu0 0
        %2694 = vmatpush1.bf16.msra.mxu0 0
        %2695 = vmatprep.subr.bf16.mxu0 0
        %2696 = vmatpush1.bf16.msra.mxu0 0
        %2697 = vmatprep.subr.bf16.mxu0 0
        %2698 = vmatpush1.bf16.msra.mxu0 0
        %2699 = vmatprep.subr.bf16.mxu0 0
        %2700 = vmatpush1.bf16.msra.mxu0 0
        %2701 = vmatprep.subr.bf16.mxu0 0
        %2702 = vmatpush1.bf16.msra.mxu0 0
        %2703 = vmatprep.subr.bf16.mxu0 0
        %2704 = vmatpush1.bf16.msra.mxu0 0
        %2705 = vmatprep.subr.bf16.mxu0 0
        %2706 = vmatpush1.bf16.msra.mxu0 0
        %2707 = vmatprep.subr.bf16.mxu0 0
        %2708 = vmatpush1.bf16.msra.mxu0 0
        %2709 = vmatprep.mubr.bf16.mxu0 0
        %2710 = vmatmul.mubr.bf16.gmra.mrb[0].mxu0 %v2423
        %v2711 = vpop.f32.mrb[0].mxu0
        %v2712 = vadd.f32 0.0, %v2711
        %v2713 = vpop.f32.mrb[0].mxu0
        %v2714 = vpop.f32.mrb[0].mxu0
        %v2715 = vpop.f32.mrb[0].mxu0
        %2716 = vdwg.mxu0
        %v2717 = vpack.c.bf16 %v2712, %v2712
        %v2718 = vld [vmem:[#allocation13] sm:$0xf]
        %v2719 = vld [vmem:[#allocation13 + $0x4] sm:$0xf]
        %v2720 = vld [vmem:[#allocation13 + $0x8] sm:$0xf]
        %v2721 = vld [vmem:[#allocation13 + $0xc] sm:$0xf]
        %v2722 = vld [vmem:[#allocation13 + $0x10] sm:$0xf]
        %v2723 = vld [vmem:[#allocation13 + $0x14] sm:$0xf]
        %v2724 = vld [vmem:[#allocation13 + $0x18] sm:$0xf]
        %v2725 = vld [vmem:[#allocation13 + $0x1c] sm:$0xf]
        %v2726 = vld [vmem:[#allocation13 + $0x20] sm:$0xf]
        %v2727 = vld [vmem:[#allocation13 + $0x24] sm:$0xf]
        %v2728 = vld [vmem:[#allocation13 + $0x28] sm:$0xf]
        %v2729 = vld [vmem:[#allocation13 + $0x2c] sm:$0xf]
        %v2730 = vld [vmem:[#allocation13 + $0x30] sm:$0xf]
        %v2731 = vld [vmem:[#allocation13 + $0x34] sm:$0xf]
        %v2732 = vld [vmem:[#allocation13 + $0x38] sm:$0xf]
        %v2733 = vld [vmem:[#allocation13 + $0x3c] sm:$0xf]
        %v2734 = vld [vmem:[#allocation13 + $0x40] sm:$0xf]
        %v2735 = vld [vmem:[#allocation13 + $0x44] sm:$0xf]
        %v2736 = vld [vmem:[#allocation13 + $0x48] sm:$0xf]
        %v2737 = vld [vmem:[#allocation13 + $0x4c] sm:$0xf]
        %v2738 = vld [vmem:[#allocation13 + $0x50] sm:$0xf]
        %v2739 = vld [vmem:[#allocation13 + $0x54] sm:$0xf]
        %v2740 = vld [vmem:[#allocation13 + $0x58] sm:$0xf]
        %v2741 = vld [vmem:[#allocation13 + $0x5c] sm:$0xf]
        %v2742 = vld [vmem:[#allocation13 + $0x60] sm:$0xf]
        %v2743 = vld [vmem:[#allocation13 + $0x64] sm:$0xf]
        %v2744 = vld [vmem:[#allocation13 + $0x68] sm:$0xf]
        %v2745 = vld [vmem:[#allocation13 + $0x6c] sm:$0xf]
        %v2746 = vld [vmem:[#allocation13 + $0x70] sm:$0xf]
        %v2747 = vld [vmem:[#allocation13 + $0x74] sm:$0xf]
        %v2748 = vld [vmem:[#allocation13 + $0x78] sm:$0xf]
        %v2749 = vld [vmem:[#allocation13 + $0x7c] sm:$0xf]
        %v2750 = vld [vmem:[#allocation13 + $0x80] sm:$0xf]
        %v2751 = vld [vmem:[#allocation13 + $0x84] sm:$0xf]
        %v2752 = vld [vmem:[#allocation13 + $0x88] sm:$0xf]
        %v2753 = vld [vmem:[#allocation13 + $0x8c] sm:$0xf]
        %v2754 = vld [vmem:[#allocation13 + $0x90] sm:$0xf]
        %v2755 = vld [vmem:[#allocation13 + $0x94] sm:$0xf]
        %v2756 = vld [vmem:[#allocation13 + $0x98] sm:$0xf]
        %v2757 = vld [vmem:[#allocation13 + $0x9c] sm:$0xf]
        %v2758 = vld [vmem:[#allocation13 + $0xa0] sm:$0xf]
        %v2759 = vld [vmem:[#allocation13 + $0xa4] sm:$0xf]
        %v2760 = vld [vmem:[#allocation13 + $0xa8] sm:$0xf]
        %v2761 = vld [vmem:[#allocation13 + $0xac] sm:$0xf]
        %v2762 = vld [vmem:[#allocation13 + $0xb0] sm:$0xf]
        %v2763 = vld [vmem:[#allocation13 + $0xb4] sm:$0xf]
        %v2764 = vld [vmem:[#allocation13 + $0xb8] sm:$0xf]
        %v2765 = vld [vmem:[#allocation13 + $0xbc] sm:$0xf]
        %v2814 = vunpack.c.l.b16 %v2718
        %v2815 = vunpack.c.l.b16 %v2719
        %v2816 = vunpack.c.l.b16 %v2720
        %v2817 = vunpack.c.l.b16 %v2721
        %v2818 = vunpack.c.l.b16 %v2722
        %v2819 = vunpack.c.l.b16 %v2723
        %v2820 = vunpack.c.l.b16 %v2724
        %v2821 = vunpack.c.l.b16 %v2725
        %v2822 = vunpack.c.l.b16 %v2726
        %v2823 = vunpack.c.l.b16 %v2727
        %v2824 = vunpack.c.l.b16 %v2728
        %v2825 = vunpack.c.l.b16 %v2729
        %v2826 = vunpack.c.l.b16 %v2730
        %v2827 = vunpack.c.l.b16 %v2731
        %v2828 = vunpack.c.l.b16 %v2732
        %v2829 = vunpack.c.l.b16 %v2733
        %v2830 = vunpack.c.l.b16 %v2734
        %v2831 = vunpack.c.l.b16 %v2735
        %v2832 = vunpack.c.l.b16 %v2736
        %v2833 = vunpack.c.l.b16 %v2737
        %v2834 = vunpack.c.l.b16 %v2738
        %v2835 = vunpack.c.l.b16 %v2739
        %v2836 = vunpack.c.l.b16 %v2740
        %v2837 = vunpack.c.l.b16 %v2741
        %v2838 = vunpack.c.l.b16 %v2742
        %v2839 = vunpack.c.l.b16 %v2743
        %v2840 = vunpack.c.l.b16 %v2744
        %v2841 = vunpack.c.l.b16 %v2745
        %v2842 = vunpack.c.l.b16 %v2746
        %v2843 = vunpack.c.l.b16 %v2747
        %v2844 = vunpack.c.l.b16 %v2748
        %v2845 = vunpack.c.l.b16 %v2749
        %v2846 = vunpack.c.l.b16 %v2750
        %v2847 = vunpack.c.l.b16 %v2751
        %v2848 = vunpack.c.l.b16 %v2752
        %v2849 = vunpack.c.l.b16 %v2753
        %v2850 = vunpack.c.l.b16 %v2754
        %v2851 = vunpack.c.l.b16 %v2755
        %v2852 = vunpack.c.l.b16 %v2756
        %v2853 = vunpack.c.l.b16 %v2757
        %v2854 = vunpack.c.l.b16 %v2758
        %v2855 = vunpack.c.l.b16 %v2759
        %v2856 = vunpack.c.l.b16 %v2760
        %v2857 = vunpack.c.l.b16 %v2761
        %v2858 = vunpack.c.l.b16 %v2762
        %v2859 = vunpack.c.l.b16 %v2763
        %v2860 = vunpack.c.l.b16 %v2764
        %v2861 = vunpack.c.l.b16 %v2765
        %v2862 = vpack.c.b16 %v2815, %v2814
        %v2863 = vpack.c.b16 %v2817, %v2816
        %v2864 = vpack.c.b16 %v2819, %v2818
        %v2865 = vpack.c.b16 %v2821, %v2820
        %v2866 = vpack.c.b16 %v2823, %v2822
        %v2867 = vpack.c.b16 %v2825, %v2824
        %v2868 = vpack.c.b16 %v2827, %v2826
        %v2869 = vpack.c.b16 %v2829, %v2828
        %v2870 = vpack.c.b16 %v2831, %v2830
        %v2871 = vpack.c.b16 %v2833, %v2832
        %v2872 = vpack.c.b16 %v2835, %v2834
        %v2873 = vpack.c.b16 %v2837, %v2836
        %v2874 = vpack.c.b16 %v2839, %v2838
        %v2875 = vpack.c.b16 %v2841, %v2840
        %v2876 = vpack.c.b16 %v2843, %v2842
        %v2877 = vpack.c.b16 %v2845, %v2844
        %v2878 = vpack.c.b16 %v2847, %v2846
        %v2879 = vpack.c.b16 %v2849, %v2848
        %v2880 = vpack.c.b16 %v2851, %v2850
        %v2881 = vpack.c.b16 %v2853, %v2852
        %v2882 = vpack.c.b16 %v2855, %v2854
        %v2883 = vpack.c.b16 %v2857, %v2856
        %v2884 = vpack.c.b16 %v2859, %v2858
        %v2885 = vpack.c.b16 %v2861, %v2860
        %2910 = vmatprep.subr.bf16.mxu0 0
        %2911 = vmatpush1.bf16.msra.mxu0 %v2862
        %2912 = vmatprep.subr.bf16.mxu0 0
        %2913 = vmatpush1.bf16.msra.mxu0 %v2863
        %2914 = vmatprep.subr.bf16.mxu0 0
        %2915 = vmatpush1.bf16.msra.mxu0 %v2864
        %2916 = vmatprep.subr.bf16.mxu0 0
        %2917 = vmatpush1.bf16.msra.mxu0 %v2865
        %2918 = vmatprep.subr.bf16.mxu0 0
        %2919 = vmatpush1.bf16.msra.mxu0 %v2866
        %2920 = vmatprep.subr.bf16.mxu0 0
        %2921 = vmatpush1.bf16.msra.mxu0 %v2867
        %2922 = vmatprep.subr.bf16.mxu0 0
        %2923 = vmatpush1.bf16.msra.mxu0 %v2868
        %2924 = vmatprep.subr.bf16.mxu0 0
        %2925 = vmatpush1.bf16.msra.mxu0 %v2869
        %2926 = vmatprep.subr.bf16.mxu0 0
        %2927 = vmatpush1.bf16.msra.mxu0 %v2870
        %2928 = vmatprep.subr.bf16.mxu0 0
        %2929 = vmatpush1.bf16.msra.mxu0 %v2871
        %2930 = vmatprep.subr.bf16.mxu0 0
        %2931 = vmatpush1.bf16.msra.mxu0 %v2872
        %2932 = vmatprep.subr.bf16.mxu0 0
        %2933 = vmatpush1.bf16.msra.mxu0 %v2873
        %2934 = vmatprep.subr.bf16.mxu0 0
        %2935 = vmatpush1.bf16.msra.mxu0 %v2874
        %2936 = vmatprep.subr.bf16.mxu0 0
        %2937 = vmatpush1.bf16.msra.mxu0 %v2875
        %2938 = vmatprep.subr.bf16.mxu0 0
        %2939 = vmatpush1.bf16.msra.mxu0 %v2876
        %2940 = vmatprep.subr.bf16.mxu0 0
        %2941 = vmatpush1.bf16.msra.mxu0 %v2877
        %2942 = vmatprep.mubr.bf16.mxu0 %v2632
        %2943 = vmatmul.mubr.bf16.gmra.mrb[0].mxu0 %v2676
        %v2944 = vpop.f32.mrb[0].mxu0
        %v2945 = vadd.f32 0.0, %v2944
        %v2946 = vpop.f32.mrb[0].mxu0
        %v2947 = vpop.f32.mrb[0].mxu0
        %v2948 = vpop.f32.mrb[0].mxu0
        %2949 = vdwg.mxu0
        %2950 = vmatprep.subr.bf16.mxu0 0
        %2951 = vmatpush1.bf16.msra.mxu0 %v2878
        %2952 = vmatprep.subr.bf16.mxu0 0
        %2953 = vmatpush1.bf16.msra.mxu0 %v2879
        %2954 = vmatprep.subr.bf16.mxu0 0
        %2955 = vmatpush1.bf16.msra.mxu0 %v2880
        %2956 = vmatprep.subr.bf16.mxu0 0
        %2957 = vmatpush1.bf16.msra.mxu0 %v2881
        %2958 = vmatprep.subr.bf16.mxu0 0
        %2959 = vmatpush1.bf16.msra.mxu0 %v2882
        %2960 = vmatprep.subr.bf16.mxu0 0
        %2961 = vmatpush1.bf16.msra.mxu0 %v2883
        %2962 = vmatprep.subr.bf16.mxu0 0
        %2963 = vmatpush1.bf16.msra.mxu0 %v2884
        %2964 = vmatprep.subr.bf16.mxu0 0
        %2965 = vmatpush1.bf16.msra.mxu0 %v2885
        %2966 = vmatprep.subr.bf16.mxu0 0
        %2967 = vmatpush1.bf16.msra.mxu0 0
        %2968 = vmatprep.subr.bf16.mxu0 0
        %2969 = vmatpush1.bf16.msra.mxu0 0
        %2970 = vmatprep.subr.bf16.mxu0 0
        %2971 = vmatpush1.bf16.msra.mxu0 0
        %2972 = vmatprep.subr.bf16.mxu0 0
        %2973 = vmatpush1.bf16.msra.mxu0 0
        %2974 = vmatprep.subr.bf16.mxu0 0
        %2975 = vmatpush1.bf16.msra.mxu0 0
        %2976 = vmatprep.subr.bf16.mxu0 0
        %2977 = vmatpush1.bf16.msra.mxu0 0
        %2978 = vmatprep.subr.bf16.mxu0 0
        %2979 = vmatpush1.bf16.msra.mxu0 0
        %2980 = vmatprep.subr.bf16.mxu0 0
        %2981 = vmatpush1.bf16.msra.mxu0 0
        %2982 = vmatprep.mubr.bf16.mxu0 0
        %2983 = vmatmul.mubr.bf16.gmra.mrb[0].mxu0 %v2717
        %v2984 = vpop.f32.mrb[0].mxu0
        %v2985 = vadd.f32 %v2945, %v2984
        %v2986 = vpop.f32.mrb[0].mxu0
        %v2987 = vpop.f32.mrb[0].mxu0
        %v2988 = vpop.f32.mrb[0].mxu0
        %2989 = vdwg.mxu0
        %v2990 = vld [vmem:[#allocation14] sm:$0x1]
        %v2992 = vlaneseq
        %v2993 = vshrl.u32 %v2992, 7
        %v2994 = vsub.s32 0, %v2993
        %v2995 = vrot.slane %v2990, %v2994
        %v2997 = vmul.f32 %v2985, %v2995
        %s2998 = scalar_lea.vmem [#allocation14], 1
        %v2999 = vld [vmem:[%s2998] sm:$0x1]
        %v3001 = vlaneseq
        %v3002 = vshrl.u32 %v3001, 7
        %v3003 = vsub.s32 0, %v3002
        %v3004 = vrot.slane %v2999, %v3003
        %v3006 = vadd.f32 %v2997, %v3004
        %vm3007 = vcmp.ge.f32.partialorder %v3006, 0.0
        %v3008 = vmul.f32 %v3006, 0.01
        %v3009 = vsel %vm3007, %v3006, %v3008
        %3010 = vst [vmem:[%s1506] sm:$0xff] %v3009
        %v3011 = vpack.c.bf16 %v3009, %v3009
        %v3012 = vld [vmem:[#allocation37] sm:$0xf]
        %v3013 = vld [vmem:[#allocation37 + $0x4] sm:$0xf]
        %v3014 = vld [vmem:[#allocation37 + $0x8] sm:$0xf]
        %v3015 = vld [vmem:[#allocation37 + $0xc] sm:$0xf]
        %v3016 = vld [vmem:[#allocation37 + $0x10] sm:$0xf]
        %v3017 = vld [vmem:[#allocation37 + $0x14] sm:$0xf]
        %v3018 = vld [vmem:[#allocation37 + $0x18] sm:$0xf]
        %v3019 = vld [vmem:[#allocation37 + $0x1c] sm:$0xf]
        %v3020 = vld [vmem:[#allocation37 + $0x20] sm:$0xf]
        %v3021 = vld [vmem:[#allocation37 + $0x24] sm:$0xf]
        %v3022 = vld [vmem:[#allocation37 + $0x28] sm:$0xf]
        %v3023 = vld [vmem:[#allocation37 + $0x2c] sm:$0xf]
        %v3024 = vld [vmem:[#allocation37 + $0x30] sm:$0xf]
        %v3025 = vld [vmem:[#allocation37 + $0x34] sm:$0xf]
        %v3026 = vld [vmem:[#allocation37 + $0x38] sm:$0xf]
        %v3027 = vld [vmem:[#allocation37 + $0x3c] sm:$0xf]
        %v3044 = vunpack.c.l.b16 %v3012
        %v3045 = vunpack.c.l.b16 %v3013
        %v3046 = vunpack.c.l.b16 %v3014
        %v3047 = vunpack.c.l.b16 %v3015
        %v3048 = vunpack.c.l.b16 %v3016
        %v3049 = vunpack.c.l.b16 %v3017
        %v3050 = vunpack.c.l.b16 %v3018
        %v3051 = vunpack.c.l.b16 %v3019
        %v3052 = vunpack.c.l.b16 %v3020
        %v3053 = vunpack.c.l.b16 %v3021
        %v3054 = vunpack.c.l.b16 %v3022
        %v3055 = vunpack.c.l.b16 %v3023
        %v3056 = vunpack.c.l.b16 %v3024
        %v3057 = vunpack.c.l.b16 %v3025
        %v3058 = vunpack.c.l.b16 %v3026
        %v3059 = vunpack.c.l.b16 %v3027
        %v3060 = vpack.c.b16 %v3045, %v3044
        %v3061 = vpack.c.b16 %v3047, %v3046
        %v3062 = vpack.c.b16 %v3049, %v3048
        %v3063 = vpack.c.b16 %v3051, %v3050
        %v3064 = vpack.c.b16 %v3053, %v3052
        %v3065 = vpack.c.b16 %v3055, %v3054
        %v3066 = vpack.c.b16 %v3057, %v3056
        %v3067 = vpack.c.b16 %v3059, %v3058
        %3076 = vmatprep.subr.bf16.mxu0 0
        %3077 = vmatpush1.bf16.msra.mxu0 %v3060
        %3078 = vmatprep.subr.bf16.mxu0 0
        %3079 = vmatpush1.bf16.msra.mxu0 %v3061
        %3080 = vmatprep.subr.bf16.mxu0 0
        %3081 = vmatpush1.bf16.msra.mxu0 %v3062
        %3082 = vmatprep.subr.bf16.mxu0 0
        %3083 = vmatpush1.bf16.msra.mxu0 %v3063
        %3084 = vmatprep.subr.bf16.mxu0 0
        %3085 = vmatpush1.bf16.msra.mxu0 %v3064
        %3086 = vmatprep.subr.bf16.mxu0 0
        %3087 = vmatpush1.bf16.msra.mxu0 %v3065
        %3088 = vmatprep.subr.bf16.mxu0 0
        %3089 = vmatpush1.bf16.msra.mxu0 %v3066
        %3090 = vmatprep.subr.bf16.mxu0 0
        %3091 = vmatpush1.bf16.msra.mxu0 %v3067
        %3092 = vmatprep.subr.bf16.mxu0 0
        %3093 = vmatpush1.bf16.msra.mxu0 0
        %3094 = vmatprep.subr.bf16.mxu0 0
        %3095 = vmatpush1.bf16.msra.mxu0 0
        %3096 = vmatprep.subr.bf16.mxu0 0
        %3097 = vmatpush1.bf16.msra.mxu0 0
        %3098 = vmatprep.subr.bf16.mxu0 0
        %3099 = vmatpush1.bf16.msra.mxu0 0
        %3100 = vmatprep.subr.bf16.mxu0 0
        %3101 = vmatpush1.bf16.msra.mxu0 0
        %3102 = vmatprep.subr.bf16.mxu0 0
        %3103 = vmatpush1.bf16.msra.mxu0 0
        %3104 = vmatprep.subr.bf16.mxu0 0
        %3105 = vmatpush1.bf16.msra.mxu0 0
        %3106 = vmatprep.subr.bf16.mxu0 0
        %3107 = vmatpush1.bf16.msra.mxu0 0
        %3108 = vmatprep.mubr.bf16.mxu0 0
        %3109 = vmatmul.mubr.bf16.gmra.mrb[0].mxu0 %v3011
        %v3110 = vpop.f32.mrb[0].mxu0
        %v3111 = vadd.f32 0.0, %v3110
        %v3112 = vpop.f32.mrb[0].mxu0
        %v3113 = vpop.f32.mrb[0].mxu0
        %v3114 = vpop.f32.mrb[0].mxu0
        %3115 = vdwg.mxu0
        %3117 = vrot.lane.b32.xlu0 %v3111, 64
        %v3118 = vpop.permute.xlu0 %3117
        %v3120 = vmax.f32 %v3111, %v3118
        %v3121 = vpack.c.bf16 %v3120, %v3120
        %v3122 = vld [vmem:[%s57] sm:$0xf]
        %v3124 = vsel %vm2373, %v3122, 0
        %v3127 = vsel %vm2377, %v3121, 0
        %3129 = vmatprep.subr.bf16.mxu0 0
        %3130 = vmatpush1.bf16.msra.mxu0 %v3127
        %3131 = vmatprep.subr.bf16.mxu0 0
        %3132 = vmatpush1.bf16.msra.mxu0 0
        %3133 = vmatprep.subr.bf16.mxu0 0
        %3134 = vmatpush1.bf16.msra.mxu0 0
        %3135 = vmatprep.subr.bf16.mxu0 0
        %3136 = vmatpush1.bf16.msra.mxu0 0
        %3137 = vmatprep.subr.bf16.mxu0 0
        %3138 = vmatpush1.bf16.msra.mxu0 0
        %3139 = vmatprep.subr.bf16.mxu0 0
        %3140 = vmatpush1.bf16.msra.mxu0 0
        %3141 = vmatprep.subr.bf16.mxu0 0
        %3142 = vmatpush1.bf16.msra.mxu0 0
        %3143 = vmatprep.subr.bf16.mxu0 0
        %3144 = vmatpush1.bf16.msra.mxu0 0
        %3145 = vmatprep.subr.bf16.mxu0 0
        %3146 = vmatpush1.bf16.msra.mxu0 0
        %3147 = vmatprep.subr.bf16.mxu0 0
        %3148 = vmatpush1.bf16.msra.mxu0 0
        %3149 = vmatprep.subr.bf16.mxu0 0
        %3150 = vmatpush1.bf16.msra.mxu0 0
        %3151 = vmatprep.subr.bf16.mxu0 0
        %3152 = vmatpush1.bf16.msra.mxu0 0
        %3153 = vmatprep.subr.bf16.mxu0 0
        %3154 = vmatpush1.bf16.msra.mxu0 0
        %3155 = vmatprep.subr.bf16.mxu0 0
        %3156 = vmatpush1.bf16.msra.mxu0 0
        %3157 = vmatprep.subr.bf16.mxu0 0
        %3158 = vmatpush1.bf16.msra.mxu0 0
        %3159 = vmatprep.subr.bf16.mxu0 0
        %3160 = vmatpush1.bf16.msra.mxu0 0
        %3161 = vmatprep.mubr.bf16.mxu0 0
        %3162 = vmatmul.mubr.bf16.gmra.mrb[0].mxu0 %v3124
        %v3163 = vpop.f32.mrb[0].mxu0
        %v3164 = vadd.f32 0.0, %v3163
        %v3165 = vpop.f32.mrb[0].mxu0
        %v3166 = vpop.f32.mrb[0].mxu0
        %v3167 = vpop.f32.mrb[0].mxu0
        %3168 = vdwg.mxu0
        %v3170 = vrot.slane %v3164, 4
        %v3172 = vmax.f32 %v3164, %v3170
        %v3173 = vpack.c.bf16 %v3172, %v3172
        %v3174 = vld [vmem:[#allocation34] sm:$0x3]
        %s3175 = scalar_lea.vmem [#allocation34], 2
        %v3176 = vld [vmem:[%s3175] sm:$0x3]
        %vm3177 = vcmask 31744
        %v3179 = vsel %vm3177, %v3174, 0
        %vm3181 = vcmask 1041408
        %v3183 = vsel %vm3181, %v3173, 0
        %3185 = vmatprep.subr.bf16.mxu0 0
        %3186 = vmatpush1.bf16.msra.mxu0 %v3183
        %3187 = vmatprep.subr.bf16.mxu0 0
        %3188 = vmatpush1.bf16.msra.mxu0 0
        %3189 = vmatprep.subr.bf16.mxu0 0
        %3190 = vmatpush1.bf16.msra.mxu0 0
        %3191 = vmatprep.subr.bf16.mxu0 0
        %3192 = vmatpush1.bf16.msra.mxu0 0
        %3193 = vmatprep.subr.bf16.mxu0 0
        %3194 = vmatpush1.bf16.msra.mxu0 0
        %3195 = vmatprep.subr.bf16.mxu0 0
        %3196 = vmatpush1.bf16.msra.mxu0 0
        %3197 = vmatprep.subr.bf16.mxu0 0
        %3198 = vmatpush1.bf16.msra.mxu0 0
        %3199 = vmatprep.subr.bf16.mxu0 0
        %3200 = vmatpush1.bf16.msra.mxu0 0
        %3201 = vmatprep.subr.bf16.mxu0 0
        %3202 = vmatpush1.bf16.msra.mxu0 0
        %3203 = vmatprep.subr.bf16.mxu0 0
        %3204 = vmatpush1.bf16.msra.mxu0 0
        %3205 = vmatprep.subr.bf16.mxu0 0
        %3206 = vmatpush1.bf16.msra.mxu0 0
        %3207 = vmatprep.subr.bf16.mxu0 0
        %3208 = vmatpush1.bf16.msra.mxu0 0
        %3209 = vmatprep.subr.bf16.mxu0 0
        %3210 = vmatpush1.bf16.msra.mxu0 0
        %3211 = vmatprep.subr.bf16.mxu0 0
        %3212 = vmatpush1.bf16.msra.mxu0 0
        %3213 = vmatprep.subr.bf16.mxu0 0
        %3214 = vmatpush1.bf16.msra.mxu0 0
        %3215 = vmatprep.subr.bf16.mxu0 0
        %3216 = vmatpush1.bf16.msra.mxu0 0
        %3217 = vmatprep.mubr.bf16.mxu0 0
        %3218 = vmatmul.mubr.bf16.gmra.mrb[0].mxu0 %v3179
        %v3219 = vpop.f32.mrb[0].mxu0
        %v3220 = vadd.f32 0.0, %v3219
        %v3221 = vpop.f32.mrb[0].mxu0
        %v3222 = vpop.f32.mrb[0].mxu0
        %v3223 = vpop.f32.mrb[0].mxu0
        %3224 = vdwg.mxu0
        %v3225 = vpack.c.bf16 %v3220, %v3220
        %v3227 = vsel %vm3177, %v3176, 0
        %3229 = vmatprep.subr.bf16.mxu0 0
        %3230 = vmatpush1.bf16.msra.mxu0 %v3183
        %3231 = vmatprep.subr.bf16.mxu0 0
        %3232 = vmatpush1.bf16.msra.mxu0 0
        %3233 = vmatprep.subr.bf16.mxu0 0
        %3234 = vmatpush1.bf16.msra.mxu0 0
        %3235 = vmatprep.subr.bf16.mxu0 0
        %3236 = vmatpush1.bf16.msra.mxu0 0
        %3237 = vmatprep.subr.bf16.mxu0 0
        %3238 = vmatpush1.bf16.msra.mxu0 0
        %3239 = vmatprep.subr.bf16.mxu0 0
        %3240 = vmatpush1.bf16.msra.mxu0 0
        %3241 = vmatprep.subr.bf16.mxu0 0
        %3242 = vmatpush1.bf16.msra.mxu0 0
        %3243 = vmatprep.subr.bf16.mxu0 0
        %3244 = vmatpush1.bf16.msra.mxu0 0
        %3245 = vmatprep.subr.bf16.mxu0 0
        %3246 = vmatpush1.bf16.msra.mxu0 0
        %3247 = vmatprep.subr.bf16.mxu0 0
        %3248 = vmatpush1.bf16.msra.mxu0 0
        %3249 = vmatprep.subr.bf16.mxu0 0
        %3250 = vmatpush1.bf16.msra.mxu0 0
        %3251 = vmatprep.subr.bf16.mxu0 0
        %3252 = vmatpush1.bf16.msra.mxu0 0
        %3253 = vmatprep.subr.bf16.mxu0 0
        %3254 = vmatpush1.bf16.msra.mxu0 0
        %3255 = vmatprep.subr.bf16.mxu0 0
        %3256 = vmatpush1.bf16.msra.mxu0 0
        %3257 = vmatprep.subr.bf16.mxu0 0
        %3258 = vmatpush1.bf16.msra.mxu0 0
        %3259 = vmatprep.subr.bf16.mxu0 0
        %3260 = vmatpush1.bf16.msra.mxu0 0
        %3261 = vmatprep.mubr.bf16.mxu0 0
        %3262 = vmatmul.mubr.bf16.gmra.mrb[0].mxu0 %v3227
        %v3263 = vpop.f32.mrb[0].mxu0
        %v3264 = vadd.f32 0.0, %v3263
        %v3265 = vpop.f32.mrb[0].mxu0
        %v3266 = vpop.f32.mrb[0].mxu0
        %v3267 = vpop.f32.mrb[0].mxu0
        %3268 = vdwg.mxu0
        %v3269 = vpack.c.bf16 %v3264, %v3264
        %3271 = vrot.lane.b32.xlu0 %v3173, 64
        %v3272 = vpop.permute.xlu0 %3271
        %v3275 = vsel %vm1644, %v3225, %v3272
        %v3277 = vld [vmem:[#allocation16] sm:$0xf]
        %v3278 = vld [vmem:[#allocation16 + $0x4] sm:$0xf]
        %v3279 = vld [vmem:[#allocation16 + $0x8] sm:$0xf]
        %v3280 = vld [vmem:[#allocation16 + $0xc] sm:$0xf]
        %v3281 = vld [vmem:[#allocation16 + $0x10] sm:$0xf]
        %v3282 = vld [vmem:[#allocation16 + $0x14] sm:$0xf]
        %v3283 = vld [vmem:[#allocation16 + $0x18] sm:$0xf]
        %v3284 = vld [vmem:[#allocation16 + $0x1c] sm:$0xf]
        %v3285 = vld [vmem:[#allocation16 + $0x20] sm:$0xf]
        %v3286 = vld [vmem:[#allocation16 + $0x24] sm:$0xf]
        %v3287 = vld [vmem:[#allocation16 + $0x28] sm:$0xf]
        %v3288 = vld [vmem:[#allocation16 + $0x2c] sm:$0xf]
        %v3289 = vld [vmem:[#allocation16 + $0x30] sm:$0xf]
        %v3290 = vld [vmem:[#allocation16 + $0x34] sm:$0xf]
        %v3291 = vld [vmem:[#allocation16 + $0x38] sm:$0xf]
        %v3292 = vld [vmem:[#allocation16 + $0x3c] sm:$0xf]
        %v3293 = vld [vmem:[#allocation16 + $0x40] sm:$0xf]
        %v3294 = vld [vmem:[#allocation16 + $0x44] sm:$0xf]
        %v3295 = vld [vmem:[#allocation16 + $0x48] sm:$0xf]
        %v3296 = vld [vmem:[#allocation16 + $0x4c] sm:$0xf]
        %v3297 = vld [vmem:[#allocation16 + $0x50] sm:$0xf]
        %v3298 = vld [vmem:[#allocation16 + $0x54] sm:$0xf]
        %v3299 = vld [vmem:[#allocation16 + $0x58] sm:$0xf]
        %v3300 = vld [vmem:[#allocation16 + $0x5c] sm:$0xf]
        %v3325 = vunpack.c.l.b16 %v3277
        %v3326 = vunpack.c.l.b16 %v3278
        %v3327 = vunpack.c.l.b16 %v3279
        %v3328 = vunpack.c.l.b16 %v3280
        %v3329 = vunpack.c.l.b16 %v3281
        %v3330 = vunpack.c.l.b16 %v3282
        %v3331 = vunpack.c.l.b16 %v3283
        %v3332 = vunpack.c.l.b16 %v3284
        %v3333 = vunpack.c.l.b16 %v3285
        %v3334 = vunpack.c.l.b16 %v3286
        %v3335 = vunpack.c.l.b16 %v3287
        %v3336 = vunpack.c.l.b16 %v3288
        %v3337 = vunpack.c.l.b16 %v3289
        %v3338 = vunpack.c.l.b16 %v3290
        %v3339 = vunpack.c.l.b16 %v3291
        %v3340 = vunpack.c.l.b16 %v3292
        %v3341 = vunpack.c.l.b16 %v3293
        %v3342 = vunpack.c.l.b16 %v3294
        %v3343 = vunpack.c.l.b16 %v3295
        %v3344 = vunpack.c.l.b16 %v3296
        %v3345 = vunpack.c.l.b16 %v3297
        %v3346 = vunpack.c.l.b16 %v3298
        %v3347 = vunpack.c.l.b16 %v3299
        %v3348 = vunpack.c.l.b16 %v3300
        %v3349 = vpack.c.b16 %v3326, %v3325
        %v3350 = vpack.c.b16 %v3328, %v3327
        %v3351 = vpack.c.b16 %v3330, %v3329
        %v3352 = vpack.c.b16 %v3332, %v3331
        %v3353 = vpack.c.b16 %v3334, %v3333
        %v3354 = vpack.c.b16 %v3336, %v3335
        %v3355 = vpack.c.b16 %v3338, %v3337
        %v3356 = vpack.c.b16 %v3340, %v3339
        %v3357 = vpack.c.b16 %v3342, %v3341
        %v3358 = vpack.c.b16 %v3344, %v3343
        %v3359 = vpack.c.b16 %v3346, %v3345
        %v3360 = vpack.c.b16 %v3348, %v3347
        %v3374 = vsel %vm1644, %v3269, 0
        %3376 = vmatprep.subr.bf16.mxu0 0
        %3377 = vmatpush1.bf16.msra.mxu0 %v3349
        %3378 = vmatprep.subr.bf16.mxu0 0
        %3379 = vmatpush1.bf16.msra.mxu0 %v3350
        %3380 = vmatprep.subr.bf16.mxu0 0
        %3381 = vmatpush1.bf16.msra.mxu0 %v3351
        %3382 = vmatprep.subr.bf16.mxu0 0
        %3383 = vmatpush1.bf16.msra.mxu0 %v3352
        %3384 = vmatprep.subr.bf16.mxu0 0
        %3385 = vmatpush1.bf16.msra.mxu0 %v3353
        %3386 = vmatprep.subr.bf16.mxu0 0
        %3387 = vmatpush1.bf16.msra.mxu0 %v3354
        %3388 = vmatprep.subr.bf16.mxu0 0
        %3389 = vmatpush1.bf16.msra.mxu0 %v3355
        %3390 = vmatprep.subr.bf16.mxu0 0
        %3391 = vmatpush1.bf16.msra.mxu0 %v3356
        %3392 = vmatprep.subr.bf16.mxu0 0
        %3393 = vmatpush1.bf16.msra.mxu0 %v3357
        %3394 = vmatprep.subr.bf16.mxu0 0
        %3395 = vmatpush1.bf16.msra.mxu0 %v3358
        %3396 = vmatprep.subr.bf16.mxu0 0
        %3397 = vmatpush1.bf16.msra.mxu0 %v3359
        %3398 = vmatprep.subr.bf16.mxu0 0
        %3399 = vmatpush1.bf16.msra.mxu0 %v3360
        %3400 = vmatprep.subr.bf16.mxu0 0
        %3401 = vmatpush1.bf16.msra.mxu0 0
        %3402 = vmatprep.subr.bf16.mxu0 0
        %3403 = vmatpush1.bf16.msra.mxu0 0
        %3404 = vmatprep.subr.bf16.mxu0 0
        %3405 = vmatpush1.bf16.msra.mxu0 0
        %3406 = vmatprep.subr.bf16.mxu0 0
        %3407 = vmatpush1.bf16.msra.mxu0 0
        %3408 = vmatprep.mubr.bf16.mxu0 %v3374
        %3409 = vmatmul.mubr.bf16.gmra.mrb[0].mxu0 %v3275
        %v3410 = vpop.f32.mrb[0].mxu0
        %v3411 = vadd.f32 0.0, %v3410
        %v3412 = vpop.f32.mrb[0].mxu0
        %v3413 = vpop.f32.mrb[0].mxu0
        %v3414 = vpop.f32.mrb[0].mxu0
        %3415 = vdwg.mxu0
        %v3416 = vld [vmem:[#allocation17] sm:$0x1]
        %v3418 = vlaneseq
        %v3419 = vshrl.u32 %v3418, 7
        %v3420 = vsub.s32 0, %v3419
        %v3421 = vrot.slane %v3416, %v3420
        %v3423 = vmul.f32 %v3411, %v3421
        %s3424 = scalar_lea.vmem [#allocation17], 1
        %v3425 = vld [vmem:[%s3424] sm:$0x1]
        %v3427 = vlaneseq
        %v3428 = vshrl.u32 %v3427, 7
        %v3429 = vsub.s32 0, %v3428
        %v3430 = vrot.slane %v3425, %v3429
        %v3432 = vadd.f32 %v3423, %v3430
        %vm3433 = vcmp.ge.f32.partialorder %v3432, 0.0
        %v3434 = vmul.f32 %v3432, 0.01
        %v3435 = vsel %vm3433, %v3432, %v3434
        %v3436 = vpack.c.bf16 %v3435, %v3435
        %v3438 = vsel %vm3181, %v3436, 0
        %3440 = vmatprep.subr.bf16.mxu0 0
        %3441 = vmatpush1.bf16.msra.mxu0 %v3438
        %3442 = vmatprep.subr.bf16.mxu0 0
        %3443 = vmatpush1.bf16.msra.mxu0 0
        %3444 = vmatprep.subr.bf16.mxu0 0
        %3445 = vmatpush1.bf16.msra.mxu0 0
        %3446 = vmatprep.subr.bf16.mxu0 0
        %3447 = vmatpush1.bf16.msra.mxu0 0
        %3448 = vmatprep.subr.bf16.mxu0 0
        %3449 = vmatpush1.bf16.msra.mxu0 0
        %3450 = vmatprep.subr.bf16.mxu0 0
        %3451 = vmatpush1.bf16.msra.mxu0 0
        %3452 = vmatprep.subr.bf16.mxu0 0
        %3453 = vmatpush1.bf16.msra.mxu0 0
        %3454 = vmatprep.subr.bf16.mxu0 0
        %3455 = vmatpush1.bf16.msra.mxu0 0
        %3456 = vmatprep.subr.bf16.mxu0 0
        %3457 = vmatpush1.bf16.msra.mxu0 0
        %3458 = vmatprep.subr.bf16.mxu0 0
        %3459 = vmatpush1.bf16.msra.mxu0 0
        %3460 = vmatprep.subr.bf16.mxu0 0
        %3461 = vmatpush1.bf16.msra.mxu0 0
        %3462 = vmatprep.subr.bf16.mxu0 0
        %3463 = vmatpush1.bf16.msra.mxu0 0
        %3464 = vmatprep.subr.bf16.mxu0 0
        %3465 = vmatpush1.bf16.msra.mxu0 0
        %3466 = vmatprep.subr.bf16.mxu0 0
        %3467 = vmatpush1.bf16.msra.mxu0 0
        %3468 = vmatprep.subr.bf16.mxu0 0
        %3469 = vmatpush1.bf16.msra.mxu0 0
        %3470 = vmatprep.subr.bf16.mxu0 0
        %3471 = vmatpush1.bf16.msra.mxu0 0
        %3472 = vmatprep.mubr.bf16.mxu0 0
        %3473 = vmatmul.mubr.bf16.gmra.mrb[0].mxu0 %v3179
        %v3474 = vpop.f32.mrb[0].mxu0
        %v3475 = vadd.f32 0.0, %v3474
        %v3476 = vpop.f32.mrb[0].mxu0
        %v3477 = vpop.f32.mrb[0].mxu0
        %v3478 = vpop.f32.mrb[0].mxu0
        %3479 = vdwg.mxu0
        %v3480 = vpack.c.bf16 %v3475, %v3475
        %3481 = vmatprep.subr.bf16.mxu0 0
        %3482 = vmatpush1.bf16.msra.mxu0 %v3438
        %3483 = vmatprep.subr.bf16.mxu0 0
        %3484 = vmatpush1.bf16.msra.mxu0 0
        %3485 = vmatprep.subr.bf16.mxu0 0
        %3486 = vmatpush1.bf16.msra.mxu0 0
        %3487 = vmatprep.subr.bf16.mxu0 0
        %3488 = vmatpush1.bf16.msra.mxu0 0
        %3489 = vmatprep.subr.bf16.mxu0 0
        %3490 = vmatpush1.bf16.msra.mxu0 0
        %3491 = vmatprep.subr.bf16.mxu0 0
        %3492 = vmatpush1.bf16.msra.mxu0 0
        %3493 = vmatprep.subr.bf16.mxu0 0
        %3494 = vmatpush1.bf16.msra.mxu0 0
        %3495 = vmatprep.subr.bf16.mxu0 0
        %3496 = vmatpush1.bf16.msra.mxu0 0
        %3497 = vmatprep.subr.bf16.mxu0 0
        %3498 = vmatpush1.bf16.msra.mxu0 0
        %3499 = vmatprep.subr.bf16.mxu0 0
        %3500 = vmatpush1.bf16.msra.mxu0 0
        %3501 = vmatprep.subr.bf16.mxu0 0
        %3502 = vmatpush1.bf16.msra.mxu0 0
        %3503 = vmatprep.subr.bf16.mxu0 0
        %3504 = vmatpush1.bf16.msra.mxu0 0
        %3505 = vmatprep.subr.bf16.mxu0 0
        %3506 = vmatpush1.bf16.msra.mxu0 0
        %3507 = vmatprep.subr.bf16.mxu0 0
        %3508 = vmatpush1.bf16.msra.mxu0 0
        %3509 = vmatprep.subr.bf16.mxu0 0
        %3510 = vmatpush1.bf16.msra.mxu0 0
        %3511 = vmatprep.subr.bf16.mxu0 0
        %3512 = vmatpush1.bf16.msra.mxu0 0
        %3513 = vmatprep.mubr.bf16.mxu0 0
        %3514 = vmatmul.mubr.bf16.gmra.mrb[0].mxu0 %v3227
        %v3515 = vpop.f32.mrb[0].mxu0
        %v3516 = vadd.f32 0.0, %v3515
        %v3517 = vpop.f32.mrb[0].mxu0
        %v3518 = vpop.f32.mrb[0].mxu0
        %v3519 = vpop.f32.mrb[0].mxu0
        %3520 = vdwg.mxu0
        %v3521 = vpack.c.bf16 %v3516, %v3516
        %v3522 = vld [vmem:[#allocation19] sm:$0xf]
        %v3523 = vld [vmem:[#allocation19 + $0x4] sm:$0xf]
        %v3524 = vld [vmem:[#allocation19 + $0x8] sm:$0xf]
        %v3525 = vld [vmem:[#allocation19 + $0xc] sm:$0xf]
        %v3526 = vld [vmem:[#allocation19 + $0x10] sm:$0xf]
        %v3527 = vld [vmem:[#allocation19 + $0x14] sm:$0xf]
        %v3528 = vld [vmem:[#allocation19 + $0x18] sm:$0xf]
        %v3529 = vld [vmem:[#allocation19 + $0x1c] sm:$0xf]
        %v3530 = vld [vmem:[#allocation19 + $0x20] sm:$0xf]
        %v3531 = vld [vmem:[#allocation19 + $0x24] sm:$0xf]
        %v3532 = vld [vmem:[#allocation19 + $0x28] sm:$0xf]
        %v3533 = vld [vmem:[#allocation19 + $0x2c] sm:$0xf]
        %v3534 = vld [vmem:[#allocation19 + $0x30] sm:$0xf]
        %v3535 = vld [vmem:[#allocation19 + $0x34] sm:$0xf]
        %v3536 = vld [vmem:[#allocation19 + $0x38] sm:$0xf]
        %v3537 = vld [vmem:[#allocation19 + $0x3c] sm:$0xf]
        %v3538 = vld [vmem:[#allocation19 + $0x40] sm:$0xf]
        %v3539 = vld [vmem:[#allocation19 + $0x44] sm:$0xf]
        %v3540 = vld [vmem:[#allocation19 + $0x48] sm:$0xf]
        %v3541 = vld [vmem:[#allocation19 + $0x4c] sm:$0xf]
        %v3542 = vld [vmem:[#allocation19 + $0x50] sm:$0xf]
        %v3543 = vld [vmem:[#allocation19 + $0x54] sm:$0xf]
        %v3544 = vld [vmem:[#allocation19 + $0x58] sm:$0xf]
        %v3545 = vld [vmem:[#allocation19 + $0x5c] sm:$0xf]
        %v3546 = vld [vmem:[#allocation19 + $0x60] sm:$0xf]
        %v3547 = vld [vmem:[#allocation19 + $0x64] sm:$0xf]
        %v3548 = vld [vmem:[#allocation19 + $0x68] sm:$0xf]
        %v3549 = vld [vmem:[#allocation19 + $0x6c] sm:$0xf]
        %v3550 = vld [vmem:[#allocation19 + $0x70] sm:$0xf]
        %v3551 = vld [vmem:[#allocation19 + $0x74] sm:$0xf]
        %v3552 = vld [vmem:[#allocation19 + $0x78] sm:$0xf]
        %v3553 = vld [vmem:[#allocation19 + $0x7c] sm:$0xf]
        %v3554 = vld [vmem:[#allocation19 + $0x80] sm:$0xf]
        %v3555 = vld [vmem:[#allocation19 + $0x84] sm:$0xf]
        %v3556 = vld [vmem:[#allocation19 + $0x88] sm:$0xf]
        %v3557 = vld [vmem:[#allocation19 + $0x8c] sm:$0xf]
        %v3558 = vld [vmem:[#allocation19 + $0x90] sm:$0xf]
        %v3559 = vld [vmem:[#allocation19 + $0x94] sm:$0xf]
        %v3560 = vld [vmem:[#allocation19 + $0x98] sm:$0xf]
        %v3561 = vld [vmem:[#allocation19 + $0x9c] sm:$0xf]
        %v3562 = vld [vmem:[#allocation19 + $0xa0] sm:$0xf]
        %v3563 = vld [vmem:[#allocation19 + $0xa4] sm:$0xf]
        %v3564 = vld [vmem:[#allocation19 + $0xa8] sm:$0xf]
        %v3565 = vld [vmem:[#allocation19 + $0xac] sm:$0xf]
        %v3566 = vld [vmem:[#allocation19 + $0xb0] sm:$0xf]
        %v3567 = vld [vmem:[#allocation19 + $0xb4] sm:$0xf]
        %v3568 = vld [vmem:[#allocation19 + $0xb8] sm:$0xf]
        %v3569 = vld [vmem:[#allocation19 + $0xbc] sm:$0xf]
        %v3618 = vunpack.c.l.b16 %v3522
        %v3619 = vunpack.c.l.b16 %v3523
        %v3620 = vunpack.c.l.b16 %v3524
        %v3621 = vunpack.c.l.b16 %v3525
        %v3622 = vunpack.c.l.b16 %v3526
        %v3623 = vunpack.c.l.b16 %v3527
        %v3624 = vunpack.c.l.b16 %v3528
        %v3625 = vunpack.c.l.b16 %v3529
        %v3626 = vunpack.c.l.b16 %v3530
        %v3627 = vunpack.c.l.b16 %v3531
        %v3628 = vunpack.c.l.b16 %v3532
        %v3629 = vunpack.c.l.b16 %v3533
        %v3630 = vunpack.c.l.b16 %v3534
        %v3631 = vunpack.c.l.b16 %v3535
        %v3632 = vunpack.c.l.b16 %v3536
        %v3633 = vunpack.c.l.b16 %v3537
        %v3634 = vunpack.c.l.b16 %v3538
        %v3635 = vunpack.c.l.b16 %v3539
        %v3636 = vunpack.c.l.b16 %v3540
        %v3637 = vunpack.c.l.b16 %v3541
        %v3638 = vunpack.c.l.b16 %v3542
        %v3639 = vunpack.c.l.b16 %v3543
        %v3640 = vunpack.c.l.b16 %v3544
        %v3641 = vunpack.c.l.b16 %v3545
        %v3642 = vunpack.c.l.b16 %v3546
        %v3643 = vunpack.c.l.b16 %v3547
        %v3644 = vunpack.c.l.b16 %v3548
        %v3645 = vunpack.c.l.b16 %v3549
        %v3646 = vunpack.c.l.b16 %v3550
        %v3647 = vunpack.c.l.b16 %v3551
        %v3648 = vunpack.c.l.b16 %v3552
        %v3649 = vunpack.c.l.b16 %v3553
        %v3650 = vunpack.c.l.b16 %v3554
        %v3651 = vunpack.c.l.b16 %v3555
        %v3652 = vunpack.c.l.b16 %v3556
        %v3653 = vunpack.c.l.b16 %v3557
        %v3654 = vunpack.c.l.b16 %v3558
        %v3655 = vunpack.c.l.b16 %v3559
        %v3656 = vunpack.c.l.b16 %v3560
        %v3657 = vunpack.c.l.b16 %v3561
        %v3658 = vunpack.c.l.b16 %v3562
        %v3659 = vunpack.c.l.b16 %v3563
        %v3660 = vunpack.c.l.b16 %v3564
        %v3661 = vunpack.c.l.b16 %v3565
        %v3662 = vunpack.c.l.b16 %v3566
        %v3663 = vunpack.c.l.b16 %v3567
        %v3664 = vunpack.c.l.b16 %v3568
        %v3665 = vunpack.c.l.b16 %v3569
        %v3666 = vpack.c.b16 %v3619, %v3618
        %v3667 = vpack.c.b16 %v3621, %v3620
        %v3668 = vpack.c.b16 %v3623, %v3622
        %v3669 = vpack.c.b16 %v3625, %v3624
        %v3670 = vpack.c.b16 %v3627, %v3626
        %v3671 = vpack.c.b16 %v3629, %v3628
        %v3672 = vpack.c.b16 %v3631, %v3630
        %v3673 = vpack.c.b16 %v3633, %v3632
        %v3674 = vpack.c.b16 %v3635, %v3634
        %v3675 = vpack.c.b16 %v3637, %v3636
        %v3676 = vpack.c.b16 %v3639, %v3638
        %v3677 = vpack.c.b16 %v3641, %v3640
        %v3678 = vpack.c.b16 %v3643, %v3642
        %v3679 = vpack.c.b16 %v3645, %v3644
        %v3680 = vpack.c.b16 %v3647, %v3646
        %v3681 = vpack.c.b16 %v3649, %v3648
        %v3682 = vpack.c.b16 %v3651, %v3650
        %v3683 = vpack.c.b16 %v3653, %v3652
        %v3684 = vpack.c.b16 %v3655, %v3654
        %v3685 = vpack.c.b16 %v3657, %v3656
        %v3686 = vpack.c.b16 %v3659, %v3658
        %v3687 = vpack.c.b16 %v3661, %v3660
        %v3688 = vpack.c.b16 %v3663, %v3662
        %v3689 = vpack.c.b16 %v3665, %v3664
        %3714 = vmatprep.subr.bf16.mxu0 0
        %3715 = vmatpush1.bf16.msra.mxu0 %v3666
        %3716 = vmatprep.subr.bf16.mxu0 0
        %3717 = vmatpush1.bf16.msra.mxu0 %v3667
        %3718 = vmatprep.subr.bf16.mxu0 0
        %3719 = vmatpush1.bf16.msra.mxu0 %v3668
        %3720 = vmatprep.subr.bf16.mxu0 0
        %3721 = vmatpush1.bf16.msra.mxu0 %v3669
        %3722 = vmatprep.subr.bf16.mxu0 0
        %3723 = vmatpush1.bf16.msra.mxu0 %v3670
        %3724 = vmatprep.subr.bf16.mxu0 0
        %3725 = vmatpush1.bf16.msra.mxu0 %v3671
        %3726 = vmatprep.subr.bf16.mxu0 0
        %3727 = vmatpush1.bf16.msra.mxu0 %v3672
        %3728 = vmatprep.subr.bf16.mxu0 0
        %3729 = vmatpush1.bf16.msra.mxu0 %v3673
        %3730 = vmatprep.subr.bf16.mxu0 0
        %3731 = vmatpush1.bf16.msra.mxu0 %v3674
        %3732 = vmatprep.subr.bf16.mxu0 0
        %3733 = vmatpush1.bf16.msra.mxu0 %v3675
        %3734 = vmatprep.subr.bf16.mxu0 0
        %3735 = vmatpush1.bf16.msra.mxu0 %v3676
        %3736 = vmatprep.subr.bf16.mxu0 0
        %3737 = vmatpush1.bf16.msra.mxu0 %v3677
        %3738 = vmatprep.subr.bf16.mxu0 0
        %3739 = vmatpush1.bf16.msra.mxu0 %v3678
        %3740 = vmatprep.subr.bf16.mxu0 0
        %3741 = vmatpush1.bf16.msra.mxu0 %v3679
        %3742 = vmatprep.subr.bf16.mxu0 0
        %3743 = vmatpush1.bf16.msra.mxu0 %v3680
        %3744 = vmatprep.subr.bf16.mxu0 0
        %3745 = vmatpush1.bf16.msra.mxu0 %v3681
        %3746 = vmatprep.mubr.bf16.mxu0 %v3436
        %3747 = vmatmul.mubr.bf16.gmra.mrb[0].mxu0 %v3480
        %v3748 = vpop.f32.mrb[0].mxu0
        %v3749 = vadd.f32 0.0, %v3748
        %v3750 = vpop.f32.mrb[0].mxu0
        %v3751 = vpop.f32.mrb[0].mxu0
        %v3752 = vpop.f32.mrb[0].mxu0
        %3753 = vdwg.mxu0
        %3754 = vmatprep.subr.bf16.mxu0 0
        %3755 = vmatpush1.bf16.msra.mxu0 %v3682
        %3756 = vmatprep.subr.bf16.mxu0 0
        %3757 = vmatpush1.bf16.msra.mxu0 %v3683
        %3758 = vmatprep.subr.bf16.mxu0 0
        %3759 = vmatpush1.bf16.msra.mxu0 %v3684
        %3760 = vmatprep.subr.bf16.mxu0 0
        %3761 = vmatpush1.bf16.msra.mxu0 %v3685
        %3762 = vmatprep.subr.bf16.mxu0 0
        %3763 = vmatpush1.bf16.msra.mxu0 %v3686
        %3764 = vmatprep.subr.bf16.mxu0 0
        %3765 = vmatpush1.bf16.msra.mxu0 %v3687
        %3766 = vmatprep.subr.bf16.mxu0 0
        %3767 = vmatpush1.bf16.msra.mxu0 %v3688
        %3768 = vmatprep.subr.bf16.mxu0 0
        %3769 = vmatpush1.bf16.msra.mxu0 %v3689
        %3770 = vmatprep.subr.bf16.mxu0 0
        %3771 = vmatpush1.bf16.msra.mxu0 0
        %3772 = vmatprep.subr.bf16.mxu0 0
        %3773 = vmatpush1.bf16.msra.mxu0 0
        %3774 = vmatprep.subr.bf16.mxu0 0
        %3775 = vmatpush1.bf16.msra.mxu0 0
        %3776 = vmatprep.subr.bf16.mxu0 0
        %3777 = vmatpush1.bf16.msra.mxu0 0
        %3778 = vmatprep.subr.bf16.mxu0 0
        %3779 = vmatpush1.bf16.msra.mxu0 0
        %3780 = vmatprep.subr.bf16.mxu0 0
        %3781 = vmatpush1.bf16.msra.mxu0 0
        %3782 = vmatprep.subr.bf16.mxu0 0
        %3783 = vmatpush1.bf16.msra.mxu0 0
        %3784 = vmatprep.subr.bf16.mxu0 0
        %3785 = vmatpush1.bf16.msra.mxu0 0
        %3786 = vmatprep.mubr.bf16.mxu0 0
        %3787 = vmatmul.mubr.bf16.gmra.mrb[0].mxu0 %v3521
        %v3788 = vpop.f32.mrb[0].mxu0
        %v3789 = vadd.f32 %v3749, %v3788
        %v3790 = vpop.f32.mrb[0].mxu0
        %v3791 = vpop.f32.mrb[0].mxu0
        %v3792 = vpop.f32.mrb[0].mxu0
        %3793 = vdwg.mxu0
        %v3794 = vld [vmem:[#allocation20] sm:$0x1]
        %v3796 = vlaneseq
        %v3797 = vshrl.u32 %v3796, 7
        %v3798 = vsub.s32 0, %v3797
        %v3799 = vrot.slane %v3794, %v3798
        %v3801 = vmul.f32 %v3789, %v3799
        %s3802 = scalar_lea.vmem [#allocation20], 1
        %v3803 = vld [vmem:[%s3802] sm:$0x1]
        %v3805 = vlaneseq
        %v3806 = vshrl.u32 %v3805, 7
        %v3807 = vsub.s32 0, %v3806
        %v3808 = vrot.slane %v3803, %v3807
        %v3810 = vadd.f32 %v3801, %v3808
        %vm3811 = vcmp.ge.f32.partialorder %v3810, 0.0
        %v3812 = vmul.f32 %v3810, 0.01
        %v3813 = vsel %vm3811, %v3810, %v3812
        %3814 = vst [vmem:[%s1513] sm:$0xf] %v3813
        %v3815 = vpack.c.bf16 %v3813, %v3813
        %v3816 = vld [vmem:[#allocation38] sm:$0xf]
        %v3817 = vld [vmem:[#allocation38 + $0x4] sm:$0xf]
        %v3818 = vld [vmem:[#allocation38 + $0x8] sm:$0xf]
        %v3819 = vld [vmem:[#allocation38 + $0xc] sm:$0xf]
        %v3820 = vld [vmem:[#allocation38 + $0x10] sm:$0xf]
        %v3821 = vld [vmem:[#allocation38 + $0x14] sm:$0xf]
        %v3822 = vld [vmem:[#allocation38 + $0x18] sm:$0xf]
        %v3823 = vld [vmem:[#allocation38 + $0x1c] sm:$0xf]
        %v3824 = vld [vmem:[#allocation38 + $0x20] sm:$0xf]
        %v3825 = vld [vmem:[#allocation38 + $0x24] sm:$0xf]
        %v3826 = vld [vmem:[#allocation38 + $0x28] sm:$0xf]
        %v3827 = vld [vmem:[#allocation38 + $0x2c] sm:$0xf]
        %v3828 = vld [vmem:[#allocation38 + $0x30] sm:$0xf]
        %v3829 = vld [vmem:[#allocation38 + $0x34] sm:$0xf]
        %v3830 = vld [vmem:[#allocation38 + $0x38] sm:$0xf]
        %v3831 = vld [vmem:[#allocation38 + $0x3c] sm:$0xf]
        %v3848 = vunpack.c.l.b16 %v3816
        %v3849 = vunpack.c.l.b16 %v3817
        %v3850 = vunpack.c.l.b16 %v3818
        %v3851 = vunpack.c.l.b16 %v3819
        %v3852 = vunpack.c.l.b16 %v3820
        %v3853 = vunpack.c.l.b16 %v3821
        %v3854 = vunpack.c.l.b16 %v3822
        %v3855 = vunpack.c.l.b16 %v3823
        %v3856 = vunpack.c.l.b16 %v3824
        %v3857 = vunpack.c.l.b16 %v3825
        %v3858 = vunpack.c.l.b16 %v3826
        %v3859 = vunpack.c.l.b16 %v3827
        %v3860 = vunpack.c.l.b16 %v3828
        %v3861 = vunpack.c.l.b16 %v3829
        %v3862 = vunpack.c.l.b16 %v3830
        %v3863 = vunpack.c.l.b16 %v3831
        %v3864 = vpack.c.b16 %v3849, %v3848
        %v3865 = vpack.c.b16 %v3851, %v3850
        %v3866 = vpack.c.b16 %v3853, %v3852
        %v3867 = vpack.c.b16 %v3855, %v3854
        %v3868 = vpack.c.b16 %v3857, %v3856
        %v3869 = vpack.c.b16 %v3859, %v3858
        %v3870 = vpack.c.b16 %v3861, %v3860
        %v3871 = vpack.c.b16 %v3863, %v3862
        %3880 = vmatprep.subr.bf16.mxu0 0
        %3881 = vmatpush1.bf16.msra.mxu0 %v3864
        %3882 = vmatprep.subr.bf16.mxu0 0
        %3883 = vmatpush1.bf16.msra.mxu0 %v3865
        %3884 = vmatprep.subr.bf16.mxu0 0
        %3885 = vmatpush1.bf16.msra.mxu0 %v3866
        %3886 = vmatprep.subr.bf16.mxu0 0
        %3887 = vmatpush1.bf16.msra.mxu0 %v3867
        %3888 = vmatprep.subr.bf16.mxu0 0
        %3889 = vmatpush1.bf16.msra.mxu0 %v3868
        %3890 = vmatprep.subr.bf16.mxu0 0
        %3891 = vmatpush1.bf16.msra.mxu0 %v3869
        %3892 = vmatprep.subr.bf16.mxu0 0
        %3893 = vmatpush1.bf16.msra.mxu0 %v3870
        %3894 = vmatprep.subr.bf16.mxu0 0
        %3895 = vmatpush1.bf16.msra.mxu0 %v3871
        %3896 = vmatprep.subr.bf16.mxu0 0
        %3897 = vmatpush1.bf16.msra.mxu0 0
        %3898 = vmatprep.subr.bf16.mxu0 0
        %3899 = vmatpush1.bf16.msra.mxu0 0
        %3900 = vmatprep.subr.bf16.mxu0 0
        %3901 = vmatpush1.bf16.msra.mxu0 0
        %3902 = vmatprep.subr.bf16.mxu0 0
        %3903 = vmatpush1.bf16.msra.mxu0 0
        %3904 = vmatprep.subr.bf16.mxu0 0
        %3905 = vmatpush1.bf16.msra.mxu0 0
        %3906 = vmatprep.subr.bf16.mxu0 0
        %3907 = vmatpush1.bf16.msra.mxu0 0
        %3908 = vmatprep.subr.bf16.mxu0 0
        %3909 = vmatpush1.bf16.msra.mxu0 0
        %3910 = vmatprep.subr.bf16.mxu0 0
        %3911 = vmatpush1.bf16.msra.mxu0 0
        %3912 = vmatprep.mubr.bf16.mxu0 0
        %3913 = vmatmul.mubr.bf16.gmra.mrb[0].mxu0 %v3815
        %v3914 = vpop.f32.mrb[0].mxu0
        %v3915 = vadd.f32 0.0, %v3914
        %v3916 = vpop.f32.mrb[0].mxu0
        %v3917 = vpop.f32.mrb[0].mxu0
        %v3918 = vpop.f32.mrb[0].mxu0
        %3919 = vdwg.mxu0
        %3921 = vrot.lane.b32.xlu0 %v3915, 64
        %v3922 = vpop.permute.xlu0 %3921
        %v3924 = vmax.f32 %v3915, %v3922
        %v3925 = vpack.c.bf16 %v3924, %v3924
        %v3926 = vld [vmem:[%s61] sm:$0x3]
        %v3928 = vsel %vm3177, %v3926, 0
        %v3931 = vsel %vm3181, %v3925, 0
        %3933 = vmatprep.subr.bf16.mxu0 0
        %3934 = vmatpush1.bf16.msra.mxu0 %v3931
        %3935 = vmatprep.subr.bf16.mxu0 0
        %3936 = vmatpush1.bf16.msra.mxu0 0
        %3937 = vmatprep.subr.bf16.mxu0 0
        %3938 = vmatpush1.bf16.msra.mxu0 0
        %3939 = vmatprep.subr.bf16.mxu0 0
        %3940 = vmatpush1.bf16.msra.mxu0 0
        %3941 = vmatprep.subr.bf16.mxu0 0
        %3942 = vmatpush1.bf16.msra.mxu0 0
        %3943 = vmatprep.subr.bf16.mxu0 0
        %3944 = vmatpush1.bf16.msra.mxu0 0
        %3945 = vmatprep.subr.bf16.mxu0 0
        %3946 = vmatpush1.bf16.msra.mxu0 0
        %3947 = vmatprep.subr.bf16.mxu0 0
        %3948 = vmatpush1.bf16.msra.mxu0 0
        %3949 = vmatprep.subr.bf16.mxu0 0
        %3950 = vmatpush1.bf16.msra.mxu0 0
        %3951 = vmatprep.subr.bf16.mxu0 0
        %3952 = vmatpush1.bf16.msra.mxu0 0
        %3953 = vmatprep.subr.bf16.mxu0 0
        %3954 = vmatpush1.bf16.msra.mxu0 0
        %3955 = vmatprep.subr.bf16.mxu0 0
        %3956 = vmatpush1.bf16.msra.mxu0 0
        %3957 = vmatprep.subr.bf16.mxu0 0
        %3958 = vmatpush1.bf16.msra.mxu0 0
        %3959 = vmatprep.subr.bf16.mxu0 0
        %3960 = vmatpush1.bf16.msra.mxu0 0
        %3961 = vmatprep.subr.bf16.mxu0 0
        %3962 = vmatpush1.bf16.msra.mxu0 0
        %3963 = vmatprep.subr.bf16.mxu0 0
        %3964 = vmatpush1.bf16.msra.mxu0 0
        %3965 = vmatprep.mubr.bf16.mxu0 0
        %3966 = vmatmul.mubr.bf16.gmra.mrb[0].mxu0 %v3928
        %v3967 = vpop.f32.mrb[0].mxu0
        %v3968 = vadd.f32 0.0, %v3967
        %v3969 = vpop.f32.mrb[0].mxu0
        %v3970 = vpop.f32.mrb[0].mxu0
        %v3971 = vpop.f32.mrb[0].mxu0
        %3972 = vdwg.mxu0
        %v3974 = vrot.slane %v3968, 2
        %v3976 = vmax.f32 %v3968, %v3974
        %v3977 = vpack.c.bf16 %v3976, %v3976
        %v3978 = vld [vmem:[#allocation35] sm:$0x1]
        %s3979 = scalar_lea.vmem [#allocation35], 1
        %v3980 = vld [vmem:[%s3979] sm:$0x1]
        %vm3981 = vcmask 15360
        %v3983 = vsel %vm3981, %v3978, 0
        %vm3985 = vcmask 1040384
        %v3987 = vsel %vm3985, %v3977, 0
        %3989 = vmatprep.subr.bf16.mxu0 0
        %3990 = vmatpush1.bf16.msra.mxu0 %v3987
        %3991 = vmatprep.subr.bf16.mxu0 0
        %3992 = vmatpush1.bf16.msra.mxu0 0
        %3993 = vmatprep.subr.bf16.mxu0 0
        %3994 = vmatpush1.bf16.msra.mxu0 0
        %3995 = vmatprep.subr.bf16.mxu0 0
        %3996 = vmatpush1.bf16.msra.mxu0 0
        %3997 = vmatprep.subr.bf16.mxu0 0
        %3998 = vmatpush1.bf16.msra.mxu0 0
        %3999 = vmatprep.subr.bf16.mxu0 0
        %4000 = vmatpush1.bf16.msra.mxu0 0
        %4001 = vmatprep.subr.bf16.mxu0 0
        %4002 = vmatpush1.bf16.msra.mxu0 0
        %4003 = vmatprep.subr.bf16.mxu0 0
        %4004 = vmatpush1.bf16.msra.mxu0 0
        %4005 = vmatprep.subr.bf16.mxu0 0
        %4006 = vmatpush1.bf16.msra.mxu0 0
        %4007 = vmatprep.subr.bf16.mxu0 0
        %4008 = vmatpush1.bf16.msra.mxu0 0
        %4009 = vmatprep.subr.bf16.mxu0 0
        %4010 = vmatpush1.bf16.msra.mxu0 0
        %4011 = vmatprep.subr.bf16.mxu0 0
        %4012 = vmatpush1.bf16.msra.mxu0 0
        %4013 = vmatprep.subr.bf16.mxu0 0
        %4014 = vmatpush1.bf16.msra.mxu0 0
        %4015 = vmatprep.subr.bf16.mxu0 0
        %4016 = vmatpush1.bf16.msra.mxu0 0
        %4017 = vmatprep.subr.bf16.mxu0 0
        %4018 = vmatpush1.bf16.msra.mxu0 0
        %4019 = vmatprep.subr.bf16.mxu0 0
        %4020 = vmatpush1.bf16.msra.mxu0 0
        %4021 = vmatprep.mubr.bf16.mxu0 0
        %4022 = vmatmul.mubr.bf16.gmra.mrb[0].mxu0 %v3983
        %v4023 = vpop.f32.mrb[0].mxu0
        %v4024 = vadd.f32 0.0, %v4023
        %v4025 = vpop.f32.mrb[0].mxu0
        %v4026 = vpop.f32.mrb[0].mxu0
        %v4027 = vpop.f32.mrb[0].mxu0
        %4028 = vdwg.mxu0
        %v4029 = vpack.c.bf16 %v4024, %v4024
        %v4031 = vsel %vm3981, %v3980, 0
        %4033 = vmatprep.subr.bf16.mxu0 0
        %4034 = vmatpush1.bf16.msra.mxu0 %v3987
        %4035 = vmatprep.subr.bf16.mxu0 0
        %4036 = vmatpush1.bf16.msra.mxu0 0
        %4037 = vmatprep.subr.bf16.mxu0 0
        %4038 = vmatpush1.bf16.msra.mxu0 0
        %4039 = vmatprep.subr.bf16.mxu0 0
        %4040 = vmatpush1.bf16.msra.mxu0 0
        %4041 = vmatprep.subr.bf16.mxu0 0
        %4042 = vmatpush1.bf16.msra.mxu0 0
        %4043 = vmatprep.subr.bf16.mxu0 0
        %4044 = vmatpush1.bf16.msra.mxu0 0
        %4045 = vmatprep.subr.bf16.mxu0 0
        %4046 = vmatpush1.bf16.msra.mxu0 0
        %4047 = vmatprep.subr.bf16.mxu0 0
        %4048 = vmatpush1.bf16.msra.mxu0 0
        %4049 = vmatprep.subr.bf16.mxu0 0
        %4050 = vmatpush1.bf16.msra.mxu0 0
        %4051 = vmatprep.subr.bf16.mxu0 0
        %4052 = vmatpush1.bf16.msra.mxu0 0
        %4053 = vmatprep.subr.bf16.mxu0 0
        %4054 = vmatpush1.bf16.msra.mxu0 0
        %4055 = vmatprep.subr.bf16.mxu0 0
        %4056 = vmatpush1.bf16.msra.mxu0 0
        %4057 = vmatprep.subr.bf16.mxu0 0
        %4058 = vmatpush1.bf16.msra.mxu0 0
        %4059 = vmatprep.subr.bf16.mxu0 0
        %4060 = vmatpush1.bf16.msra.mxu0 0
        %4061 = vmatprep.subr.bf16.mxu0 0
        %4062 = vmatpush1.bf16.msra.mxu0 0
        %4063 = vmatprep.subr.bf16.mxu0 0
        %4064 = vmatpush1.bf16.msra.mxu0 0
        %4065 = vmatprep.mubr.bf16.mxu0 0
        %4066 = vmatmul.mubr.bf16.gmra.mrb[0].mxu0 %v4031
        %v4067 = vpop.f32.mrb[0].mxu0
        %v4068 = vadd.f32 0.0, %v4067
        %v4069 = vpop.f32.mrb[0].mxu0
        %v4070 = vpop.f32.mrb[0].mxu0
        %v4071 = vpop.f32.mrb[0].mxu0
        %4072 = vdwg.mxu0
        %v4073 = vpack.c.bf16 %v4068, %v4068
        %4075 = vrot.lane.b32.xlu0 %v3977, 64
        %v4076 = vpop.permute.xlu0 %4075
        %v4079 = vsel %vm1644, %v4029, %v4076
        %v4081 = vld [vmem:[#allocation22] sm:$0xf]
        %v4082 = vld [vmem:[#allocation22 + $0x4] sm:$0xf]
        %v4083 = vld [vmem:[#allocation22 + $0x8] sm:$0xf]
        %v4084 = vld [vmem:[#allocation22 + $0xc] sm:$0xf]
        %v4085 = vld [vmem:[#allocation22 + $0x10] sm:$0xf]
        %v4086 = vld [vmem:[#allocation22 + $0x14] sm:$0xf]
        %v4087 = vld [vmem:[#allocation22 + $0x18] sm:$0xf]
        %v4088 = vld [vmem:[#allocation22 + $0x1c] sm:$0xf]
        %v4089 = vld [vmem:[#allocation22 + $0x20] sm:$0xf]
        %v4090 = vld [vmem:[#allocation22 + $0x24] sm:$0xf]
        %v4091 = vld [vmem:[#allocation22 + $0x28] sm:$0xf]
        %v4092 = vld [vmem:[#allocation22 + $0x2c] sm:$0xf]
        %v4093 = vld [vmem:[#allocation22 + $0x30] sm:$0xf]
        %v4094 = vld [vmem:[#allocation22 + $0x34] sm:$0xf]
        %v4095 = vld [vmem:[#allocation22 + $0x38] sm:$0xf]
        %v4096 = vld [vmem:[#allocation22 + $0x3c] sm:$0xf]
        %v4097 = vld [vmem:[#allocation22 + $0x40] sm:$0xf]
        %v4098 = vld [vmem:[#allocation22 + $0x44] sm:$0xf]
        %v4099 = vld [vmem:[#allocation22 + $0x48] sm:$0xf]
        %v4100 = vld [vmem:[#allocation22 + $0x4c] sm:$0xf]
        %v4101 = vld [vmem:[#allocation22 + $0x50] sm:$0xf]
        %v4102 = vld [vmem:[#allocation22 + $0x54] sm:$0xf]
        %v4103 = vld [vmem:[#allocation22 + $0x58] sm:$0xf]
        %v4104 = vld [vmem:[#allocation22 + $0x5c] sm:$0xf]
        %v4129 = vunpack.c.l.b16 %v4081
        %v4130 = vunpack.c.l.b16 %v4082
        %v4131 = vunpack.c.l.b16 %v4083
        %v4132 = vunpack.c.l.b16 %v4084
        %v4133 = vunpack.c.l.b16 %v4085
        %v4134 = vunpack.c.l.b16 %v4086
        %v4135 = vunpack.c.l.b16 %v4087
        %v4136 = vunpack.c.l.b16 %v4088
        %v4137 = vunpack.c.l.b16 %v4089
        %v4138 = vunpack.c.l.b16 %v4090
        %v4139 = vunpack.c.l.b16 %v4091
        %v4140 = vunpack.c.l.b16 %v4092
        %v4141 = vunpack.c.l.b16 %v4093
        %v4142 = vunpack.c.l.b16 %v4094
        %v4143 = vunpack.c.l.b16 %v4095
        %v4144 = vunpack.c.l.b16 %v4096
        %v4145 = vunpack.c.l.b16 %v4097
        %v4146 = vunpack.c.l.b16 %v4098
        %v4147 = vunpack.c.l.b16 %v4099
        %v4148 = vunpack.c.l.b16 %v4100
        %v4149 = vunpack.c.l.b16 %v4101
        %v4150 = vunpack.c.l.b16 %v4102
        %v4151 = vunpack.c.l.b16 %v4103
        %v4152 = vunpack.c.l.b16 %v4104
        %v4153 = vpack.c.b16 %v4130, %v4129
        %v4154 = vpack.c.b16 %v4132, %v4131
        %v4155 = vpack.c.b16 %v4134, %v4133
        %v4156 = vpack.c.b16 %v4136, %v4135
        %v4157 = vpack.c.b16 %v4138, %v4137
        %v4158 = vpack.c.b16 %v4140, %v4139
        %v4159 = vpack.c.b16 %v4142, %v4141
        %v4160 = vpack.c.b16 %v4144, %v4143
        %v4161 = vpack.c.b16 %v4146, %v4145
        %v4162 = vpack.c.b16 %v4148, %v4147
        %v4163 = vpack.c.b16 %v4150, %v4149
        %v4164 = vpack.c.b16 %v4152, %v4151
        %v4178 = vsel %vm1644, %v4073, 0
        %4180 = vmatprep.subr.bf16.mxu0 0
        %4181 = vmatpush1.bf16.msra.mxu0 %v4153
        %4182 = vmatprep.subr.bf16.mxu0 0
        %4183 = vmatpush1.bf16.msra.mxu0 %v4154
        %4184 = vmatprep.subr.bf16.mxu0 0
        %4185 = vmatpush1.bf16.msra.mxu0 %v4155
        %4186 = vmatprep.subr.bf16.mxu0 0
        %4187 = vmatpush1.bf16.msra.mxu0 %v4156
        %4188 = vmatprep.subr.bf16.mxu0 0
        %4189 = vmatpush1.bf16.msra.mxu0 %v4157
        %4190 = vmatprep.subr.bf16.mxu0 0
        %4191 = vmatpush1.bf16.msra.mxu0 %v4158
        %4192 = vmatprep.subr.bf16.mxu0 0
        %4193 = vmatpush1.bf16.msra.mxu0 %v4159
        %4194 = vmatprep.subr.bf16.mxu0 0
        %4195 = vmatpush1.bf16.msra.mxu0 %v4160
        %4196 = vmatprep.subr.bf16.mxu0 0
        %4197 = vmatpush1.bf16.msra.mxu0 %v4161
        %4198 = vmatprep.subr.bf16.mxu0 0
        %4199 = vmatpush1.bf16.msra.mxu0 %v4162
        %4200 = vmatprep.subr.bf16.mxu0 0
        %4201 = vmatpush1.bf16.msra.mxu0 %v4163
        %4202 = vmatprep.subr.bf16.mxu0 0
        %4203 = vmatpush1.bf16.msra.mxu0 %v4164
        %4204 = vmatprep.subr.bf16.mxu0 0
        %4205 = vmatpush1.bf16.msra.mxu0 0
        %4206 = vmatprep.subr.bf16.mxu0 0
        %4207 = vmatpush1.bf16.msra.mxu0 0
        %4208 = vmatprep.subr.bf16.mxu0 0
        %4209 = vmatpush1.bf16.msra.mxu0 0
        %4210 = vmatprep.subr.bf16.mxu0 0
        %4211 = vmatpush1.bf16.msra.mxu0 0
        %4212 = vmatprep.mubr.bf16.mxu0 %v4178
        %4213 = vmatmul.mubr.bf16.gmra.mrb[0].mxu0 %v4079
        %v4214 = vpop.f32.mrb[0].mxu0
        %v4215 = vadd.f32 0.0, %v4214
        %v4216 = vpop.f32.mrb[0].mxu0
        %v4217 = vpop.f32.mrb[0].mxu0
        %v4218 = vpop.f32.mrb[0].mxu0
        %4219 = vdwg.mxu0
        %v4220 = vld [vmem:[#allocation23] sm:$0x1]
        %v4222 = vlaneseq
        %v4223 = vshrl.u32 %v4222, 7
        %v4224 = vsub.s32 0, %v4223
        %v4225 = vrot.slane %v4220, %v4224
        %v4227 = vmul.f32 %v4215, %v4225
        %s4228 = scalar_lea.vmem [#allocation23], 1
        %v4229 = vld [vmem:[%s4228] sm:$0x1]
        %v4231 = vlaneseq
        %v4232 = vshrl.u32 %v4231, 7
        %v4233 = vsub.s32 0, %v4232
        %v4234 = vrot.slane %v4229, %v4233
        %v4236 = vadd.f32 %v4227, %v4234
        %vm4237 = vcmp.ge.f32.partialorder %v4236, 0.0
        %v4238 = vmul.f32 %v4236, 0.01
        %v4239 = vsel %vm4237, %v4236, %v4238
        %v4240 = vpack.c.bf16 %v4239, %v4239
        %v4242 = vsel %vm3985, %v4240, 0
        %4244 = vmatprep.subr.bf16.mxu0 0
        %4245 = vmatpush1.bf16.msra.mxu0 %v4242
        %4246 = vmatprep.subr.bf16.mxu0 0
        %4247 = vmatpush1.bf16.msra.mxu0 0
        %4248 = vmatprep.subr.bf16.mxu0 0
        %4249 = vmatpush1.bf16.msra.mxu0 0
        %4250 = vmatprep.subr.bf16.mxu0 0
        %4251 = vmatpush1.bf16.msra.mxu0 0
        %4252 = vmatprep.subr.bf16.mxu0 0
        %4253 = vmatpush1.bf16.msra.mxu0 0
        %4254 = vmatprep.subr.bf16.mxu0 0
        %4255 = vmatpush1.bf16.msra.mxu0 0
        %4256 = vmatprep.subr.bf16.mxu0 0
        %4257 = vmatpush1.bf16.msra.mxu0 0
        %4258 = vmatprep.subr.bf16.mxu0 0
        %4259 = vmatpush1.bf16.msra.mxu0 0
        %4260 = vmatprep.subr.bf16.mxu0 0
        %4261 = vmatpush1.bf16.msra.mxu0 0
        %4262 = vmatprep.subr.bf16.mxu0 0
        %4263 = vmatpush1.bf16.msra.mxu0 0
        %4264 = vmatprep.subr.bf16.mxu0 0
        %4265 = vmatpush1.bf16.msra.mxu0 0
        %4266 = vmatprep.subr.bf16.mxu0 0
        %4267 = vmatpush1.bf16.msra.mxu0 0
        %4268 = vmatprep.subr.bf16.mxu0 0
        %4269 = vmatpush1.bf16.msra.mxu0 0
        %4270 = vmatprep.subr.bf16.mxu0 0
        %4271 = vmatpush1.bf16.msra.mxu0 0
        %4272 = vmatprep.subr.bf16.mxu0 0
        %4273 = vmatpush1.bf16.msra.mxu0 0
        %4274 = vmatprep.subr.bf16.mxu0 0
        %4275 = vmatpush1.bf16.msra.mxu0 0
        %4276 = vmatprep.mubr.bf16.mxu0 0
        %4277 = vmatmul.mubr.bf16.gmra.mrb[0].mxu0 %v3983
        %v4278 = vpop.f32.mrb[0].mxu0
        %v4279 = vadd.f32 0.0, %v4278
        %v4280 = vpop.f32.mrb[0].mxu0
        %v4281 = vpop.f32.mrb[0].mxu0
        %v4282 = vpop.f32.mrb[0].mxu0
        %4283 = vdwg.mxu0
        %v4284 = vpack.c.bf16 %v4279, %v4279
        %4285 = vmatprep.subr.bf16.mxu0 0
        %4286 = vmatpush1.bf16.msra.mxu0 %v4242
        %4287 = vmatprep.subr.bf16.mxu0 0
        %4288 = vmatpush1.bf16.msra.mxu0 0
        %4289 = vmatprep.subr.bf16.mxu0 0
        %4290 = vmatpush1.bf16.msra.mxu0 0
        %4291 = vmatprep.subr.bf16.mxu0 0
        %4292 = vmatpush1.bf16.msra.mxu0 0
        %4293 = vmatprep.subr.bf16.mxu0 0
        %4294 = vmatpush1.bf16.msra.mxu0 0
        %4295 = vmatprep.subr.bf16.mxu0 0
        %4296 = vmatpush1.bf16.msra.mxu0 0
        %4297 = vmatprep.subr.bf16.mxu0 0
        %4298 = vmatpush1.bf16.msra.mxu0 0
        %4299 = vmatprep.subr.bf16.mxu0 0
        %4300 = vmatpush1.bf16.msra.mxu0 0
        %4301 = vmatprep.subr.bf16.mxu0 0
        %4302 = vmatpush1.bf16.msra.mxu0 0
        %4303 = vmatprep.subr.bf16.mxu0 0
        %4304 = vmatpush1.bf16.msra.mxu0 0
        %4305 = vmatprep.subr.bf16.mxu0 0
        %4306 = vmatpush1.bf16.msra.mxu0 0
        %4307 = vmatprep.subr.bf16.mxu0 0
        %4308 = vmatpush1.bf16.msra.mxu0 0
        %4309 = vmatprep.subr.bf16.mxu0 0
        %4310 = vmatpush1.bf16.msra.mxu0 0
        %4311 = vmatprep.subr.bf16.mxu0 0
        %4312 = vmatpush1.bf16.msra.mxu0 0
        %4313 = vmatprep.subr.bf16.mxu0 0
        %4314 = vmatpush1.bf16.msra.mxu0 0
        %4315 = vmatprep.subr.bf16.mxu0 0
        %4316 = vmatpush1.bf16.msra.mxu0 0
        %4317 = vmatprep.mubr.bf16.mxu0 0
        %4318 = vmatmul.mubr.bf16.gmra.mrb[0].mxu0 %v4031
        %v4319 = vpop.f32.mrb[0].mxu0
        %v4320 = vadd.f32 0.0, %v4319
        %v4321 = vpop.f32.mrb[0].mxu0
        %v4322 = vpop.f32.mrb[0].mxu0
        %v4323 = vpop.f32.mrb[0].mxu0
        %4324 = vdwg.mxu0
        %v4325 = vpack.c.bf16 %v4320, %v4320
        %v4326 = vld [vmem:[#allocation25] sm:$0xf]
        %v4327 = vld [vmem:[#allocation25 + $0x4] sm:$0xf]
        %v4328 = vld [vmem:[#allocation25 + $0x8] sm:$0xf]
        %v4329 = vld [vmem:[#allocation25 + $0xc] sm:$0xf]
        %v4330 = vld [vmem:[#allocation25 + $0x10] sm:$0xf]
        %v4331 = vld [vmem:[#allocation25 + $0x14] sm:$0xf]
        %v4332 = vld [vmem:[#allocation25 + $0x18] sm:$0xf]
        %v4333 = vld [vmem:[#allocation25 + $0x1c] sm:$0xf]
        %v4334 = vld [vmem:[#allocation25 + $0x20] sm:$0xf]
        %v4335 = vld [vmem:[#allocation25 + $0x24] sm:$0xf]
        %v4336 = vld [vmem:[#allocation25 + $0x28] sm:$0xf]
        %v4337 = vld [vmem:[#allocation25 + $0x2c] sm:$0xf]
        %v4338 = vld [vmem:[#allocation25 + $0x30] sm:$0xf]
        %v4339 = vld [vmem:[#allocation25 + $0x34] sm:$0xf]
        %v4340 = vld [vmem:[#allocation25 + $0x38] sm:$0xf]
        %v4341 = vld [vmem:[#allocation25 + $0x3c] sm:$0xf]
        %v4342 = vld [vmem:[#allocation25 + $0x40] sm:$0xf]
        %v4343 = vld [vmem:[#allocation25 + $0x44] sm:$0xf]
        %v4344 = vld [vmem:[#allocation25 + $0x48] sm:$0xf]
        %v4345 = vld [vmem:[#allocation25 + $0x4c] sm:$0xf]
        %v4346 = vld [vmem:[#allocation25 + $0x50] sm:$0xf]
        %v4347 = vld [vmem:[#allocation25 + $0x54] sm:$0xf]
        %v4348 = vld [vmem:[#allocation25 + $0x58] sm:$0xf]
        %v4349 = vld [vmem:[#allocation25 + $0x5c] sm:$0xf]
        %v4350 = vld [vmem:[#allocation25 + $0x60] sm:$0xf]
        %v4351 = vld [vmem:[#allocation25 + $0x64] sm:$0xf]
        %v4352 = vld [vmem:[#allocation25 + $0x68] sm:$0xf]
        %v4353 = vld [vmem:[#allocation25 + $0x6c] sm:$0xf]
        %v4354 = vld [vmem:[#allocation25 + $0x70] sm:$0xf]
        %v4355 = vld [vmem:[#allocation25 + $0x74] sm:$0xf]
        %v4356 = vld [vmem:[#allocation25 + $0x78] sm:$0xf]
        %v4357 = vld [vmem:[#allocation25 + $0x7c] sm:$0xf]
        %v4358 = vld [vmem:[#allocation25 + $0x80] sm:$0xf]
        %v4359 = vld [vmem:[#allocation25 + $0x84] sm:$0xf]
        %v4360 = vld [vmem:[#allocation25 + $0x88] sm:$0xf]
        %v4361 = vld [vmem:[#allocation25 + $0x8c] sm:$0xf]
        %v4362 = vld [vmem:[#allocation25 + $0x90] sm:$0xf]
        %v4363 = vld [vmem:[#allocation25 + $0x94] sm:$0xf]
        %v4364 = vld [vmem:[#allocation25 + $0x98] sm:$0xf]
        %v4365 = vld [vmem:[#allocation25 + $0x9c] sm:$0xf]
        %v4366 = vld [vmem:[#allocation25 + $0xa0] sm:$0xf]
        %v4367 = vld [vmem:[#allocation25 + $0xa4] sm:$0xf]
        %v4368 = vld [vmem:[#allocation25 + $0xa8] sm:$0xf]
        %v4369 = vld [vmem:[#allocation25 + $0xac] sm:$0xf]
        %v4370 = vld [vmem:[#allocation25 + $0xb0] sm:$0xf]
        %v4371 = vld [vmem:[#allocation25 + $0xb4] sm:$0xf]
        %v4372 = vld [vmem:[#allocation25 + $0xb8] sm:$0xf]
        %v4373 = vld [vmem:[#allocation25 + $0xbc] sm:$0xf]
        %v4422 = vunpack.c.l.b16 %v4326
        %v4423 = vunpack.c.l.b16 %v4327
        %v4424 = vunpack.c.l.b16 %v4328
        %v4425 = vunpack.c.l.b16 %v4329
        %v4426 = vunpack.c.l.b16 %v4330
        %v4427 = vunpack.c.l.b16 %v4331
        %v4428 = vunpack.c.l.b16 %v4332
        %v4429 = vunpack.c.l.b16 %v4333
        %v4430 = vunpack.c.l.b16 %v4334
        %v4431 = vunpack.c.l.b16 %v4335
        %v4432 = vunpack.c.l.b16 %v4336
        %v4433 = vunpack.c.l.b16 %v4337
        %v4434 = vunpack.c.l.b16 %v4338
        %v4435 = vunpack.c.l.b16 %v4339
        %v4436 = vunpack.c.l.b16 %v4340
        %v4437 = vunpack.c.l.b16 %v4341
        %v4438 = vunpack.c.l.b16 %v4342
        %v4439 = vunpack.c.l.b16 %v4343
        %v4440 = vunpack.c.l.b16 %v4344
        %v4441 = vunpack.c.l.b16 %v4345
        %v4442 = vunpack.c.l.b16 %v4346
        %v4443 = vunpack.c.l.b16 %v4347
        %v4444 = vunpack.c.l.b16 %v4348
        %v4445 = vunpack.c.l.b16 %v4349
        %v4446 = vunpack.c.l.b16 %v4350
        %v4447 = vunpack.c.l.b16 %v4351
        %v4448 = vunpack.c.l.b16 %v4352
        %v4449 = vunpack.c.l.b16 %v4353
        %v4450 = vunpack.c.l.b16 %v4354
        %v4451 = vunpack.c.l.b16 %v4355
        %v4452 = vunpack.c.l.b16 %v4356
        %v4453 = vunpack.c.l.b16 %v4357
        %v4454 = vunpack.c.l.b16 %v4358
        %v4455 = vunpack.c.l.b16 %v4359
        %v4456 = vunpack.c.l.b16 %v4360
        %v4457 = vunpack.c.l.b16 %v4361
        %v4458 = vunpack.c.l.b16 %v4362
        %v4459 = vunpack.c.l.b16 %v4363
        %v4460 = vunpack.c.l.b16 %v4364
        %v4461 = vunpack.c.l.b16 %v4365
        %v4462 = vunpack.c.l.b16 %v4366
        %v4463 = vunpack.c.l.b16 %v4367
        %v4464 = vunpack.c.l.b16 %v4368
        %v4465 = vunpack.c.l.b16 %v4369
        %v4466 = vunpack.c.l.b16 %v4370
        %v4467 = vunpack.c.l.b16 %v4371
        %v4468 = vunpack.c.l.b16 %v4372
        %v4469 = vunpack.c.l.b16 %v4373
        %v4470 = vpack.c.b16 %v4423, %v4422
        %v4471 = vpack.c.b16 %v4425, %v4424
        %v4472 = vpack.c.b16 %v4427, %v4426
        %v4473 = vpack.c.b16 %v4429, %v4428
        %v4474 = vpack.c.b16 %v4431, %v4430
        %v4475 = vpack.c.b16 %v4433, %v4432
        %v4476 = vpack.c.b16 %v4435, %v4434
        %v4477 = vpack.c.b16 %v4437, %v4436
        %v4478 = vpack.c.b16 %v4439, %v4438
        %v4479 = vpack.c.b16 %v4441, %v4440
        %v4480 = vpack.c.b16 %v4443, %v4442
        %v4481 = vpack.c.b16 %v4445, %v4444
        %v4482 = vpack.c.b16 %v4447, %v4446
        %v4483 = vpack.c.b16 %v4449, %v4448
        %v4484 = vpack.c.b16 %v4451, %v4450
        %v4485 = vpack.c.b16 %v4453, %v4452
        %v4486 = vpack.c.b16 %v4455, %v4454
        %v4487 = vpack.c.b16 %v4457, %v4456
        %v4488 = vpack.c.b16 %v4459, %v4458
        %v4489 = vpack.c.b16 %v4461, %v4460
        %v4490 = vpack.c.b16 %v4463, %v4462
        %v4491 = vpack.c.b16 %v4465, %v4464
        %v4492 = vpack.c.b16 %v4467, %v4466
        %v4493 = vpack.c.b16 %v4469, %v4468
        %4518 = vmatprep.subr.bf16.mxu0 0
        %4519 = vmatpush1.bf16.msra.mxu0 %v4470
        %4520 = vmatprep.subr.bf16.mxu0 0
        %4521 = vmatpush1.bf16.msra.mxu0 %v4471
        %4522 = vmatprep.subr.bf16.mxu0 0
        %4523 = vmatpush1.bf16.msra.mxu0 %v4472
        %4524 = vmatprep.subr.bf16.mxu0 0
        %4525 = vmatpush1.bf16.msra.mxu0 %v4473
        %4526 = vmatprep.subr.bf16.mxu0 0
        %4527 = vmatpush1.bf16.msra.mxu0 %v4474
        %4528 = vmatprep.subr.bf16.mxu0 0
        %4529 = vmatpush1.bf16.msra.mxu0 %v4475
        %4530 = vmatprep.subr.bf16.mxu0 0
        %4531 = vmatpush1.bf16.msra.mxu0 %v4476
        %4532 = vmatprep.subr.bf16.mxu0 0
        %4533 = vmatpush1.bf16.msra.mxu0 %v4477
        %4534 = vmatprep.subr.bf16.mxu0 0
        %4535 = vmatpush1.bf16.msra.mxu0 %v4478
        %4536 = vmatprep.subr.bf16.mxu0 0
        %4537 = vmatpush1.bf16.msra.mxu0 %v4479
        %4538 = vmatprep.subr.bf16.mxu0 0
        %4539 = vmatpush1.bf16.msra.mxu0 %v4480
        %4540 = vmatprep.subr.bf16.mxu0 0
        %4541 = vmatpush1.bf16.msra.mxu0 %v4481
        %4542 = vmatprep.subr.bf16.mxu0 0
        %4543 = vmatpush1.bf16.msra.mxu0 %v4482
        %4544 = vmatprep.subr.bf16.mxu0 0
        %4545 = vmatpush1.bf16.msra.mxu0 %v4483
        %4546 = vmatprep.subr.bf16.mxu0 0
        %4547 = vmatpush1.bf16.msra.mxu0 %v4484
        %4548 = vmatprep.subr.bf16.mxu0 0
        %4549 = vmatpush1.bf16.msra.mxu0 %v4485
        %4550 = vmatprep.mubr.bf16.mxu0 %v4240
        %4551 = vmatmul.mubr.bf16.gmra.mrb[0].mxu0 %v4284
        %v4552 = vpop.f32.mrb[0].mxu0
        %v4553 = vadd.f32 0.0, %v4552
        %v4554 = vpop.f32.mrb[0].mxu0
        %v4555 = vpop.f32.mrb[0].mxu0
        %v4556 = vpop.f32.mrb[0].mxu0
        %4557 = vdwg.mxu0
        %4558 = vmatprep.subr.bf16.mxu0 0
        %4559 = vmatpush1.bf16.msra.mxu0 %v4486
        %4560 = vmatprep.subr.bf16.mxu0 0
        %4561 = vmatpush1.bf16.msra.mxu0 %v4487
        %4562 = vmatprep.subr.bf16.mxu0 0
        %4563 = vmatpush1.bf16.msra.mxu0 %v4488
        %4564 = vmatprep.subr.bf16.mxu0 0
        %4565 = vmatpush1.bf16.msra.mxu0 %v4489
        %4566 = vmatprep.subr.bf16.mxu0 0
        %4567 = vmatpush1.bf16.msra.mxu0 %v4490
        %4568 = vmatprep.subr.bf16.mxu0 0
        %4569 = vmatpush1.bf16.msra.mxu0 %v4491
        %4570 = vmatprep.subr.bf16.mxu0 0
        %4571 = vmatpush1.bf16.msra.mxu0 %v4492
        %4572 = vmatprep.subr.bf16.mxu0 0
        %4573 = vmatpush1.bf16.msra.mxu0 %v4493
        %4574 = vmatprep.subr.bf16.mxu0 0
        %4575 = vmatpush1.bf16.msra.mxu0 0
        %4576 = vmatprep.subr.bf16.mxu0 0
        %4577 = vmatpush1.bf16.msra.mxu0 0
        %4578 = vmatprep.subr.bf16.mxu0 0
        %4579 = vmatpush1.bf16.msra.mxu0 0
        %4580 = vmatprep.subr.bf16.mxu0 0
        %4581 = vmatpush1.bf16.msra.mxu0 0
        %4582 = vmatprep.subr.bf16.mxu0 0
        %4583 = vmatpush1.bf16.msra.mxu0 0
        %4584 = vmatprep.subr.bf16.mxu0 0
        %4585 = vmatpush1.bf16.msra.mxu0 0
        %4586 = vmatprep.subr.bf16.mxu0 0
        %4587 = vmatpush1.bf16.msra.mxu0 0
        %4588 = vmatprep.subr.bf16.mxu0 0
        %4589 = vmatpush1.bf16.msra.mxu0 0
        %4590 = vmatprep.mubr.bf16.mxu0 0
        %4591 = vmatmul.mubr.bf16.gmra.mrb[0].mxu0 %v4325
        %v4592 = vpop.f32.mrb[0].mxu0
        %v4593 = vadd.f32 %v4553, %v4592
        %v4594 = vpop.f32.mrb[0].mxu0
        %v4595 = vpop.f32.mrb[0].mxu0
        %v4596 = vpop.f32.mrb[0].mxu0
        %4597 = vdwg.mxu0
        %v4598 = vld [vmem:[#allocation26] sm:$0x1]
        %v4600 = vlaneseq
        %v4601 = vshrl.u32 %v4600, 7
        %v4602 = vsub.s32 0, %v4601
        %v4603 = vrot.slane %v4598, %v4602
        %v4605 = vmul.f32 %v4593, %v4603
        %s4606 = scalar_lea.vmem [#allocation26], 1
        %v4607 = vld [vmem:[%s4606] sm:$0x1]
        %v4609 = vlaneseq
        %v4610 = vshrl.u32 %v4609, 7
        %v4611 = vsub.s32 0, %v4610
        %v4612 = vrot.slane %v4607, %v4611
        %v4614 = vadd.f32 %v4605, %v4612
        %vm4615 = vcmp.ge.f32.partialorder %v4614, 0.0
        %v4616 = vmul.f32 %v4614, 0.01
        %v4617 = vsel %vm4615, %v4614, %v4616
        %4618 = vst [vmem:[%s1520] sm:$0x3] %v4617
        %v4619 = vpack.c.bf16 %v4617, %v4617
        %v4620 = vld [vmem:[#allocation40] sm:$0xf]
        %v4621 = vld [vmem:[#allocation40 + $0x4] sm:$0xf]
        %v4622 = vld [vmem:[#allocation40 + $0x8] sm:$0xf]
        %v4623 = vld [vmem:[#allocation40 + $0xc] sm:$0xf]
        %v4624 = vld [vmem:[#allocation40 + $0x10] sm:$0xf]
        %v4625 = vld [vmem:[#allocation40 + $0x14] sm:$0xf]
        %v4626 = vld [vmem:[#allocation40 + $0x18] sm:$0xf]
        %v4627 = vld [vmem:[#allocation40 + $0x1c] sm:$0xf]
        %v4628 = vld [vmem:[#allocation40 + $0x20] sm:$0xf]
        %v4629 = vld [vmem:[#allocation40 + $0x24] sm:$0xf]
        %v4630 = vld [vmem:[#allocation40 + $0x28] sm:$0xf]
        %v4631 = vld [vmem:[#allocation40 + $0x2c] sm:$0xf]
        %v4632 = vld [vmem:[#allocation40 + $0x30] sm:$0xf]
        %v4633 = vld [vmem:[#allocation40 + $0x34] sm:$0xf]
        %v4634 = vld [vmem:[#allocation40 + $0x38] sm:$0xf]
        %v4635 = vld [vmem:[#allocation40 + $0x3c] sm:$0xf]
        %v4652 = vunpack.c.l.b16 %v4620
        %v4653 = vunpack.c.l.b16 %v4621
        %v4654 = vunpack.c.l.b16 %v4622
        %v4655 = vunpack.c.l.b16 %v4623
        %v4656 = vunpack.c.l.b16 %v4624
        %v4657 = vunpack.c.l.b16 %v4625
        %v4658 = vunpack.c.l.b16 %v4626
        %v4659 = vunpack.c.l.b16 %v4627
        %v4660 = vunpack.c.l.b16 %v4628
        %v4661 = vunpack.c.l.b16 %v4629
        %v4662 = vunpack.c.l.b16 %v4630
        %v4663 = vunpack.c.l.b16 %v4631
        %v4664 = vunpack.c.l.b16 %v4632
        %v4665 = vunpack.c.l.b16 %v4633
        %v4666 = vunpack.c.l.b16 %v4634
        %v4667 = vunpack.c.l.b16 %v4635
        %v4668 = vpack.c.b16 %v4653, %v4652
        %v4669 = vpack.c.b16 %v4655, %v4654
        %v4670 = vpack.c.b16 %v4657, %v4656
        %v4671 = vpack.c.b16 %v4659, %v4658
        %v4672 = vpack.c.b16 %v4661, %v4660
        %v4673 = vpack.c.b16 %v4663, %v4662
        %v4674 = vpack.c.b16 %v4665, %v4664
        %v4675 = vpack.c.b16 %v4667, %v4666
        %4684 = vmatprep.subr.bf16.mxu0 0
        %4685 = vmatpush1.bf16.msra.mxu0 %v4668
        %4686 = vmatprep.subr.bf16.mxu0 0
        %4687 = vmatpush1.bf16.msra.mxu0 %v4669
        %4688 = vmatprep.subr.bf16.mxu0 0
        %4689 = vmatpush1.bf16.msra.mxu0 %v4670
        %4690 = vmatprep.subr.bf16.mxu0 0
        %4691 = vmatpush1.bf16.msra.mxu0 %v4671
        %4692 = vmatprep.subr.bf16.mxu0 0
        %4693 = vmatpush1.bf16.msra.mxu0 %v4672
        %4694 = vmatprep.subr.bf16.mxu0 0
        %4695 = vmatpush1.bf16.msra.mxu0 %v4673
        %4696 = vmatprep.subr.bf16.mxu0 0
        %4697 = vmatpush1.bf16.msra.mxu0 %v4674
        %4698 = vmatprep.subr.bf16.mxu0 0
        %4699 = vmatpush1.bf16.msra.mxu0 %v4675
        %4700 = vmatprep.subr.bf16.mxu0 0
        %4701 = vmatpush1.bf16.msra.mxu0 0
        %4702 = vmatprep.subr.bf16.mxu0 0
        %4703 = vmatpush1.bf16.msra.mxu0 0
        %4704 = vmatprep.subr.bf16.mxu0 0
        %4705 = vmatpush1.bf16.msra.mxu0 0
        %4706 = vmatprep.subr.bf16.mxu0 0
        %4707 = vmatpush1.bf16.msra.mxu0 0
        %4708 = vmatprep.subr.bf16.mxu0 0
        %4709 = vmatpush1.bf16.msra.mxu0 0
        %4710 = vmatprep.subr.bf16.mxu0 0
        %4711 = vmatpush1.bf16.msra.mxu0 0
        %4712 = vmatprep.subr.bf16.mxu0 0
        %4713 = vmatpush1.bf16.msra.mxu0 0
        %4714 = vmatprep.subr.bf16.mxu0 0
        %4715 = vmatpush1.bf16.msra.mxu0 0
        %4716 = vmatprep.mubr.bf16.mxu0 0
        %4717 = vmatmul.mubr.bf16.gmra.mrb[0].mxu0 %v4619
        %v4718 = vpop.f32.mrb[0].mxu0
        %v4719 = vadd.f32 0.0, %v4718
        %v4720 = vpop.f32.mrb[0].mxu0
        %v4721 = vpop.f32.mrb[0].mxu0
        %v4722 = vpop.f32.mrb[0].mxu0
        %4723 = vdwg.mxu0
        %4725 = vrot.lane.b32.xlu0 %v4719, 64
        %v4726 = vpop.permute.xlu0 %4725
        %v4728 = vmax.f32 %v4719, %v4726
        %v4729 = vpack.c.bf16 %v4728, %v4728
        %v4730 = vld [vmem:[%s65] sm:$0x1]
        %v4732 = vsel %vm3981, %v4730, 0
        %v4735 = vsel %vm3985, %v4729, 0
        %4737 = vmatprep.subr.bf16.mxu0 0
        %4738 = vmatpush1.bf16.msra.mxu0 %v4735
        %4739 = vmatprep.subr.bf16.mxu0 0
        %4740 = vmatpush1.bf16.msra.mxu0 0
        %4741 = vmatprep.subr.bf16.mxu0 0
        %4742 = vmatpush1.bf16.msra.mxu0 0
        %4743 = vmatprep.subr.bf16.mxu0 0
        %4744 = vmatpush1.bf16.msra.mxu0 0
        %4745 = vmatprep.subr.bf16.mxu0 0
        %4746 = vmatpush1.bf16.msra.mxu0 0
        %4747 = vmatprep.subr.bf16.mxu0 0
        %4748 = vmatpush1.bf16.msra.mxu0 0
        %4749 = vmatprep.subr.bf16.mxu0 0
        %4750 = vmatpush1.bf16.msra.mxu0 0
        %4751 = vmatprep.subr.bf16.mxu0 0
        %4752 = vmatpush1.bf16.msra.mxu0 0
        %4753 = vmatprep.subr.bf16.mxu0 0
        %4754 = vmatpush1.bf16.msra.mxu0 0
        %4755 = vmatprep.subr.bf16.mxu0 0
        %4756 = vmatpush1.bf16.msra.mxu0 0
        %4757 = vmatprep.subr.bf16.mxu0 0
        %4758 = vmatpush1.bf16.msra.mxu0 0
        %4759 = vmatprep.subr.bf16.mxu0 0
        %4760 = vmatpush1.bf16.msra.mxu0 0
        %4761 = vmatprep.subr.bf16.mxu0 0
        %4762 = vmatpush1.bf16.msra.mxu0 0
        %4763 = vmatprep.subr.bf16.mxu0 0
        %4764 = vmatpush1.bf16.msra.mxu0 0
        %4765 = vmatprep.subr.bf16.mxu0 0
        %4766 = vmatpush1.bf16.msra.mxu0 0
        %4767 = vmatprep.subr.bf16.mxu0 0
        %4768 = vmatpush1.bf16.msra.mxu0 0
        %4769 = vmatprep.mubr.bf16.mxu0 0
        %4770 = vmatmul.mubr.bf16.gmra.mrb[0].mxu0 %v4732
        %v4771 = vpop.f32.mrb[0].mxu0
        %v4772 = vadd.f32 0.0, %v4771
        %v4773 = vpop.f32.mrb[0].mxu0
        %v4774 = vpop.f32.mrb[0].mxu0
        %v4775 = vpop.f32.mrb[0].mxu0
        %4776 = vdwg.mxu0
        %v4778 = vrot.slane %v4772, 1
        %v4780 = vmax.f32 %v4772, %v4778
        %v4781 = vpack.c.bf16 %v4780, %v4780
        %v4782 = vld [vmem:[#allocation28 + $0x20] sm:$0xf]
        %v4783 = vld [vmem:[#allocation28 + $0x24] sm:$0xf]
        %v4784 = vld [vmem:[#allocation28 + $0x28] sm:$0xf]
        %v4785 = vld [vmem:[#allocation28 + $0x2c] sm:$0xf]
        %v4786 = vld [vmem:[#allocation28 + $0x30] sm:$0xf]
        %v4787 = vld [vmem:[#allocation28 + $0x34] sm:$0xf]
        %v4788 = vld [vmem:[#allocation28 + $0x38] sm:$0xf]
        %v4789 = vld [vmem:[#allocation28 + $0x3c] sm:$0xf]
        %v4798 = vunpack.c.l.b16 %v4782
        %v4799 = vunpack.c.l.b16 %v4783
        %v4800 = vunpack.c.l.b16 %v4784
        %v4801 = vunpack.c.l.b16 %v4785
        %v4802 = vunpack.c.l.b16 %v4786
        %v4803 = vunpack.c.l.b16 %v4787
        %v4804 = vunpack.c.l.b16 %v4788
        %v4805 = vunpack.c.l.b16 %v4789
        %v4806 = vpack.c.b16 %v4799, %v4798
        %v4807 = vpack.c.b16 %v4801, %v4800
        %v4808 = vpack.c.b16 %v4803, %v4802
        %v4809 = vpack.c.b16 %v4805, %v4804
        %v4815 = vsel %vm1644, %v4781, 0
        %4817 = vmatprep.subr.bf16.mxu0 0
        %4818 = vmatpush1.bf16.msra.mxu0 %v4806
        %4819 = vmatprep.subr.bf16.mxu0 0
        %4820 = vmatpush1.bf16.msra.mxu0 %v4807
        %4821 = vmatprep.subr.bf16.mxu0 0
        %4822 = vmatpush1.bf16.msra.mxu0 %v4808
        %4823 = vmatprep.subr.bf16.mxu0 0
        %4824 = vmatpush1.bf16.msra.mxu0 %v4809
        %4825 = vmatprep.subr.bf16.mxu0 0
        %4826 = vmatpush1.bf16.msra.mxu0 0
        %4827 = vmatprep.subr.bf16.mxu0 0
        %4828 = vmatpush1.bf16.msra.mxu0 0
        %4829 = vmatprep.subr.bf16.mxu0 0
        %4830 = vmatpush1.bf16.msra.mxu0 0
        %4831 = vmatprep.subr.bf16.mxu0 0
        %4832 = vmatpush1.bf16.msra.mxu0 0
        %4833 = vmatprep.subr.bf16.mxu0 0
        %4834 = vmatpush1.bf16.msra.mxu0 0
        %4835 = vmatprep.subr.bf16.mxu0 0
        %4836 = vmatpush1.bf16.msra.mxu0 0
        %4837 = vmatprep.subr.bf16.mxu0 0
        %4838 = vmatpush1.bf16.msra.mxu0 0
        %4839 = vmatprep.subr.bf16.mxu0 0
        %4840 = vmatpush1.bf16.msra.mxu0 0
        %4841 = vmatprep.subr.bf16.mxu0 0
        %4842 = vmatpush1.bf16.msra.mxu0 0
        %4843 = vmatprep.subr.bf16.mxu0 0
        %4844 = vmatpush1.bf16.msra.mxu0 0
        %4845 = vmatprep.subr.bf16.mxu0 0
        %4846 = vmatpush1.bf16.msra.mxu0 0
        %4847 = vmatprep.subr.bf16.mxu0 0
        %4848 = vmatpush1.bf16.msra.mxu0 0
        %4849 = vmatprep.mubr.bf16.mxu0 0
        %4850 = vmatmul.mubr.bf16.gmra.mrb[0].mxu0 %v4815
        %v4851 = vpop.f32.mrb[0].mxu0
        %v4852 = vadd.f32 0.0, %v4851
        %v4853 = vpop.f32.mrb[0].mxu0
        %v4854 = vpop.f32.mrb[0].mxu0
        %v4855 = vpop.f32.mrb[0].mxu0
        %4856 = vdwg.mxu0
        %v4857 = vld [vmem:[#allocation29] sm:$0x1]
        %v4858 = vmul.f32 %v4852, %v4857
        %s4859 = scalar_lea.vmem [#allocation29], 1
        %v4860 = vld [vmem:[%s4859] sm:$0x1]
        %v4861 = vadd.f32 %v4858, %v4860
        %vm4862 = vcmp.ge.f32.partialorder %v4861, 0.0
        %v4863 = vmul.f32 %v4861, 0.01
        %v4864 = vsel %vm4862, %v4861, %v4863
        %v4865 = vpack.c.bf16 %v4864, %v4864
        %v4866 = vld [vmem:[#allocation31 + $0x40] sm:$0xf]
        %v4867 = vld [vmem:[#allocation31 + $0x44] sm:$0xf]
        %v4868 = vld [vmem:[#allocation31 + $0x48] sm:$0xf]
        %v4869 = vld [vmem:[#allocation31 + $0x4c] sm:$0xf]
        %v4870 = vld [vmem:[#allocation31 + $0x50] sm:$0xf]
        %v4871 = vld [vmem:[#allocation31 + $0x54] sm:$0xf]
        %v4872 = vld [vmem:[#allocation31 + $0x58] sm:$0xf]
        %v4873 = vld [vmem:[#allocation31 + $0x5c] sm:$0xf]
        %v4874 = vld [vmem:[#allocation31 + $0x60] sm:$0xf]
        %v4875 = vld [vmem:[#allocation31 + $0x64] sm:$0xf]
        %v4876 = vld [vmem:[#allocation31 + $0x68] sm:$0xf]
        %v4877 = vld [vmem:[#allocation31 + $0x6c] sm:$0xf]
        %v4878 = vld [vmem:[#allocation31 + $0x70] sm:$0xf]
        %v4879 = vld [vmem:[#allocation31 + $0x74] sm:$0xf]
        %v4880 = vld [vmem:[#allocation31 + $0x78] sm:$0xf]
        %v4881 = vld [vmem:[#allocation31 + $0x7c] sm:$0xf]
        %v4898 = vunpack.c.l.b16 %v4866
        %v4899 = vunpack.c.l.b16 %v4867
        %v4900 = vunpack.c.l.b16 %v4868
        %v4901 = vunpack.c.l.b16 %v4869
        %v4902 = vunpack.c.l.b16 %v4870
        %v4903 = vunpack.c.l.b16 %v4871
        %v4904 = vunpack.c.l.b16 %v4872
        %v4905 = vunpack.c.l.b16 %v4873
        %v4906 = vunpack.c.l.b16 %v4874
        %v4907 = vunpack.c.l.b16 %v4875
        %v4908 = vunpack.c.l.b16 %v4876
        %v4909 = vunpack.c.l.b16 %v4877
        %v4910 = vunpack.c.l.b16 %v4878
        %v4911 = vunpack.c.l.b16 %v4879
        %v4912 = vunpack.c.l.b16 %v4880
        %v4913 = vunpack.c.l.b16 %v4881
        %v4914 = vpack.c.b16 %v4899, %v4898
        %v4915 = vpack.c.b16 %v4901, %v4900
        %v4916 = vpack.c.b16 %v4903, %v4902
        %v4917 = vpack.c.b16 %v4905, %v4904
        %v4918 = vpack.c.b16 %v4907, %v4906
        %v4919 = vpack.c.b16 %v4909, %v4908
        %v4920 = vpack.c.b16 %v4911, %v4910
        %v4921 = vpack.c.b16 %v4913, %v4912
        %4930 = vmatprep.subr.bf16.mxu0 0
        %4931 = vmatpush1.bf16.msra.mxu0 %v4914
        %4932 = vmatprep.subr.bf16.mxu0 0
        %4933 = vmatpush1.bf16.msra.mxu0 %v4915
        %4934 = vmatprep.subr.bf16.mxu0 0
        %4935 = vmatpush1.bf16.msra.mxu0 %v4916
        %4936 = vmatprep.subr.bf16.mxu0 0
        %4937 = vmatpush1.bf16.msra.mxu0 %v4917
        %4938 = vmatprep.subr.bf16.mxu0 0
        %4939 = vmatpush1.bf16.msra.mxu0 %v4918
        %4940 = vmatprep.subr.bf16.mxu0 0
        %4941 = vmatpush1.bf16.msra.mxu0 %v4919
        %4942 = vmatprep.subr.bf16.mxu0 0
        %4943 = vmatpush1.bf16.msra.mxu0 %v4920
        %4944 = vmatprep.subr.bf16.mxu0 0
        %4945 = vmatpush1.bf16.msra.mxu0 %v4921
        %4946 = vmatprep.subr.bf16.mxu0 0
        %4947 = vmatpush1.bf16.msra.mxu0 0
        %4948 = vmatprep.subr.bf16.mxu0 0
        %4949 = vmatpush1.bf16.msra.mxu0 0
        %4950 = vmatprep.subr.bf16.mxu0 0
        %4951 = vmatpush1.bf16.msra.mxu0 0
        %4952 = vmatprep.subr.bf16.mxu0 0
        %4953 = vmatpush1.bf16.msra.mxu0 0
        %4954 = vmatprep.subr.bf16.mxu0 0
        %4955 = vmatpush1.bf16.msra.mxu0 0
        %4956 = vmatprep.subr.bf16.mxu0 0
        %4957 = vmatpush1.bf16.msra.mxu0 0
        %4958 = vmatprep.subr.bf16.mxu0 0
        %4959 = vmatpush1.bf16.msra.mxu0 0
        %4960 = vmatprep.subr.bf16.mxu0 0
        %4961 = vmatpush1.bf16.msra.mxu0 0
        %4962 = vmatprep.mubr.bf16.mxu0 0
        %4963 = vmatmul.mubr.bf16.gmra.mrb[0].mxu0 %v4865
        %v4964 = vpop.f32.mrb[0].mxu0
        %v4965 = vadd.f32 0.0, %v4964
        %v4966 = vpop.f32.mrb[0].mxu0
        %v4967 = vpop.f32.mrb[0].mxu0
        %v4968 = vpop.f32.mrb[0].mxu0
        %4969 = vdwg.mxu0
        %v4970 = vld [vmem:[#allocation32] sm:$0x1]
        %v4971 = vmul.f32 %v4965, %v4970
        %s4972 = scalar_lea.vmem [#allocation32], 1
        %v4973 = vld [vmem:[%s4972] sm:$0x1]
        %v4974 = vadd.f32 %v4971, %v4973
        %vm4975 = vcmp.ge.f32.partialorder %v4974, 0.0
        %v4976 = vmul.f32 %v4974, 0.01
        %v4977 = vsel %vm4975, %v4974, %v4976
        %4978 = vst [vmem:[%s1526] sm:$0x1] %v4977
        %s4979 = sand.u32 %s817, 1
        %s4980 = scalar_lea.sflag [#allocation4], %s4979
        %s4981 = sand.u32 %s817, 1
        %s4982 = smul.addr %s4981, 16
        %s4983 = scalar_lea.vmem [#allocation41], %s4982
        %s4984 = sand.u32 %s111, 1
        %s4985 = scalar_lea.sflag [#allocation43], %s4984
        %s4986 = sand.u32 %s843, 1
        %s4987 = smul.addr %s4986, 8
        %s4988 = scalar_lea.vmem [#allocation42], %s4987
        %s4989 = sand.u32 %s111, 1
        %s4990 = scalar_lea.sflag [#allocation43], %s4989
        %s4991 = sand.u32 %s869, 1
        %s4992 = smul.addr %s4991, 4
        %s4993 = scalar_lea.vmem [#allocation44], %s4992
        %s4994 = sand.u32 %s111, 1
        %s4995 = scalar_lea.sflag [#allocation46], %s4994
        %s4996 = sand.u32 %s895, 1
        %s4997 = smul.addr %s4996, 2
        %s4998 = scalar_lea.vmem [#allocation45], %s4997
        %s4999 = sand.u32 %s111, 1
        %s5000 = scalar_lea.sflag [#allocation46], %s4999
        %s5001 = sand.u32 %s921, 1
        %s5002 = scalar_lea.vmem [#allocation47], %s5001
        // Predicated region
        $region253: #{tpu_custom_call.1} parent=151 // pred_check
          %p5003 = pneg %p827
        $region254: #{tpu_custom_call.1} parent=151 // pred_check_branch
          %5005 = sbr.rel (%p5003) target = $region256
        $region255: #{tpu_custom_call.1} parent=151 // pred_region
          %s5007 = ssub.s32 256, 256
          %5008 = vsyncadd %s4980, %s5007
          %s5009 = smul.addr %s111, 2
          %s5010 = smul.addr %s5009, 128
          %s5011 = scalar_lea.hbm %s67, %s5010
          %s5012 = sshll.u32 %s4983, 4
          %s5013 = int_to_ptr.vmem [resolvable:$true] %s5012
          %5018 = dma.vmem_to_hbm [thread:$0]  %s5013, 256, %s5011, %s4980, 128, 128, 8
        $region256: #{tpu_custom_call.1} parent=151 // pred_fallthru
          _
        // Predicated region
        $region257: #{tpu_custom_call.1} parent=151 // pred_check
          %p5019 = pneg %p853
        $region258: #{tpu_custom_call.1} parent=151 // pred_check_branch
          %5021 = sbr.rel (%p5019) target = $region260
        $region259: #{tpu_custom_call.1} parent=151 // pred_region
          %s5023 = ssub.s32 128, 128
          %5024 = vsyncadd %s4985, %s5023
          %s5025 = smul.addr %s111, 128
          %s5026 = scalar_lea.hbm %s69, %s5025
          %s5028 = sshll.u32 %s4988, 4
          %s5029 = int_to_ptr.vmem [resolvable:$true] %s5028
          %5031 = dma.vmem_to_hbm [thread:$0]  %s5029, 128, %s5026, %s4985
        $region260: #{tpu_custom_call.1} parent=151 // pred_fallthru
          _
        // Predicated region
        $region261: #{tpu_custom_call.1} parent=151 // pred_check
          %p5032 = pneg %p879
        $region262: #{tpu_custom_call.1} parent=151 // pred_check_branch
          %5034 = sbr.rel (%p5032) target = $region264
        $region263: #{tpu_custom_call.1} parent=151 // pred_region
          %s5036 = ssub.s32 64, 64
          %5037 = vsyncadd %s4990, %s5036
          %s5038 = smul.addr %s111, 64
          %s5039 = scalar_lea.hbm %s71, %s5038
          %s5041 = sshll.u32 %s4993, 4
          %s5042 = int_to_ptr.vmem [resolvable:$true] %s5041
          %5044 = dma.vmem_to_hbm [thread:$0]  %s5042, 64, %s5039, %s4990
        $region264: #{tpu_custom_call.1} parent=151 // pred_fallthru
          _
        // Predicated region
        $region265: #{tpu_custom_call.1} parent=151 // pred_check
          %p5045 = pneg %p905
        $region266: #{tpu_custom_call.1} parent=151 // pred_check_branch
          %5047 = sbr.rel (%p5045) target = $region268
        $region267: #{tpu_custom_call.1} parent=151 // pred_region
          %s5049 = ssub.s32 32, 32
          %5050 = vsyncadd %s4995, %s5049
          %s5051 = smul.addr %s111, 32
          %s5052 = scalar_lea.hbm %s73, %s5051
          %s5054 = sshll.u32 %s4998, 4
          %s5055 = int_to_ptr.vmem [resolvable:$true] %s5054
          %5057 = dma.vmem_to_hbm [thread:$0]  %s5055, 32, %s5052, %s4995
        $region268: #{tpu_custom_call.1} parent=151 // pred_fallthru
          _
        // Predicated region
        $region269: #{tpu_custom_call.1} parent=151 // pred_check
          %p5058 = pneg %p931
        $region270: #{tpu_custom_call.1} parent=151 // pred_check_branch
          %5060 = sbr.rel (%p5058) target = $region272
        $region271: #{tpu_custom_call.1} parent=151 // pred_region
          %s5062 = ssub.s32 16, 16
          %5063 = vsyncadd %s5000, %s5062
          %s5064 = smul.addr %s111, 16
          %s5065 = scalar_lea.hbm %s75, %s5064
          %s5067 = sshll.u32 %s5002, 4
          %s5068 = int_to_ptr.vmem [resolvable:$true] %s5067
          %5070 = dma.vmem_to_hbm [thread:$0]  %s5068, 16, %s5065, %s5000
        $region272: #{tpu_custom_call.1} parent=151 // pred_fallthru
          _
      $region152: #{tpu_custom_call.1} parent=5 // pred_fallthru
        _
      %p5071 = scmp.le.s32.totalorder 2, %s106
      // Predicated region
      $region273: #{tpu_custom_call.1} parent=5 // pred_check
        %p5072 = pneg %p5071
      $region274: #{tpu_custom_call.1} parent=5 // pred_check_branch
        %5074 = sbr.rel (%p5072) target = $region276
      $region275: #{tpu_custom_call.1} parent=5 // pred_region
        %s5075 = ssub.s32 %s106, 2
        // Predicated region
        $region277: #{tpu_custom_call.1} parent=275 // pred_check
          %p5076 = pneg %p833
        $region278: #{tpu_custom_call.1} parent=275 // pred_check_branch
          %5078 = sbr.rel (%p5076) target = $region280
        $region279: #{tpu_custom_call.1} parent=275 // pred_region
          %s5079 = sand.u32 %s818, 1
          %s5080 = scalar_lea.sflag [#allocation4], %s5079
          %s5081 = sand.u32 %s818, 1
          %s5082 = smul.addr %s5081, 16
          %s5083 = scalar_lea.vmem [#allocation41], %s5082
          %5084 = dma.done %s5080, 256
        $region280: #{tpu_custom_call.1} parent=275 // pred_fallthru
          _
        // Predicated region
        $region281: #{tpu_custom_call.1} parent=275 // pred_check
          %p5085 = pneg %p859
        $region282: #{tpu_custom_call.1} parent=275 // pred_check_branch
          %5087 = sbr.rel (%p5085) target = $region284
        $region283: #{tpu_custom_call.1} parent=275 // pred_region
          %s5088 = sand.u32 %s112, 1
          %s5089 = scalar_lea.sflag [#allocation43], %s5088
          %s5090 = sand.u32 %s844, 1
          %s5091 = smul.addr %s5090, 8
          %s5092 = scalar_lea.vmem [#allocation42], %s5091
          %5093 = dma.done %s5089, 128
        $region284: #{tpu_custom_call.1} parent=275 // pred_fallthru
          _
        // Predicated region
        $region285: #{tpu_custom_call.1} parent=275 // pred_check
          %p5094 = pneg %p885
        $region286: #{tpu_custom_call.1} parent=275 // pred_check_branch
          %5096 = sbr.rel (%p5094) target = $region288
        $region287: #{tpu_custom_call.1} parent=275 // pred_region
          %s5097 = sand.u32 %s112, 1
          %s5098 = scalar_lea.sflag [#allocation43], %s5097
          %s5099 = sand.u32 %s870, 1
          %s5100 = smul.addr %s5099, 4
          %s5101 = scalar_lea.vmem [#allocation44], %s5100
          %5102 = dma.done %s5098, 64
        $region288: #{tpu_custom_call.1} parent=275 // pred_fallthru
          _
        // Predicated region
        $region289: #{tpu_custom_call.1} parent=275 // pred_check
          %p5103 = pneg %p911
        $region290: #{tpu_custom_call.1} parent=275 // pred_check_branch
          %5105 = sbr.rel (%p5103) target = $region292
        $region291: #{tpu_custom_call.1} parent=275 // pred_region
          %s5106 = sand.u32 %s112, 1
          %s5107 = scalar_lea.sflag [#allocation46], %s5106
          %s5108 = sand.u32 %s896, 1
          %s5109 = smul.addr %s5108, 2
          %s5110 = scalar_lea.vmem [#allocation45], %s5109
          %5111 = dma.done %s5107, 32
        $region292: #{tpu_custom_call.1} parent=275 // pred_fallthru
          _
        // Predicated region
        $region293: #{tpu_custom_call.1} parent=275 // pred_check
          %p5112 = pneg %p937
        $region294: #{tpu_custom_call.1} parent=275 // pred_check_branch
          %5114 = sbr.rel (%p5112) target = $region296
        $region295: #{tpu_custom_call.1} parent=275 // pred_region
          %s5115 = sand.u32 %s112, 1
          %s5116 = scalar_lea.sflag [#allocation46], %s5115
          %s5117 = sand.u32 %s922, 1
          %s5118 = scalar_lea.vmem [#allocation47], %s5117
          %5119 = dma.done %s5116, 16
        $region296: #{tpu_custom_call.1} parent=275 // pred_fallthru
          _
      $region276: #{tpu_custom_call.1} parent=5 // pred_fallthru
        _
    $region6: #{tpu_custom_call.1} parent=1 // loop_footer
      %s110 = sadd.s32 1, %s106
    $region7: #{tpu_custom_call.1} parent=1 // loop_footer_branch
      %105 = sbr.rel target = $region3
    $region8: #{tpu_custom_call.1} parent=1 // loop_exit
      _
    %5120 = vsyncpa [#allocation3], 1
    %s5121 = scalar_lea.sflag [#allocation3], 1
    %5122 = vsyncpa %s5121, 1
    %5123 = vsyncpa [#allocation6], 1
    %5124 = vsyncpa [#allocation9], 1
    %5125 = vsyncpa [#allocation12], 1
    %5126 = vsyncpa [#allocation15], 1
    %5127 = vsyncpa [#allocation18], 1
    %5128 = vsyncpa [#allocation21], 1
    %5129 = vsyncpa [#allocation24], 1
    %5130 = vsyncpa [#allocation27], 1
    %5131 = vsyncpa [#allocation30], 1
    %5132 = vsyncpa [#allocation33], 1
    %5133 = vsyncpa [#allocation36], 1
    %5134 = vsyncpa [#allocation39], 1
    %5135 = vsyncpa [#allocation4], 1
    %s5136 = scalar_lea.sflag [#allocation4], 1
    %5137 = vsyncpa %s5136, 1
    %5138 = vsyncpa [#allocation43], 1
    %s5139 = scalar_lea.sflag [#allocation43], 1
    %5140 = vsyncpa %s5139, 1
    %5141 = vsyncpa [#allocation46], 1
    %s5142 = scalar_lea.sflag [#allocation46], 1
    %5143 = vsyncpa %s5142, 1

</llo_original>
